<compile_context>
chip_gen: v6e
topology: v6e:2x2x1
jax: 0.10.0
libtpu: 0.0.40
codegen_flags: <defaults>
</compile_context>

<pallas_src>
from functools import partial
from types import SimpleNamespace

import jax
import jax.numpy as jnp
from jax.experimental import pallas as pl
from jax.experimental.pallas import tpu as pltpu


# ----------------------------- hardware-derived sizing ------------------------------

def _derive_vmem_limit():
    """vmem_limit_bytes per generation: physical capacity minus >=16 MiB headroom."""
    cap = 64 * 1024 * 1024
    try:
        info = pltpu.get_tpu_info()
        c = getattr(info, "vmem_capacity_bytes", None)
        if c:
            cap = int(c)
    except Exception:
        pass
    return int(max(cap - 16 * 1024 * 1024, 32 * 1024 * 1024))


_VMEM_LIMIT = _derive_vmem_limit()
# Bigger row blocks on the 128 MiB parts (v5e/v6e); 256 on v7x (64 MiB).
_TILE_M = 512 if _VMEM_LIMIT >= 96 * 1024 * 1024 else 256


def _row_grid(M):
    """(row_tile, grid). Full-M block when small; even grid count for v7x megacore."""
    if M <= _TILE_M:
        return M, 1
    g = pl.cdiv(M, _TILE_M)
    if g % 2:                       # balance the two v7x TensorCores
        g += 1
    tm = ((M + g - 1) // g + 7) // 8 * 8
    return tm, pl.cdiv(M, tm)


def _cparams(*sems):
    return pltpu.CompilerParams(dimension_semantics=sems,
                                vmem_limit_bytes=_VMEM_LIMIT)


def _const_spec(shape, index_map):
    """BlockSpec for grid-invariant operands: single-buffered (no wasted copy)."""
    try:
        return pl.BlockSpec(shape, index_map, pipeline_mode=pl.Buffered(1))
    except Exception:   # older jax without pipeline_mode — fall back gracefully
        return pl.BlockSpec(shape, index_map)


def _pick_itile(I, max_ti=2048):
    """Largest multiple-of-128 divisor of I (<= max_ti); falls back to full I."""
    if I <= max_ti:
        return I
    ti = max_ti - (max_ti % 128)
    while ti >= 128:
        if I % ti == 0:
            return ti
        ti -= 128
    # TODO(synk): pad I to a multiple of 128 at init to enable tiling for odd I.
    return I


# ----------------------------- Pallas kernels ------------------------------

def _linear_kernel(x_ref, w_ref, b_ref, o_ref):
    acc = jnp.dot(x_ref[...].astype(jnp.bfloat16),
                  w_ref[...].astype(jnp.bfloat16),
                  preferred_element_type=jnp.float32)
    o_ref[...] = (acc + b_ref[...]).astype(o_ref.dtype)


def linear(x, w, b, out_dtype=None):
    """x: (M, K) @ w: (K, N) + b. bf16 MXU matmul, f32 accumulate."""
    M, K = x.shape
    N = w.shape[1]
    out_dtype = out_dtype or x.dtype
    tm, g = _row_grid(M)
    return pl.pallas_call(
        _linear_kernel,
        grid=(g,),
        in_specs=[pl.BlockSpec((tm, K), lambda i: (i, 0)),
                  _const_spec((K, N), lambda i: (0, 0)),
                  _const_spec((1, N), lambda i: (0, 0))],
        out_specs=pl.BlockSpec((tm, N), lambda i: (i, 0)),
        out_shape=jax.ShapeDtypeStruct((M, N), out_dtype),
        compiler_params=_cparams("parallel"),
    )(x, w, b.reshape(1, N))


def _linear_res_kernel(x_ref, w_ref, b_ref, r_ref, o_ref):
    acc = jnp.dot(x_ref[...].astype(jnp.bfloat16),
                  w_ref[...].astype(jnp.bfloat16),
                  preferred_element_type=jnp.float32)
    o_ref[...] = (r_ref[...].astype(jnp.float32) + acc + b_ref[...]).astype(o_ref.dtype)


def linear_residual(x, w, b, res):
    """res + (x @ w + b) fused (residual add as epilogue, f32 add)."""
    M, K = x.shape
    N = w.shape[1]
    tm, g = _row_grid(M)
    return pl.pallas_call(
        _linear_res_kernel,
        grid=(g,),
        in_specs=[pl.BlockSpec((tm, K), lambda i: (i, 0)),
                  _const_spec((K, N), lambda i: (0, 0)),
                  _const_spec((1, N), lambda i: (0, 0)),
                  pl.BlockSpec((tm, N), lambda i: (i, 0))],
        out_specs=pl.BlockSpec((tm, N), lambda i: (i, 0)),
        out_shape=jax.ShapeDtypeStruct((M, N), res.dtype),
        compiler_params=_cparams("parallel"),
    )(x, w, b.reshape(1, N), res)


def _layernorm_kernel(eps, x_ref, g_ref, b_ref, o_ref):
    x = x_ref[...].astype(jnp.float32)
    mu = jnp.mean(x, axis=-1, keepdims=True)
    var = jnp.mean((x - mu) ** 2, axis=-1, keepdims=True)
    y = (x - mu) * jax.lax.rsqrt(var + eps)
    o_ref[...] = (y * g_ref[...] + b_ref[...]).astype(o_ref.dtype)


def layernorm(x, g, b, eps):
    """Standalone LayerNorm (only used for the post / pooler LN)."""
    M, D = x.shape
    tm, gcnt = _row_grid(M)
    return pl.pallas_call(
        partial(_layernorm_kernel, eps),
        grid=(gcnt,),
        in_specs=[pl.BlockSpec((tm, D), lambda i: (i, 0)),
                  _const_spec((1, D), lambda i: (0, 0)),
                  _const_spec((1, D), lambda i: (0, 0))],
        out_specs=pl.BlockSpec((tm, D), lambda i: (i, 0)),
        out_shape=jax.ShapeDtypeStruct((M, D), x.dtype),
        compiler_params=_cparams("parallel"),
    )(x, g.reshape(1, D), b.reshape(1, D))


def _ln_linear_kernel(eps, x_ref, g_ref, bln_ref, w_ref, b_ref, o_ref):
    # LayerNorm prologue (f32) fused into the matmul (bf16 MXU).
    x = x_ref[...].astype(jnp.float32)
    mu = jnp.mean(x, axis=-1, keepdims=True)
    var = jnp.mean((x - mu) ** 2, axis=-1, keepdims=True)
    y = (x - mu) * jax.lax.rsqrt(var + eps)
    y = (y * g_ref[...] + bln_ref[...]).astype(jnp.bfloat16)
    acc = jnp.dot(y, w_ref[...].astype(jnp.bfloat16),
                  preferred_element_type=jnp.float32)
    o_ref[...] = (acc + b_ref[...]).astype(o_ref.dtype)


def fused_ln_linear(x, g, bln, w, b, eps, out_dtype=None):
    """(LN(x)) @ w + b, LN fused as matmul prologue."""
    M, D = x.shape
    N = w.shape[1]
    out_dtype = out_dtype or x.dtype
    tm, gcnt = _row_grid(M)
    return pl.pallas_call(
        partial(_ln_linear_kernel, eps),
        grid=(gcnt,),
        in_specs=[pl.BlockSpec((tm, D), lambda i: (i, 0)),
                  _const_spec((1, D), lambda i: (0, 0)),
                  _const_spec((1, D), lambda i: (0, 0)),
                  _const_spec((D, N), lambda i: (0, 0)),
                  _const_spec((1, N), lambda i: (0, 0))],
        out_specs=pl.BlockSpec((tm, N), lambda i: (i, 0)),
        out_shape=jax.ShapeDtypeStruct((M, N), out_dtype),
        compiler_params=_cparams("parallel"),
    )(x, g.reshape(1, D), bln.reshape(1, D), w, b.reshape(1, N))


def _ln_mlp_res_kernel(eps, x_ref, g_ref, bln_ref, w1_ref, b1_ref, w2_ref, b2_ref,
                       o_ref, y_sc, acc_sc):
    """residual + fc2(gelu_tanh(fc1(LN(x)))) with the intermediate dim I tiled
    over the second ('arbitrary') grid axis; fc2 partials accumulate in f32."""
    ii = pl.program_id(1)

    @pl.when(ii == 0)
    def _():
        x = x_ref[...].astype(jnp.float32)
        mu = jnp.mean(x, axis=-1, keepdims=True)
        var = jnp.mean((x - mu) ** 2, axis=-1, keepdims=True)
        y = (x - mu) * jax.lax.rsqrt(var + eps)
        y_sc[...] = (y * g_ref[...] + bln_ref[...]).astype(jnp.bfloat16)
        acc_sc[...] = jnp.zeros_like(acc_sc)

    h = jnp.dot(y_sc[...], w1_ref[...].astype(jnp.bfloat16),
                preferred_element_type=jnp.float32) + b1_ref[...]
    # gelu_pytorch_tanh (f32 vector math — v5e has no bf16 VPU/EUP path)
    h = 0.5 * h * (1.0 + jnp.tanh(0.7978845608028654 * (h + 0.044715 * (h * h * h))))
    acc_sc[...] += jnp.dot(h.astype(jnp.bfloat16), w2_ref[...].astype(jnp.bfloat16),
                           preferred_element_type=jnp.float32)

    @pl.when(ii == pl.num_programs(1) - 1)
    def _():
        o_ref[...] = (x_ref[...].astype(jnp.float32) + acc_sc[...]
                      + b2_ref[...]).astype(o_ref.dtype)


def ln_mlp_residual(x, g, bln, w1, b1, w2, b2, eps):
    """x + MLP(LN(x)): LN prologue, GELU, residual epilogue in one kernel."""
    M, D = x.shape
    I = w1.shape[1]
    tm, gr = _row_grid(M)
    ti = _pick_itile(I)
    ni = I // ti
    return pl.pallas_call(
        partial(_ln_mlp_res_kernel, eps),
        grid=(gr, ni),
        in_specs=[pl.BlockSpec((tm, D), lambda i, ii: (i, 0)),
                  _const_spec((1, D), lambda i, ii: (0, 0)),
                  _const_spec((1, D), lambda i, ii: (0, 0)),
                  pl.BlockSpec((D, ti), lambda i, ii: (0, ii)),
                  pl.BlockSpec((1, ti), lambda i, ii: (0, ii)),
                  pl.BlockSpec((ti, D), lambda i, ii: (ii, 0)),
                  _const_spec((1, D), lambda i, ii: (0, 0))],
        out_specs=pl.BlockSpec((tm, D), lambda i, ii: (i, 0)),
        out_shape=jax.ShapeDtypeStruct((M, D), x.dtype),
        scratch_shapes=[pltpu.VMEM((tm, D), jnp.bfloat16),
                        pltpu.VMEM((tm, D), jnp.float32)],
        compiler_params=_cparams("parallel", "arbitrary"),
    )(x, g.reshape(1, D), bln.reshape(1, D), w1, b1.reshape(1, I), w2, b2.reshape(1, D))


def _attn_kernel(scale, D, H, Dh, qkv_ref, o_ref):
    """Per-batch multi-head SDPA directly on the fused (S, 3D) QKV block:
    Q/K/V column slices via pl.ds (no HBM transposes), output written
    head-by-head into a (S, D)-contiguous block the o-proj consumes as-is."""
    for h in range(H):
        col = h * Dh
        q = (qkv_ref[0, :, pl.ds(col, Dh)].astype(jnp.float32)
             * scale).astype(jnp.bfloat16)                     # scale on Q (S*Dh)
        k = qkv_ref[0, :, pl.ds(D + col, Dh)].astype(jnp.bfloat16)
        v = qkv_ref[0, :, pl.ds(2 * D + col, Dh)].astype(jnp.bfloat16)
        s = jnp.einsum('qd,kd->qk', q, k, preferred_element_type=jnp.float32)
        s = s - jnp.max(s, axis=-1, keepdims=True)
        p = jnp.exp(s)                                          # softmax in f32
        inv = pl.reciprocal(jnp.sum(p, axis=-1, keepdims=True), approx=True)
        p = (p * inv).astype(jnp.bfloat16)
        o = jnp.dot(p, v, preferred_element_type=jnp.float32)
        o_ref[0, :, pl.ds(col, Dh)] = o.astype(o_ref.dtype)


def sdpa(qkv, num_heads, scale):
    """qkv: (B, S, 3D) bf16 -> (B, S, D) bf16. One batch element per grid step."""
    B, S, D3 = qkv.shape
    D = D3 // 3
    Dh = D // num_heads
    return pl.pallas_call(
        partial(_attn_kernel, scale, D, num_heads, Dh),
        grid=(B,),
        in_specs=[pl.BlockSpec((1, S, D3), lambda b: (b, 0, 0))],
        out_specs=pl.BlockSpec((1, S, D), lambda b: (b, 0, 0)),
        out_shape=jax.ShapeDtypeStruct((B, S, D), jnp.bfloat16),
        compiler_params=_cparams("parallel"),
    )(qkv)


# ------------------------------ model blocks -------------------------------

def siglip_attention(x, p, num_heads, eps, residual=None):
    """o_proj(MHA(LN1(x))). LN1 fused into the QKV matmul; SDPA consumes the
    fused (B,S,3D) buffer directly and emits a (B*S, D)-contiguous output, so
    there are no HBM transposes between the three kernels. If `residual` is
    given it is fused into the o-projection epilogue."""
    B, S, D = x.shape
    H = num_heads
    Dh = D // H
    xf = x.reshape(B * S, D)
    qkv = fused_ln_linear(xf, p['ln1_g'], p['ln1_b'], p['qkv_w'], p['qkv_b'],
                          eps, out_dtype=jnp.bfloat16).reshape(B, S, 3 * D)
    o = sdpa(qkv, H, Dh ** -0.5).reshape(B * S, D)              # (B*S, D) bf16
    if residual is None:
        out = linear(o, p['o_w'], p['o_b'], out_dtype=x.dtype)
    else:
        out = linear_residual(o, p['o_w'], p['o_b'], residual.reshape(B * S, D))
    return out.reshape(B, S, D)


def encoder_layer(x, p, num_heads, eps):
    """SiglipEncoderLayer: pre-LN attention + pre-LN MLP, residuals fused."""
    B, S, D = x.shape
    x = siglip_attention(x, p, num_heads, eps, residual=x)
    x = ln_mlp_residual(x.reshape(B * S, D), p['ln2_g'], p['ln2_b'],
                        p['fc1_w'], p['fc1_b'], p['fc2_w'], p['fc2_b'],
                        eps).reshape(B, S, D)
    return x


def attn_time_layer(h, T, p, num_heads, eps):
    """SiglipLayer_AttnTime.forward (eval mode)."""
    B, L1, D = h.shape
    pt = L1 - 1
    pnum = pt // T
    residual = h[:, 1:, :]                                   # (B, pnum*T, D)
    init_cls = h[:, :1, :]
    qt = h[:, 1:, :].reshape(B * pnum, T, D)
    attn = siglip_attention(qt, p, num_heads, eps)           # LN1 + MHA + o_proj
    x = linear_residual(attn.reshape(-1, D), p['tfc_w'], p['tfc_b'],
                        residual.reshape(-1, D)).reshape(B, pnum * T, D)
    return jnp.concatenate([init_cls, x], axis=1)


def spatial_layer(h, T, p, num_heads, eps):
    """SiglipLayer_Spatial.forward (eval mode)."""
    B, L1, D = h.shape
    pt = L1 - 1
    pnum = pt // T
    residual = h
    init_cls = h[:, :1, :]
    qs = h[:, 1:, :]
    cls_tok = jnp.broadcast_to(init_cls[:, None, :, :], (B, T, 1, D)).reshape(B * T, 1, D)
    # 'b (p t) m -> (b t) p m'
    qs = qs.reshape(B, pnum, T, D).transpose(0, 2, 1, 3).reshape(B * T, pnum, D)
    x = jnp.concatenate([cls_tok, qs], axis=1)               # (B*T, pnum+1, D)
    x = siglip_attention(x, p, num_heads, eps)               # LN1 + MHA + o_proj
    cls_new = x[:, :1, :].reshape(B, T, 1, D).mean(axis=1)   # (B, 1, D)
    # '(b t) p m -> b (p t) m'
    res_sp = x[:, 1:, :].reshape(B, T, pnum, D).transpose(0, 2, 1, 3).reshape(B, pnum * T, D)
    x = jnp.concatenate([cls_new, res_sp], axis=1)
    x = residual + x
    x = ln_mlp_residual(x.reshape(-1, D), p['ln2_g'], p['ln2_b'],
                        p['fc1_w'], p['fc1_b'], p['fc2_w'], p['fc2_b'],
                        eps).reshape(B, L1, D)
    return x


def input_ini(x, params):
    """BTAdapter input init. x: (B, T, L, D)."""
    B, T, L, D = x.shape
    L2 = L - 1
    x = x.astype(jnp.float32)
    cls_old = x[:, :, 0, :].mean(axis=1)[:, None, :]                  # (B, 1, D)
    xp = x[:, :, 1:, :].reshape(B * T, L2, D)
    cls_tokens = jnp.broadcast_to(params['btadapter_cls_token'][None, None, :], (B * T, 1, D))
    xp = jnp.concatenate([cls_tokens, xp], axis=1)                    # (B*T, L2+1, D)
    xp = xp + params['pos_embed'][:L2 + 1][None]
    cls = xp[:B, 0, :][:, None, :]                                    # (B, 1, D)
    # '(b t) l d -> (b l) t d'
    xt = xp[:, 1:, :].reshape(B, T, L2, D).transpose(0, 2, 1, 3).reshape(B * L2, T, D)
    xt = xt + params['time_embed'][:T][None]
    # '(b l) t d -> b (l t) d'
    xt = xt.reshape(B, L2, T, D).reshape(B, L2 * T, D)
    cls = (cls_old + cls) / 2
    return jnp.concatenate([cls, xt], axis=1).astype(jnp.bfloat16)    # (B, 1 + L2*T, D)


def forward_btadapter(x1, x2, num_layer, T, params, cfg):
    BT, L, D = x1.shape
    B = BT // T
    x1r = x1.reshape(B, T, L, D)
    if x2 is not None:
        cls = x1r[:, :, 0, :].mean(axis=1)[:, None, :]
        # 'b t l d -> b (l t) d'
        patches = x1r[:, :, 1:, :].transpose(0, 2, 1, 3).reshape(B, (L - 1) * T, D)
        x = x2 + jnp.concatenate([cls, patches], axis=1)
    else:
        x = x1r
    if num_layer == 0:
        x = input_ini(x, params)
    x = attn_time_layer(x, T, params['T'][num_layer], cfg.num_attention_heads,
                        cfg.bt_layer_norm_eps)
    x = spatial_layer(x, T, params['S'][num_layer], cfg.num_attention_heads,
                      cfg.bt_layer_norm_eps)
    return x


def get_combined_embedding(x, x2, T):
    BT, L, D = x.shape
    B = BT // T
    p = L - 1
    x_patch = x[:, 1:, :]
    x_cls = x[:, :1, :]
    # 'b (p t) m -> (b t) p m'
    x2_patch = x2[:, 1:, :].reshape(B, p, T, D).transpose(0, 2, 1, 3).reshape(B * T, p, D)
    return jnp.concatenate([x_cls, (x_patch + x2_patch) / 2], axis=1)


def patch_embed(x, wmat, b, P):
    """Conv2d(kernel=stride=P, valid) as im2col + Pallas matmul.
    wmat is pre-transposed / pre-padded (Kp, D) bf16 from init. x: (N,C,H,W)."""
    N, C, H, W = x.shape
    Hp, Wp = H // P, W // P
    K = C * P * P
    Kp, D = wmat.shape
    patches = (x.reshape(N, C, Hp, P, Wp, P)
                .transpose(0, 2, 4, 1, 3, 5)
                .reshape(N * Hp * Wp, K)).astype(jnp.bfloat16)
    if Kp != K:
        patches = jnp.pad(patches, ((0, 0), (0, Kp - K)))
    out = linear(patches, wmat, b, out_dtype=jnp.float32)
    return out.reshape(N, Hp * Wp, D)


def forward_embedding(x, params, cfg):
    # TODO(synk): reference forward_embedding has a debug `assert 1 <= 0`;
    # we implement the intended embedding computation instead.
    N = x.shape[0]
    patches = patch_embed(x, params['patch_wmat'], params['patch_b'], cfg.patch_size)
    class_embeds = jnp.broadcast_to(params['class_embedding'][None, None, :],
                                    (N, 1, cfg.hidden_size))
    emb = jnp.concatenate([class_embeds, patches], axis=1)
    emb = emb + params['pos_embed'][None]
    return emb.astype(jnp.bfloat16)        # bf16 residual/activation stream


def forward_patch(x, T, params, cfg):
    total = cfg.num_hidden_layers
    depth = cfg.depth
    x2 = None
    states = []
    for idx in range(total):
        if x2 is None:
            states.append(x)
        else:
            states.append(get_combined_embedding(x, x2, T))
        x = encoder_layer(x, params['enc'][idx], cfg.num_attention_heads, cfg.layer_norm_eps)
        if idx >= total - depth:
            num_layer = idx + depth - total
            x2 = forward_btadapter(x, x2, num_layer, T, params, cfg)
    states.append(get_combined_embedding(x, x2, T))
    B = x2.shape[0]
    D = x.shape[-1]
    cls = x[:, 0, :] + jnp.tile(x2[:, 0, :], (1, T)).reshape(B * T, D)
    cls = layernorm(cls, params['post_ln_g'], params['post_ln_b'], cfg.layer_norm_eps)
    return tuple(states), cls


def forward(pixel_values, params, cfg):
    x = pixel_values
    if x.ndim == 5:
        if x.shape[1] == 3:
            x = jnp.transpose(x, (0, 2, 1, 3, 4))
        T = x.shape[1]
        x = x.reshape((-1,) + x.shape[2:])
    else:
        T = 1
    emb = forward_embedding(x, params, cfg)
    hidden_states, pooler_output = forward_patch(emb, T, params, cfg)
    return hidden_states, pooler_output


# ------------------------------ parameter init ------------------------------

def init_params(key, cfg):
    D, I = cfg.hidden_size, cfg.intermediate_size
    C, P = cfg.num_channels, cfg.patch_size
    nP = (cfg.image_size // P) ** 2
    keys = iter(jax.random.split(key, 512))
    wdt = jnp.bfloat16   # matmul weights stored bf16 (MXU-native, halves HBM stream)

    def nrm(shape, s=0.02):
        return (s * jax.random.normal(next(keys), shape)).astype(jnp.float32)

    def attn_p():
        qw, kw, vw = nrm((D, D)), nrm((D, D)), nrm((D, D))
        qb, kb, vb = nrm((D,)), nrm((D,)), nrm((D,))
        return {
            # fused QKV projection: one matmul instead of three
            'qkv_w': jnp.concatenate([qw, kw, vw], axis=1).astype(wdt),   # (D, 3D)
            'qkv_b': jnp.concatenate([qb, kb, vb], axis=0),               # (3D,)
            'o_w': nrm((D, D)).astype(wdt), 'o_b': nrm((D,)),
        }

    def enc_layer():
        d = attn_p()
        d.update({
            'ln1_g': jnp.ones((D,), jnp.float32), 'ln1_b': jnp.zeros((D,), jnp.float32),
            'ln2_g': jnp.ones((D,), jnp.float32), 'ln2_b': jnp.zeros((D,), jnp.float32),
            'fc1_w': nrm((D, I)).astype(wdt), 'fc1_b': nrm((I,)),
            'fc2_w': nrm((I, D)).astype(wdt), 'fc2_b': nrm((D,)),
        })
        return d

    def t_layer():
        d = attn_p()
        d.update({
            'ln1_g': jnp.ones((D,), jnp.float32), 'ln1_b': jnp.zeros((D,), jnp.float32),
            # constant_init(temporal_fc, val=0, bias=0) from the torch __init__
            'tfc_w': jnp.zeros((D, D), wdt), 'tfc_b': jnp.zeros((D,), jnp.float32),
        })
        return d

    # patch-embedding conv weight: pre-transposed to (K, D) and pre-padded to
    # a multiple of 128 along K, stored bf16 (done once at init, not per call).
    K = C * P * P
    Kp = ((K + 127) // 128) * 128
    patch_wmat = nrm((D, C, P, P)).reshape(D, K).T            # (K, D)
    if Kp != K:
        patch_wmat = jnp.pad(patch_wmat, ((0, Kp - K), (0, 0)))
    patch_wmat = patch_wmat.astype(wdt)

    params = {
        'patch_wmat': patch_wmat,
        'patch_b': nrm((D,)),
        'class_embedding': nrm((D,)),
        'pos_embed': nrm((nP + 1, D)),
        'time_embed': nrm((cfg.max_T, D)),
        'btadapter_cls_token': jnp.zeros((D,), jnp.float32),
        'post_ln_g': jnp.ones((D,), jnp.float32),
        'post_ln_b': jnp.zeros((D,), jnp.float32),
        'enc': [enc_layer() for _ in range(cfg.num_hidden_layers)],
        'T': [t_layer() for _ in range(cfg.depth)],
        'S': [enc_layer() for _ in range(cfg.depth)],
    }
    return params


# ----------------------------------- main -----------------------------------

if __name__ == "__main__":
    cfg = SimpleNamespace(
        image_size=16, patch_size=8, num_channels=3,
        hidden_size=32, intermediate_size=64, num_attention_heads=4,
        num_hidden_layers=3, depth=2, max_T=4,
        layer_norm_eps=1e-6,        # Siglip config eps (encoder / post LN)
        bt_layer_norm_eps=1e-5,     # nn.LayerNorm default eps in BTAdapter layers
    )

    key = jax.random.PRNGKey(0)
    pkey, xkey = jax.random.split(key)
    params = init_params(pkey, cfg)

    # pixel_values: (B, T, C, H, W) video clip
    pixel_values = jax.random.normal(xkey, (1, 2, 3, 16, 16), dtype=jnp.float32)

    fwd = jax.jit(lambda pv, p: forward(pv, p, cfg))
    hidden_states, pooler_output = fwd(pixel_values, params)

    jax.block_until_ready(pooler_output)
    for h in hidden_states:
        jax.block_until_ready(h)

    assert pooler_output.shape == (2, cfg.hidden_size)
    assert len(hidden_states) == cfg.num_hidden_layers + 1
    print("KERNEL_OK")
</pallas_src>

<mosaic_0001>
module attributes {stable_mosaic.version = 11 : i64} {
  func.func @_linear_kernel(%arg0: i32, %arg1: memref<8x256xbf16, #tpu.memory_space<vmem>>, %arg2: memref<256x32xbf16, #tpu.memory_space<vmem>>, %arg3: memref<1x32xf32, #tpu.memory_space<vmem>>, %arg4: memref<8x32xf32, #tpu.memory_space<vmem>>) attributes {dimension_semantics = [#tpu.dimension_semantics<parallel>], iteration_bounds = array<i64: 1>, scalar_prefetch = 0 : i64, scratch_operands = 0 : i64, tpu.core_type = #tpu.core_type<tc>, window_params = [{transform_indices = @transform_0, window_bounds = array<i64: 8, 256>}, {pipeline_mode = #tpu.pipeline_mode<synchronous>, transform_indices = @transform_1, window_bounds = array<i64: 256, 32>}, {pipeline_mode = #tpu.pipeline_mode<synchronous>, transform_indices = @transform_2, window_bounds = array<i64: 1, 32>}, {transform_indices = @transform_3, window_bounds = array<i64: 8, 32>}]} {
    %c0 = arith.constant 0 : index
    %c0_0 = arith.constant 0 : index
    %0 = vector.load %arg1[%c0, %c0_0] : memref<8x256xbf16, #tpu.memory_space<vmem>>, vector<8x256xbf16>
    %c0_1 = arith.constant 0 : index
    %c0_2 = arith.constant 0 : index
    %1 = vector.load %arg2[%c0_1, %c0_2] : memref<256x32xbf16, #tpu.memory_space<vmem>>, vector<256x32xbf16>
    %cst = arith.constant dense<0.000000e+00> : vector<8x32xf32>
    %2 = tpu.matmul %0, %1, %cst {dimension_numbers = #tpu.dot_dimension_numbers<[1], [0], [0], [1], [0, 0, 1, 1], [], []>} : vector<8x256xbf16>, vector<256x32xbf16>, vector<8x32xf32> -> vector<8x32xf32>
    %c0_3 = arith.constant 0 : index
    %c0_4 = arith.constant 0 : index
    %3 = vector.load %arg3[%c0_3, %c0_4] : memref<1x32xf32, #tpu.memory_space<vmem>>, vector<1x32xf32>
    %4 = vector.broadcast %3 : vector<1x32xf32> to vector<8x32xf32>
    %5 = arith.addf %2, %4 : vector<8x32xf32>
    %c0_5 = arith.constant 0 : index
    %c0_6 = arith.constant 0 : index
    %6 = vector.load %arg4[%c0_5, %c0_6] : memref<8x32xf32, #tpu.memory_space<vmem>>, vector<8x32xf32>
    tpu.vector_store %arg4[%c0_5, %c0_6], %5 {strides = array<i32>} : memref<8x32xf32, #tpu.memory_space<vmem>>, vector<8x32xf32>,
    return
  }
  func.func @transform_0(%arg0: i32) -> (i32, i32) {
    %c0_i32 = arith.constant 0 : i32
    %c0_i32_0 = arith.constant 0 : i32
    return %arg0, %c0_i32 : i32, i32
  }
  func.func @transform_1(%arg0: i32) -> (i32, i32) {
    %c0_i32 = arith.constant 0 : i32
    %c0_i32_0 = arith.constant 0 : i32
    %c0_i32_1 = arith.constant 0 : i32
    return %c0_i32, %c0_i32_0 : i32, i32
  }
  func.func @transform_2(%arg0: i32) -> (i32, i32) {
    %c0_i32 = arith.constant 0 : i32
    %c0_i32_0 = arith.constant 0 : i32
    %c0_i32_1 = arith.constant 0 : i32
    return %c0_i32, %c0_i32_0 : i32, i32
  }
  func.func @transform_3(%arg0: i32) -> (i32, i32) {
    %c0_i32 = arith.constant 0 : i32
    %c0_i32_0 = arith.constant 0 : i32
    return %arg0, %c0_i32 : i32, i32
  }
}

module attributes {stable_mosaic.version = 11 : i64} {
  func.func @_ln_linear_kernel(%arg0: i32, %arg1: memref<10x32xbf16, #tpu.memory_space<vmem>>, %arg2: memref<1x32xf32, #tpu.memory_space<vmem>>, %arg3: memref<1x32xf32, #tpu.memory_space<vmem>>, %arg4: memref<32x96xbf16, #tpu.memory_space<vmem>>, %arg5: memref<1x96xf32, #tpu.memory_space<vmem>>, %arg6: memref<10x96xbf16, #tpu.memory_space<vmem>>) attributes {dimension_semantics = [#tpu.dimension_semantics<parallel>], iteration_bounds = array<i64: 1>, scalar_prefetch = 0 : i64, scratch_operands = 0 : i64, tpu.core_type = #tpu.core_type<tc>, window_params = [{transform_indices = @transform_0, window_bounds = array<i64: 10, 32>}, {pipeline_mode = #tpu.pipeline_mode<synchronous>, transform_indices = @transform_1, window_bounds = array<i64: 1, 32>}, {pipeline_mode = #tpu.pipeline_mode<synchronous>, transform_indices = @transform_2, window_bounds = array<i64: 1, 32>}, {pipeline_mode = #tpu.pipeline_mode<synchronous>, transform_indices = @transform_3, window_bounds = array<i64: 32, 96>}, {pipeline_mode = #tpu.pipeline_mode<synchronous>, transform_indices = @transform_4, window_bounds = array<i64: 1, 96>}, {transform_indices = @transform_5, window_bounds = array<i64: 10, 96>}]} {
    %c0 = arith.constant 0 : index
    %c0_0 = arith.constant 0 : index
    %0 = vector.load %arg1[%c0, %c0_0] : memref<10x32xbf16, #tpu.memory_space<vmem>>, vector<10x32xbf16>
    %1 = arith.extf %0 : vector<10x32xbf16> to vector<10x32xf32>
    %cst = arith.constant dense<0.000000e+00> : vector<10xf32>
    %2 = vector.multi_reduction <add>, %1, %cst [1] : vector<10x32xf32> to vector<10xf32>
    %3 = vector.shape_cast %2 : vector<10xf32> to vector<10x1xf32>
    %cst_1 = arith.constant 3.200000e+01 : f32
    %4 = vector.broadcast %cst_1 : f32 to vector<10x1xf32>
    %5 = arith.divf %3, %4 : vector<10x1xf32>
    %6 = vector.broadcast %5 : vector<10x1xf32> to vector<10x32xf32>
    %7 = arith.subf %1, %6 : vector<10x32xf32>
    %8 = arith.mulf %7, %7 : vector<10x32xf32>
    %cst_2 = arith.constant dense<0.000000e+00> : vector<10xf32>
    %9 = vector.multi_reduction <add>, %8, %cst_2 [1] : vector<10x32xf32> to vector<10xf32>
    %10 = vector.shape_cast %9 : vector<10xf32> to vector<10x1xf32>
    %cst_3 = arith.constant 3.200000e+01 : f32
    %11 = vector.broadcast %cst_3 : f32 to vector<10x1xf32>
    %12 = arith.divf %10, %11 : vector<10x1xf32>
    %13 = vector.broadcast %5 : vector<10x1xf32> to vector<10x32xf32>
    %14 = arith.subf %1, %13 : vector<10x32xf32>
    %cst_4 = arith.constant 9.99999997E-7 : f32
    %15 = vector.broadcast %cst_4 : f32 to vector<10x1xf32>
    %16 = arith.addf %12, %15 : vector<10x1xf32>
    %17 = math.rsqrt %16 : vector<10x1xf32>
    %18 = vector.broadcast %17 : vector<10x1xf32> to vector<10x32xf32>
    %19 = arith.mulf %14, %18 : vector<10x32xf32>
    %c0_5 = arith.constant 0 : index
    %c0_6 = arith.constant 0 : index
    %20 = vector.load %arg2[%c0_5, %c0_6] : memref<1x32xf32, #tpu.memory_space<vmem>>, vector<1x32xf32>
    %21 = vector.broadcast %20 : vector<1x32xf32> to vector<10x32xf32>
    %22 = arith.mulf %19, %21 : vector<10x32xf32>
    %c0_7 = arith.constant 0 : index
    %c0_8 = arith.constant 0 : index
    %23 = vector.load %arg3[%c0_7, %c0_8] : memref<1x32xf32, #tpu.memory_space<vmem>>, vector<1x32xf32>
    %24 = vector.broadcast %23 : vector<1x32xf32> to vector<10x32xf32>
    %25 = arith.addf %22, %24 : vector<10x32xf32>
    %26 = arith.truncf %25 : vector<10x32xf32> to vector<10x32xbf16>
    %c0_9 = arith.constant 0 : index
    %c0_10 = arith.constant 0 : index
    %27 = vector.load %arg4[%c0_9, %c0_10] : memref<32x96xbf16, #tpu.memory_space<vmem>>, vector<32x96xbf16>
    %cst_11 = arith.constant dense<0.000000e+00> : vector<10x96xf32>
    %28 = tpu.matmul %26, %27, %cst_11 {dimension_numbers = #tpu.dot_dimension_numbers<[1], [0], [0], [1], [0, 0, 1, 1], [], []>} : vector<10x32xbf16>, vector<32x96xbf16>, vector<10x96xf32> -> vector<10x96xf32>
    %c0_12 = arith.constant 0 : index
    %c0_13 = arith.constant 0 : index
    %29 = vector.load %arg5[%c0_12, %c0_13] : memref<1x96xf32, #tpu.memory_space<vmem>>, vector<1x96xf32>
    %30 = vector.broadcast %29 : vector<1x96xf32> to vector<10x96xf32>
    %31 = arith.addf %28, %30 : vector<10x96xf32>
    %32 = arith.truncf %31 : vector<10x96xf32> to vector<10x96xbf16>
    %c0_14 = arith.constant 0 : index
    %c0_15 = arith.constant 0 : index
    %33 = vector.load %arg6[%c0_14, %c0_15] : memref<10x96xbf16, #tpu.memory_space<vmem>>, vector<10x96xbf16>
    tpu.vector_store %arg6[%c0_14, %c0_15], %32 {strides = array<i32>} : memref<10x96xbf16, #tpu.memory_space<vmem>>, vector<10x96xbf16>,
    return
  }
  func.func @transform_0(%arg0: i32) -> (i32, i32) {
    %c0_i32 = arith.constant 0 : i32
    %c0_i32_0 = arith.constant 0 : i32
    return %arg0, %c0_i32 : i32, i32
  }
  func.func @transform_1(%arg0: i32) -> (i32, i32) {
    %c0_i32 = arith.constant 0 : i32
    %c0_i32_0 = arith.constant 0 : i32
    %c0_i32_1 = arith.constant 0 : i32
    return %c0_i32, %c0_i32_0 : i32, i32
  }
  func.func @transform_2(%arg0: i32) -> (i32, i32) {
    %c0_i32 = arith.constant 0 : i32
    %c0_i32_0 = arith.constant 0 : i32
    %c0_i32_1 = arith.constant 0 : i32
    return %c0_i32, %c0_i32_0 : i32, i32
  }
  func.func @transform_3(%arg0: i32) -> (i32, i32) {
    %c0_i32 = arith.constant 0 : i32
    %c0_i32_0 = arith.constant 0 : i32
    %c0_i32_1 = arith.constant 0 : i32
    return %c0_i32, %c0_i32_0 : i32, i32
  }
  func.func @transform_4(%arg0: i32) -> (i32, i32) {
    %c0_i32 = arith.constant 0 : i32
    %c0_i32_0 = arith.constant 0 : i32
    %c0_i32_1 = arith.constant 0 : i32
    return %c0_i32, %c0_i32_0 : i32, i32
  }
  func.func @transform_5(%arg0: i32) -> (i32, i32) {
    %c0_i32 = arith.constant 0 : i32
    %c0_i32_0 = arith.constant 0 : i32
    return %arg0, %c0_i32 : i32, i32
  }
}

module attributes {stable_mosaic.version = 11 : i64} {
  func.func @_linear_res_kernel(%arg0: i32, %arg1: memref<10x32xbf16, #tpu.memory_space<vmem>>, %arg2: memref<32x32xbf16, #tpu.memory_space<vmem>>, %arg3: memref<1x32xf32, #tpu.memory_space<vmem>>, %arg4: memref<10x32xbf16, #tpu.memory_space<vmem>>, %arg5: memref<10x32xbf16, #tpu.memory_space<vmem>>) attributes {dimension_semantics = [#tpu.dimension_semantics<parallel>], iteration_bounds = array<i64: 1>, scalar_prefetch = 0 : i64, scratch_operands = 0 : i64, tpu.core_type = #tpu.core_type<tc>, window_params = [{transform_indices = @transform_0, window_bounds = array<i64: 10, 32>}, {pipeline_mode = #tpu.pipeline_mode<synchronous>, transform_indices = @transform_1, window_bounds = array<i64: 32, 32>}, {pipeline_mode = #tpu.pipeline_mode<synchronous>, transform_indices = @transform_2, window_bounds = array<i64: 1, 32>}, {transform_indices = @transform_3, window_bounds = array<i64: 10, 32>}, {transform_indices = @transform_4, window_bounds = array<i64: 10, 32>}]} {
    %c0 = arith.constant 0 : index
    %c0_0 = arith.constant 0 : index
    %0 = vector.load %arg1[%c0, %c0_0] : memref<10x32xbf16, #tpu.memory_space<vmem>>, vector<10x32xbf16>
    %c0_1 = arith.constant 0 : index
    %c0_2 = arith.constant 0 : index
    %1 = vector.load %arg2[%c0_1, %c0_2] : memref<32x32xbf16, #tpu.memory_space<vmem>>, vector<32x32xbf16>
    %cst = arith.constant dense<0.000000e+00> : vector<10x32xf32>
    %2 = tpu.matmul %0, %1, %cst {dimension_numbers = #tpu.dot_dimension_numbers<[1], [0], [0], [1], [0, 0, 1, 1], [], []>} : vector<10x32xbf16>, vector<32x32xbf16>, vector<10x32xf32> -> vector<10x32xf32>
    %c0_3 = arith.constant 0 : index
    %c0_4 = arith.constant 0 : index
    %3 = vector.load %arg4[%c0_3, %c0_4] : memref<10x32xbf16, #tpu.memory_space<vmem>>, vector<10x32xbf16>
    %4 = arith.extf %3 : vector<10x32xbf16> to vector<10x32xf32>
    %5 = arith.addf %4, %2 : vector<10x32xf32>
    %c0_5 = arith.constant 0 : index
    %c0_6 = arith.constant 0 : index
    %6 = vector.load %arg3[%c0_5, %c0_6] : memref<1x32xf32, #tpu.memory_space<vmem>>, vector<1x32xf32>
    %7 = vector.broadcast %6 : vector<1x32xf32> to vector<10x32xf32>
    %8 = arith.addf %5, %7 : vector<10x32xf32>
    %9 = arith.truncf %8 : vector<10x32xf32> to vector<10x32xbf16>
    %c0_7 = arith.constant 0 : index
    %c0_8 = arith.constant 0 : index
    %10 = vector.load %arg5[%c0_7, %c0_8] : memref<10x32xbf16, #tpu.memory_space<vmem>>, vector<10x32xbf16>
    tpu.vector_store %arg5[%c0_7, %c0_8], %9 {strides = array<i32>} : memref<10x32xbf16, #tpu.memory_space<vmem>>, vector<10x32xbf16>,
    return
  }
  func.func @transform_0(%arg0: i32) -> (i32, i32) {
    %c0_i32 = arith.constant 0 : i32
    %c0_i32_0 = arith.constant 0 : i32
    return %arg0, %c0_i32 : i32, i32
  }
  func.func @transform_1(%arg0: i32) -> (i32, i32) {
    %c0_i32 = arith.constant 0 : i32
    %c0_i32_0 = arith.constant 0 : i32
    %c0_i32_1 = arith.constant 0 : i32
    return %c0_i32, %c0_i32_0 : i32, i32
  }
  func.func @transform_2(%arg0: i32) -> (i32, i32) {
    %c0_i32 = arith.constant 0 : i32
    %c0_i32_0 = arith.constant 0 : i32
    %c0_i32_1 = arith.constant 0 : i32
    return %c0_i32, %c0_i32_0 : i32, i32
  }
  func.func @transform_3(%arg0: i32) -> (i32, i32) {
    %c0_i32 = arith.constant 0 : i32
    %c0_i32_0 = arith.constant 0 : i32
    return %arg0, %c0_i32 : i32, i32
  }
  func.func @transform_4(%arg0: i32) -> (i32, i32) {
    %c0_i32 = arith.constant 0 : i32
    %c0_i32_0 = arith.constant 0 : i32
    return %arg0, %c0_i32 : i32, i32
  }
}

module attributes {stable_mosaic.version = 11 : i64} {
  func.func @_attn_kernel(%arg0: i32, %arg1: memref<1x5x96xbf16, #tpu.memory_space<vmem>>, %arg2: memref<1x5x32xbf16, #tpu.memory_space<vmem>>) attributes {dimension_semantics = [#tpu.dimension_semantics<parallel>], iteration_bounds = array<i64: 2>, scalar_prefetch = 0 : i64, scratch_operands = 0 : i64, tpu.core_type = #tpu.core_type<tc>, window_params = [{transform_indices = @transform_0, window_bounds = array<i64: 1, 5, 96>}, {transform_indices = @transform_1, window_bounds = array<i64: 1, 5, 32>}]} {
    %c0 = arith.constant 0 : index
    %c0_0 = arith.constant 0 : index
    %c0_1 = arith.constant 0 : index
    %0 = vector.load %arg1[%c0, %c0_0, %c0_1] : memref<1x5x96xbf16, #tpu.memory_space<vmem>>, vector<1x5x8xbf16>
    %1 = vector.shape_cast %0 : vector<1x5x8xbf16> to vector<5x8xbf16>
    %2 = arith.extf %1 : vector<5x8xbf16> to vector<5x8xf32>
    %cst = arith.constant 0.353553385 : f32
    %3 = vector.broadcast %cst : f32 to vector<5x8xf32>
    %4 = arith.mulf %2, %3 : vector<5x8xf32>
    %5 = arith.truncf %4 : vector<5x8xf32> to vector<5x8xbf16>
    %c0_2 = arith.constant 0 : index
    %c0_3 = arith.constant 0 : index
    %c32 = arith.constant 32 : index
    %6 = vector.load %arg1[%c0_2, %c0_3, %c32] : memref<1x5x96xbf16, #tpu.memory_space<vmem>>, vector<1x5x8xbf16>
    %7 = vector.shape_cast %6 : vector<1x5x8xbf16> to vector<5x8xbf16>
    %c0_4 = arith.constant 0 : index
    %c0_5 = arith.constant 0 : index
    %c64 = arith.constant 64 : index
    %8 = vector.load %arg1[%c0_4, %c0_5, %c64] : memref<1x5x96xbf16, #tpu.memory_space<vmem>>, vector<1x5x8xbf16>
    %9 = vector.shape_cast %8 : vector<1x5x8xbf16> to vector<5x8xbf16>
    "tpu.trace_start"() <{level = 10 : i32, message = "qd,kd->qk"}> : () -> ()
    %cst_6 = arith.constant dense<0.000000e+00> : vector<5x5xf32>
    %10 = tpu.matmul %5, %7, %cst_6 {dimension_numbers = #tpu.dot_dimension_numbers<[1], [1], [0], [0], [0, 0, 1, 0], [], []>} : vector<5x8xbf16>, vector<5x8xbf16>, vector<5x5xf32> -> vector<5x5xf32>
    "tpu.trace_stop"() : () -> ()
    %cst_7 = arith.constant dense<0xFF800000> : vector<5xf32>
    %11 = vector.multi_reduction <maximumf>, %10, %cst_7 [1] : vector<5x5xf32> to vector<5xf32>
    %12 = vector.shape_cast %11 : vector<5xf32> to vector<5x1xf32>
    %13 = vector.broadcast %12 : vector<5x1xf32> to vector<5x5xf32>
    %14 = arith.subf %10, %13 : vector<5x5xf32>
    %15 = math.exp %14 : vector<5x5xf32>
    %cst_8 = arith.constant dense<0.000000e+00> : vector<5xf32>
    %16 = vector.multi_reduction <add>, %15, %cst_8 [1] : vector<5x5xf32> to vector<5xf32>
    %17 = vector.shape_cast %16 : vector<5xf32> to vector<5x1xf32>
    %18 = tpu.reciprocal %17 {approx = true} : vector<5x1xf32> -> vector<5x1xf32>
    %19 = vector.broadcast %18 : vector<5x1xf32> to vector<5x5xf32>
    %20 = arith.mulf %15, %19 : vector<5x5xf32>
    %21 = arith.truncf %20 : vector<5x5xf32> to vector<5x5xbf16>
    %cst_9 = arith.constant dense<0.000000e+00> : vector<5x8xf32>
    %22 = tpu.matmul %21, %9, %cst_9 {dimension_numbers = #tpu.dot_dimension_numbers<[1], [0], [0], [1], [0, 0, 1, 1], [], []>} : vector<5x5xbf16>, vector<5x8xbf16>, vector<5x8xf32> -> vector<5x8xf32>
    %23 = arith.truncf %22 : vector<5x8xf32> to vector<5x8xbf16>
    %c0_10 = arith.constant 0 : index
    %c0_11 = arith.constant 0 : index
    %c0_12 = arith.constant 0 : index
    %24 = vector.load %arg2[%c0_10, %c0_11, %c0_12] : memref<1x5x32xbf16, #tpu.memory_space<vmem>>, vector<1x5x8xbf16>
    %25 = vector.shape_cast %24 : vector<1x5x8xbf16> to vector<5x8xbf16>
    %26 = vector.shape_cast %23 : vector<5x8xbf16> to vector<1x5x8xbf16>
    tpu.vector_store %arg2[%c0_10, %c0_11, %c0_12], %26 {strides = array<i32>} : memref<1x5x32xbf16, #tpu.memory_space<vmem>>, vector<1x5x8xbf16>,
    %c0_13 = arith.constant 0 : index
    %c0_14 = arith.constant 0 : index
    %c8 = arith.constant 8 : index
    %27 = vector.load %arg1[%c0_13, %c0_14, %c8] : memref<1x5x96xbf16, #tpu.memory_space<vmem>>, vector<1x5x8xbf16>
    %28 = vector.shape_cast %27 : vector<1x5x8xbf16> to vector<5x8xbf16>
    %29 = arith.extf %28 : vector<5x8xbf16> to vector<5x8xf32>
    %cst_15 = arith.constant 0.353553385 : f32
    %30 = vector.broadcast %cst_15 : f32 to vector<5x8xf32>
    %31 = arith.mulf %29, %30 : vector<5x8xf32>
    %32 = arith.truncf %31 : vector<5x8xf32> to vector<5x8xbf16>
    %c0_16 = arith.constant 0 : index
    %c0_17 = arith.constant 0 : index
    %c40 = arith.constant 40 : index
    %33 = vector.load %arg1[%c0_16, %c0_17, %c40] : memref<1x5x96xbf16, #tpu.memory_space<vmem>>, vector<1x5x8xbf16>
    %34 = vector.shape_cast %33 : vector<1x5x8xbf16> to vector<5x8xbf16>
    %c0_18 = arith.constant 0 : index
    %c0_19 = arith.constant 0 : index
    %c72 = arith.constant 72 : index
    %35 = vector.load %arg1[%c0_18, %c0_19, %c72] : memref<1x5x96xbf16, #tpu.memory_space<vmem>>, vector<1x5x8xbf16>
    %36 = vector.shape_cast %35 : vector<1x5x8xbf16> to vector<5x8xbf16>
    "tpu.trace_start"() <{level = 10 : i32, message = "qd,kd->qk"}> : () -> ()
    %cst_20 = arith.constant dense<0.000000e+00> : vector<5x5xf32>
    %37 = tpu.matmul %32, %34, %cst_20 {dimension_numbers = #tpu.dot_dimension_numbers<[1], [1], [0], [0], [0, 0, 1, 0], [], []>} : vector<5x8xbf16>, vector<5x8xbf16>, vector<5x5xf32> -> vector<5x5xf32>
    "tpu.trace_stop"() : () -> ()
    %cst_21 = arith.constant dense<0xFF800000> : vector<5xf32>
    %38 = vector.multi_reduction <maximumf>, %37, %cst_21 [1] : vector<5x5xf32> to vector<5xf32>
    %39 = vector.shape_cast %38 : vector<5xf32> to vector<5x1xf32>
    %40 = vector.broadcast %39 : vector<5x1xf32> to vector<5x5xf32>
    %41 = arith.subf %37, %40 : vector<5x5xf32>
    %42 = math.exp %41 : vector<5x5xf32>
    %cst_22 = arith.constant dense<0.000000e+00> : vector<5xf32>
    %43 = vector.multi_reduction <add>, %42, %cst_22 [1] : vector<5x5xf32> to vector<5xf32>
    %44 = vector.shape_cast %43 : vector<5xf32> to vector<5x1xf32>
    %45 = tpu.reciprocal %44 {approx = true} : vector<5x1xf32> -> vector<5x1xf32>
    %46 = vector.broadcast %45 : vector<5x1xf32> to vector<5x5xf32>
    %47 = arith.mulf %42, %46 : vector<5x5xf32>
    %48 = arith.truncf %47 : vector<5x5xf32> to vector<5x5xbf16>
    %cst_23 = arith.constant dense<0.000000e+00> : vector<5x8xf32>
    %49 = tpu.matmul %48, %36, %cst_23 {dimension_numbers = #tpu.dot_dimension_numbers<[1], [0], [0], [1], [0, 0, 1, 1], [], []>} : vector<5x5xbf16>, vector<5x8xbf16>, vector<5x8xf32> -> vector<5x8xf32>
    %50 = arith.truncf %49 : vector<5x8xf32> to vector<5x8xbf16>
    %c0_24 = arith.constant 0 : index
    %c0_25 = arith.constant 0 : index
    %c8_26 = arith.constant 8 : index
    %51 = vector.load %arg2[%c0_24, %c0_25, %c8_26] : memref<1x5x32xbf16, #tpu.memory_space<vmem>>, vector<1x5x8xbf16>
    %52 = vector.shape_cast %51 : vector<1x5x8xbf16> to vector<5x8xbf16>
    %53 = vector.shape_cast %50 : vector<5x8xbf16> to vector<1x5x8xbf16>
    tpu.vector_store %arg2[%c0_24, %c0_25, %c8_26], %53 {strides = array<i32>} : memref<1x5x32xbf16, #tpu.memory_space<vmem>>, vector<1x5x8xbf16>,
    %c0_27 = arith.constant 0 : index
    %c0_28 = arith.constant 0 : index
    %c16 = arith.constant 16 : index
    %54 = vector.load %arg1[%c0_27, %c0_28, %c16] : memref<1x5x96xbf16, #tpu.memory_space<vmem>>, vector<1x5x8xbf16>
    %55 = vector.shape_cast %54 : vector<1x5x8xbf16> to vector<5x8xbf16>
    %56 = arith.extf %55 : vector<5x8xbf16> to vector<5x8xf32>
    %cst_29 = arith.constant 0.353553385 : f32
    %57 = vector.broadcast %cst_29 : f32 to vector<5x8xf32>
    %58 = arith.mulf %56, %57 : vector<5x8xf32>
    %59 = arith.truncf %58 : vector<5x8xf32> to vector<5x8xbf16>
    %c0_30 = arith.constant 0 : index
    %c0_31 = arith.constant 0 : index
    %c48 = arith.constant 48 : index
    %60 = vector.load %arg1[%c0_30, %c0_31, %c48] : memref<1x5x96xbf16, #tpu.memory_space<vmem>>, vector<1x5x8xbf16>
    %61 = vector.shape_cast %60 : vector<1x5x8xbf16> to vector<5x8xbf16>
    %c0_32 = arith.constant 0 : index
    %c0_33 = arith.constant 0 : index
    %c80 = arith.constant 80 : index
    %62 = vector.load %arg1[%c0_32, %c0_33, %c80] : memref<1x5x96xbf16, #tpu.memory_space<vmem>>, vector<1x5x8xbf16>
    %63 = vector.shape_cast %62 : vector<1x5x8xbf16> to vector<5x8xbf16>
    "tpu.trace_start"() <{level = 10 : i32, message = "qd,kd->qk"}> : () -> ()
    %cst_34 = arith.constant dense<0.000000e+00> : vector<5x5xf32>
    %64 = tpu.matmul %59, %61, %cst_34 {dimension_numbers = #tpu.dot_dimension_numbers<[1], [1], [0], [0], [0, 0, 1, 0], [], []>} : vector<5x8xbf16>, vector<5x8xbf16>, vector<5x5xf32> -> vector<5x5xf32>
    "tpu.trace_stop"() : () -> ()
    %cst_35 = arith.constant dense<0xFF800000> : vector<5xf32>
    %65 = vector.multi_reduction <maximumf>, %64, %cst_35 [1] : vector<5x5xf32> to vector<5xf32>
    %66 = vector.shape_cast %65 : vector<5xf32> to vector<5x1xf32>
    %67 = vector.broadcast %66 : vector<5x1xf32> to vector<5x5xf32>
    %68 = arith.subf %64, %67 : vector<5x5xf32>
    %69 = math.exp %68 : vector<5x5xf32>
    %cst_36 = arith.constant dense<0.000000e+00> : vector<5xf32>
    %70 = vector.multi_reduction <add>, %69, %cst_36 [1] : vector<5x5xf32> to vector<5xf32>
    %71 = vector.shape_cast %70 : vector<5xf32> to vector<5x1xf32>
    %72 = tpu.reciprocal %71 {approx = true} : vector<5x1xf32> -> vector<5x1xf32>
    %73 = vector.broadcast %72 : vector<5x1xf32> to vector<5x5xf32>
    %74 = arith.mulf %69, %73 : vector<5x5xf32>
    %75 = arith.truncf %74 : vector<5x5xf32> to vector<5x5xbf16>
    %cst_37 = arith.constant dense<0.000000e+00> : vector<5x8xf32>
    %76 = tpu.matmul %75, %63, %cst_37 {dimension_numbers = #tpu.dot_dimension_numbers<[1], [0], [0], [1], [0, 0, 1, 1], [], []>} : vector<5x5xbf16>, vector<5x8xbf16>, vector<5x8xf32> -> vector<5x8xf32>
    %77 = arith.truncf %76 : vector<5x8xf32> to vector<5x8xbf16>
    %c0_38 = arith.constant 0 : index
    %c0_39 = arith.constant 0 : index
    %c16_40 = arith.constant 16 : index
    %78 = vector.load %arg2[%c0_38, %c0_39, %c16_40] : memref<1x5x32xbf16, #tpu.memory_space<vmem>>, vector<1x5x8xbf16>
    %79 = vector.shape_cast %78 : vector<1x5x8xbf16> to vector<5x8xbf16>
    %80 = vector.shape_cast %77 : vector<5x8xbf16> to vector<1x5x8xbf16>
    tpu.vector_store %arg2[%c0_38, %c0_39, %c16_40], %80 {strides = array<i32>} : memref<1x5x32xbf16, #tpu.memory_space<vmem>>, vector<1x5x8xbf16>,
    %c0_41 = arith.constant 0 : index
    %c0_42 = arith.constant 0 : index
    %c24 = arith.constant 24 : index
    %81 = vector.load %arg1[%c0_41, %c0_42, %c24] : memref<1x5x96xbf16, #tpu.memory_space<vmem>>, vector<1x5x8xbf16>
    %82 = vector.shape_cast %81 : vector<1x5x8xbf16> to vector<5x8xbf16>
    %83 = arith.extf %82 : vector<5x8xbf16> to vector<5x8xf32>
    %cst_43 = arith.constant 0.353553385 : f32
    %84 = vector.broadcast %cst_43 : f32 to vector<5x8xf32>
    %85 = arith.mulf %83, %84 : vector<5x8xf32>
    %86 = arith.truncf %85 : vector<5x8xf32> to vector<5x8xbf16>
    %c0_44 = arith.constant 0 : index
    %c0_45 = arith.constant 0 : index
    %c56 = arith.constant 56 : index
    %87 = vector.load %arg1[%c0_44, %c0_45, %c56] : memref<1x5x96xbf16, #tpu.memory_space<vmem>>, vector<1x5x8xbf16>
    %88 = vector.shape_cast %87 : vector<1x5x8xbf16> to vector<5x8xbf16>
    %c0_46 = arith.constant 0 : index
    %c0_47 = arith.constant 0 : index
    %c88 = arith.constant 88 : index
    %89 = vector.load %arg1[%c0_46, %c0_47, %c88] : memref<1x5x96xbf16, #tpu.memory_space<vmem>>, vector<1x5x8xbf16>
    %90 = vector.shape_cast %89 : vector<1x5x8xbf16> to vector<5x8xbf16>
    "tpu.trace_start"() <{level = 10 : i32, message = "qd,kd->qk"}> : () -> ()
    %cst_48 = arith.constant dense<0.000000e+00> : vector<5x5xf32>
    %91 = tpu.matmul %86, %88, %cst_48 {dimension_numbers = #tpu.dot_dimension_numbers<[1], [1], [0], [0], [0, 0, 1, 0], [], []>} : vector<5x8xbf16>, vector<5x8xbf16>, vector<5x5xf32> -> vector<5x5xf32>
    "tpu.trace_stop"() : () -> ()
    %cst_49 = arith.constant dense<0xFF800000> : vector<5xf32>
    %92 = vector.multi_reduction <maximumf>, %91, %cst_49 [1] : vector<5x5xf32> to vector<5xf32>
    %93 = vector.shape_cast %92 : vector<5xf32> to vector<5x1xf32>
    %94 = vector.broadcast %93 : vector<5x1xf32> to vector<5x5xf32>
    %95 = arith.subf %91, %94 : vector<5x5xf32>
    %96 = math.exp %95 : vector<5x5xf32>
    %cst_50 = arith.constant dense<0.000000e+00> : vector<5xf32>
    %97 = vector.multi_reduction <add>, %96, %cst_50 [1] : vector<5x5xf32> to vector<5xf32>
    %98 = vector.shape_cast %97 : vector<5xf32> to vector<5x1xf32>
    %99 = tpu.reciprocal %98 {approx = true} : vector<5x1xf32> -> vector<5x1xf32>
    %100 = vector.broadcast %99 : vector<5x1xf32> to vector<5x5xf32>
    %101 = arith.mulf %96, %100 : vector<5x5xf32>
    %102 = arith.truncf %101 : vector<5x5xf32> to vector<5x5xbf16>
    %cst_51 = arith.constant dense<0.000000e+00> : vector<5x8xf32>
    %103 = tpu.matmul %102, %90, %cst_51 {dimension_numbers = #tpu.dot_dimension_numbers<[1], [0], [0], [1], [0, 0, 1, 1], [], []>} : vector<5x5xbf16>, vector<5x8xbf16>, vector<5x8xf32> -> vector<5x8xf32>
    %104 = arith.truncf %103 : vector<5x8xf32> to vector<5x8xbf16>
    %c0_52 = arith.constant 0 : index
    %c0_53 = arith.constant 0 : index
    %c24_54 = arith.constant 24 : index
    %105 = vector.load %arg2[%c0_52, %c0_53, %c24_54] : memref<1x5x32xbf16, #tpu.memory_space<vmem>>, vector<1x5x8xbf16>
    %106 = vector.shape_cast %105 : vector<1x5x8xbf16> to vector<5x8xbf16>
    %107 = vector.shape_cast %104 : vector<5x8xbf16> to vector<1x5x8xbf16>
    tpu.vector_store %arg2[%c0_52, %c0_53, %c24_54], %107 {strides = array<i32>} : memref<1x5x32xbf16, #tpu.memory_space<vmem>>, vector<1x5x8xbf16>,
    return
  }
  func.func @transform_0(%arg0: i32) -> (i32, i32, i32) {
    %c0_i32 = arith.constant 0 : i32
    %c0_i32_0 = arith.constant 0 : i32
    %c0_i32_1 = arith.constant 0 : i32
    return %arg0, %c0_i32, %c0_i32_0 : i32, i32, i32
  }
  func.func @transform_1(%arg0: i32) -> (i32, i32, i32) {
    %c0_i32 = arith.constant 0 : i32
    %c0_i32_0 = arith.constant 0 : i32
    %c0_i32_1 = arith.constant 0 : i32
    return %arg0, %c0_i32, %c0_i32_0 : i32, i32, i32
  }
}

module attributes {stable_mosaic.version = 11 : i64} {
  func.func @_ln_mlp_res_kernel(%arg0: i32, %arg1: i32, %arg2: memref<10x32xbf16, #tpu.memory_space<vmem>>, %arg3: memref<1x32xf32, #tpu.memory_space<vmem>>, %arg4: memref<1x32xf32, #tpu.memory_space<vmem>>, %arg5: memref<32x64xbf16, #tpu.memory_space<vmem>>, %arg6: memref<1x64xf32, #tpu.memory_space<vmem>>, %arg7: memref<64x32xbf16, #tpu.memory_space<vmem>>, %arg8: memref<1x32xf32, #tpu.memory_space<vmem>>, %arg9: memref<10x32xbf16, #tpu.memory_space<vmem>>, %arg10: memref<10x32xbf16, #tpu.memory_space<vmem>>, %arg11: memref<10x32xf32, #tpu.memory_space<vmem>>) attributes {dimension_semantics = [#tpu.dimension_semantics<parallel>, #tpu.dimension_semantics<arbitrary>], iteration_bounds = array<i64: 1, 1>, scalar_prefetch = 0 : i64, scratch_operands = 2 : i64, tpu.core_type = #tpu.core_type<tc>, window_params = [{transform_indices = @transform_0, window_bounds = array<i64: 10, 32>}, {pipeline_mode = #tpu.pipeline_mode<synchronous>, transform_indices = @transform_1, window_bounds = array<i64: 1, 32>}, {pipeline_mode = #tpu.pipeline_mode<synchronous>, transform_indices = @transform_2, window_bounds = array<i64: 1, 32>}, {transform_indices = @transform_3, window_bounds = array<i64: 32, 64>}, {transform_indices = @transform_4, window_bounds = array<i64: 1, 64>}, {transform_indices = @transform_5, window_bounds = array<i64: 64, 32>}, {pipeline_mode = #tpu.pipeline_mode<synchronous>, transform_indices = @transform_6, window_bounds = array<i64: 1, 32>}, {transform_indices = @transform_7, window_bounds = array<i64: 10, 32>}]} {
    %c0_i32 = arith.constant 0 : i32
    %0 = arith.cmpi eq, %arg1, %c0_i32 : i32
    %1 = arith.extui %0 : i1 to i32
    %c0_i32_0 = arith.constant 0 : i32
    %2 = arith.cmpi ne, %1, %c0_i32_0 : i32
    scf.if %2 {
      %c0_19 = arith.constant 0 : index
      %c0_20 = arith.constant 0 : index
      %31 = vector.load %arg2[%c0_19, %c0_20] : memref<10x32xbf16, #tpu.memory_space<vmem>>, vector<10x32xbf16>
      %32 = arith.extf %31 : vector<10x32xbf16> to vector<10x32xf32>
      %cst_21 = arith.constant dense<0.000000e+00> : vector<10xf32>
      %33 = vector.multi_reduction <add>, %32, %cst_21 [1] : vector<10x32xf32> to vector<10xf32>
      %34 = vector.shape_cast %33 : vector<10xf32> to vector<10x1xf32>
      %cst_22 = arith.constant 3.200000e+01 : f32
      %35 = vector.broadcast %cst_22 : f32 to vector<10x1xf32>
      %36 = arith.divf %34, %35 : vector<10x1xf32>
      %37 = vector.broadcast %36 : vector<10x1xf32> to vector<10x32xf32>
      %38 = arith.subf %32, %37 : vector<10x32xf32>
      %39 = arith.mulf %38, %38 : vector<10x32xf32>
      %cst_23 = arith.constant dense<0.000000e+00> : vector<10xf32>
      %40 = vector.multi_reduction <add>, %39, %cst_23 [1] : vector<10x32xf32> to vector<10xf32>
      %41 = vector.shape_cast %40 : vector<10xf32> to vector<10x1xf32>
      %cst_24 = arith.constant 3.200000e+01 : f32
      %42 = vector.broadcast %cst_24 : f32 to vector<10x1xf32>
      %43 = arith.divf %41, %42 : vector<10x1xf32>
      %44 = vector.broadcast %36 : vector<10x1xf32> to vector<10x32xf32>
      %45 = arith.subf %32, %44 : vector<10x32xf32>
      %cst_25 = arith.constant 9.99999997E-7 : f32
      %46 = vector.broadcast %cst_25 : f32 to vector<10x1xf32>
      %47 = arith.addf %43, %46 : vector<10x1xf32>
      %48 = math.rsqrt %47 : vector<10x1xf32>
      %49 = vector.broadcast %48 : vector<10x1xf32> to vector<10x32xf32>
      %50 = arith.mulf %45, %49 : vector<10x32xf32>
      %c0_26 = arith.constant 0 : index
      %c0_27 = arith.constant 0 : index
      %51 = vector.load %arg3[%c0_26, %c0_27] : memref<1x32xf32, #tpu.memory_space<vmem>>, vector<1x32xf32>
      %52 = vector.broadcast %51 : vector<1x32xf32> to vector<10x32xf32>
      %53 = arith.mulf %50, %52 : vector<10x32xf32>
      %c0_28 = arith.constant 0 : index
      %c0_29 = arith.constant 0 : index
      %54 = vector.load %arg4[%c0_28, %c0_29] : memref<1x32xf32, #tpu.memory_space<vmem>>, vector<1x32xf32>
      %55 = vector.broadcast %54 : vector<1x32xf32> to vector<10x32xf32>
      %56 = arith.addf %53, %55 : vector<10x32xf32>
      %57 = arith.truncf %56 : vector<10x32xf32> to vector<10x32xbf16>
      %c0_30 = arith.constant 0 : index
      %c0_31 = arith.constant 0 : index
      %58 = vector.load %arg10[%c0_30, %c0_31] : memref<10x32xbf16, #tpu.memory_space<vmem>>, vector<10x32xbf16>
      tpu.vector_store %arg10[%c0_30, %c0_31], %57 {strides = array<i32>} : memref<10x32xbf16, #tpu.memory_space<vmem>>, vector<10x32xbf16>,
      %cst_32 = arith.constant 0.000000e+00 : f32
      %59 = vector.broadcast %cst_32 : f32 to vector<10x32xf32>
      %c0_33 = arith.constant 0 : index
      %c0_34 = arith.constant 0 : index
      %60 = vector.load %arg11[%c0_33, %c0_34] : memref<10x32xf32, #tpu.memory_space<vmem>>, vector<10x32xf32>
      tpu.vector_store %arg11[%c0_33, %c0_34], %59 {strides = array<i32>} : memref<10x32xf32, #tpu.memory_space<vmem>>, vector<10x32xf32>,
    } else {
    }
    %c0 = arith.constant 0 : index
    %c0_1 = arith.constant 0 : index
    %3 = vector.load %arg10[%c0, %c0_1] : memref<10x32xbf16, #tpu.memory_space<vmem>>, vector<10x32xbf16>
    %c0_2 = arith.constant 0 : index
    %c0_3 = arith.constant 0 : index
    %4 = vector.load %arg5[%c0_2, %c0_3] : memref<32x64xbf16, #tpu.memory_space<vmem>>, vector<32x64xbf16>
    %cst = arith.constant dense<0.000000e+00> : vector<10x64xf32>
    %5 = tpu.matmul %3, %4, %cst {dimension_numbers = #tpu.dot_dimension_numbers<[1], [0], [0], [1], [0, 0, 1, 1], [], []>} : vector<10x32xbf16>, vector<32x64xbf16>, vector<10x64xf32> -> vector<10x64xf32>
    %c0_4 = arith.constant 0 : index
    %c0_5 = arith.constant 0 : index
    %6 = vector.load %arg6[%c0_4, %c0_5] : memref<1x64xf32, #tpu.memory_space<vmem>>, vector<1x64xf32>
    %7 = vector.broadcast %6 : vector<1x64xf32> to vector<10x64xf32>
    %8 = arith.addf %5, %7 : vector<10x64xf32>
    %cst_6 = arith.constant 5.000000e-01 : f32
    %9 = vector.broadcast %cst_6 : f32 to vector<10x64xf32>
    %10 = arith.mulf %9, %8 : vector<10x64xf32>
    %11 = arith.mulf %8, %8 : vector<10x64xf32>
    %12 = arith.mulf %11, %8 : vector<10x64xf32>
    %cst_7 = arith.constant 4.471500e-02 : f32
    %13 = vector.broadcast %cst_7 : f32 to vector<10x64xf32>
    %14 = arith.mulf %13, %12 : vector<10x64xf32>
    %15 = arith.addf %8, %14 : vector<10x64xf32>
    %cst_8 = arith.constant 0.797884583 : f32
    %16 = vector.broadcast %cst_8 : f32 to vector<10x64xf32>
    %17 = arith.mulf %16, %15 : vector<10x64xf32>
    %18 = math.tanh %17 : vector<10x64xf32>
    %cst_9 = arith.constant 1.000000e+00 : f32
    %19 = vector.broadcast %cst_9 : f32 to vector<10x64xf32>
    %20 = arith.addf %19, %18 : vector<10x64xf32>
    %21 = arith.mulf %10, %20 : vector<10x64xf32>
    %c0_10 = arith.constant 0 : index
    %c0_11 = arith.constant 0 : index
    %22 = vector.load %arg11[%c0_10, %c0_11] : memref<10x32xf32, #tpu.memory_space<vmem>>, vector<10x32xf32>
    %23 = arith.truncf %21 : vector<10x64xf32> to vector<10x64xbf16>
    %c0_12 = arith.constant 0 : index
    %c0_13 = arith.constant 0 : index
    %24 = vector.load %arg7[%c0_12, %c0_13] : memref<64x32xbf16, #tpu.memory_space<vmem>>, vector<64x32xbf16>
    %cst_14 = arith.constant dense<0.000000e+00> : vector<10x32xf32>
    %25 = tpu.matmul %23, %24, %cst_14 {dimension_numbers = #tpu.dot_dimension_numbers<[1], [0], [0], [1], [0, 0, 1, 1], [], []>} : vector<10x64xbf16>, vector<64x32xbf16>, vector<10x32xf32> -> vector<10x32xf32>
    %26 = arith.addf %22, %25 : vector<10x32xf32>
    %c0_15 = arith.constant 0 : index
    %c0_16 = arith.constant 0 : index
    %27 = vector.load %arg11[%c0_15, %c0_16] : memref<10x32xf32, #tpu.memory_space<vmem>>, vector<10x32xf32>
    tpu.vector_store %arg11[%c0_15, %c0_16], %26 {strides = array<i32>} : memref<10x32xf32, #tpu.memory_space<vmem>>, vector<10x32xf32>,
    %c0_i32_17 = arith.constant 0 : i32
    %28 = arith.cmpi eq, %arg1, %c0_i32_17 : i32
    %29 = arith.extui %28 : i1 to i32
    %c0_i32_18 = arith.constant 0 : i32
    %30 = arith.cmpi ne, %29, %c0_i32_18 : i32
    scf.if %30 {
      %c0_19 = arith.constant 0 : index
      %c0_20 = arith.constant 0 : index
      %31 = vector.load %arg2[%c0_19, %c0_20] : memref<10x32xbf16, #tpu.memory_space<vmem>>, vector<10x32xbf16>
      %32 = arith.extf %31 : vector<10x32xbf16> to vector<10x32xf32>
      %c0_21 = arith.constant 0 : index
      %c0_22 = arith.constant 0 : index
      %33 = vector.load %arg11[%c0_21, %c0_22] : memref<10x32xf32, #tpu.memory_space<vmem>>, vector<10x32xf32>
      %34 = arith.addf %32, %33 : vector<10x32xf32>
      %c0_23 = arith.constant 0 : index
      %c0_24 = arith.constant 0 : index
      %35 = vector.load %arg8[%c0_23, %c0_24] : memref<1x32xf32, #tpu.memory_space<vmem>>, vector<1x32xf32>
      %36 = vector.broadcast %35 : vector<1x32xf32> to vector<10x32xf32>
      %37 = arith.addf %34, %36 : vector<10x32xf32>
      %38 = arith.truncf %37 : vector<10x32xf32> to vector<10x32xbf16>
      %c0_25 = arith.constant 0 : index
      %c0_26 = arith.constant 0 : index
      %39 = vector.load %arg9[%c0_25, %c0_26] : memref<10x32xbf16, #tpu.memory_space<vmem>>, vector<10x32xbf16>
      tpu.vector_store %arg9[%c0_25, %c0_26], %38 {strides = array<i32>} : memref<10x32xbf16, #tpu.memory_space<vmem>>, vector<10x32xbf16>,
    } else {
    }
    return
  }
  func.func @transform_0(%arg0: i32, %arg1: i32) -> (i32, i32) {
    %c0_i32 = arith.constant 0 : i32
    %c0_i32_0 = arith.constant 0 : i32
    return %arg0, %c0_i32 : i32, i32
  }
  func.func @transform_1(%arg0: i32, %arg1: i32) -> (i32, i32) {
    %c0_i32 = arith.constant 0 : i32
    %c0_i32_0 = arith.constant 0 : i32
    %c0_i32_1 = arith.constant 0 : i32
    return %c0_i32, %c0_i32_0 : i32, i32
  }
  func.func @transform_2(%arg0: i32, %arg1: i32) -> (i32, i32) {
    %c0_i32 = arith.constant 0 : i32
    %c0_i32_0 = arith.constant 0 : i32
    %c0_i32_1 = arith.constant 0 : i32
    return %c0_i32, %c0_i32_0 : i32, i32
  }
  func.func @transform_3(%arg0: i32, %arg1: i32) -> (i32, i32) {
    %c0_i32 = arith.constant 0 : i32
    %c0_i32_0 = arith.constant 0 : i32
    return %c0_i32, %arg1 : i32, i32
  }
  func.func @transform_4(%arg0: i32, %arg1: i32) -> (i32, i32) {
    %c0_i32 = arith.constant 0 : i32
    %c0_i32_0 = arith.constant 0 : i32
    return %c0_i32, %arg1 : i32, i32
  }
  func.func @transform_5(%arg0: i32, %arg1: i32) -> (i32, i32) {
    %c0_i32 = arith.constant 0 : i32
    %c0_i32_0 = arith.constant 0 : i32
    return %arg1, %c0_i32 : i32, i32
  }
  func.func @transform_6(%arg0: i32, %arg1: i32) -> (i32, i32) {
    %c0_i32 = arith.constant 0 : i32
    %c0_i32_0 = arith.constant 0 : i32
    %c0_i32_1 = arith.constant 0 : i32
    return %c0_i32, %c0_i32_0 : i32, i32
  }
  func.func @transform_7(%arg0: i32, %arg1: i32) -> (i32, i32) {
    %c0_i32 = arith.constant 0 : i32
    %c0_i32_0 = arith.constant 0 : i32
    return %arg0, %c0_i32 : i32, i32
  }
}

module attributes {stable_mosaic.version = 11 : i64} {
  func.func @_attn_kernel(%arg0: i32, %arg1: memref<1x2x96xbf16, #tpu.memory_space<vmem>>, %arg2: memref<1x2x32xbf16, #tpu.memory_space<vmem>>) attributes {dimension_semantics = [#tpu.dimension_semantics<parallel>], iteration_bounds = array<i64: 4>, scalar_prefetch = 0 : i64, scratch_operands = 0 : i64, tpu.core_type = #tpu.core_type<tc>, window_params = [{transform_indices = @transform_0, window_bounds = array<i64: 1, 2, 96>}, {transform_indices = @transform_1, window_bounds = array<i64: 1, 2, 32>}]} {
    %c0 = arith.constant 0 : index
    %c0_0 = arith.constant 0 : index
    %c0_1 = arith.constant 0 : index
    %0 = vector.load %arg1[%c0, %c0_0, %c0_1] : memref<1x2x96xbf16, #tpu.memory_space<vmem>>, vector<1x2x8xbf16>
    %1 = vector.shape_cast %0 : vector<1x2x8xbf16> to vector<2x8xbf16>
    %2 = arith.extf %1 : vector<2x8xbf16> to vector<2x8xf32>
    %cst = arith.constant 0.353553385 : f32
    %3 = vector.broadcast %cst : f32 to vector<2x8xf32>
    %4 = arith.mulf %2, %3 : vector<2x8xf32>
    %5 = arith.truncf %4 : vector<2x8xf32> to vector<2x8xbf16>
    %c0_2 = arith.constant 0 : index
    %c0_3 = arith.constant 0 : index
    %c32 = arith.constant 32 : index
    %6 = vector.load %arg1[%c0_2, %c0_3, %c32] : memref<1x2x96xbf16, #tpu.memory_space<vmem>>, vector<1x2x8xbf16>
    %7 = vector.shape_cast %6 : vector<1x2x8xbf16> to vector<2x8xbf16>
    %c0_4 = arith.constant 0 : index
    %c0_5 = arith.constant 0 : index
    %c64 = arith.constant 64 : index
    %8 = vector.load %arg1[%c0_4, %c0_5, %c64] : memref<1x2x96xbf16, #tpu.memory_space<vmem>>, vector<1x2x8xbf16>
    %9 = vector.shape_cast %8 : vector<1x2x8xbf16> to vector<2x8xbf16>
    "tpu.trace_start"() <{level = 10 : i32, message = "qd,kd->qk"}> : () -> ()
    %cst_6 = arith.constant dense<0.000000e+00> : vector<2x2xf32>
    %10 = tpu.matmul %5, %7, %cst_6 {dimension_numbers = #tpu.dot_dimension_numbers<[1], [1], [0], [0], [0, 0, 1, 0], [], []>} : vector<2x8xbf16>, vector<2x8xbf16>, vector<2x2xf32> -> vector<2x2xf32>
    "tpu.trace_stop"() : () -> ()
    %cst_7 = arith.constant dense<0xFF800000> : vector<2xf32>
    %11 = vector.multi_reduction <maximumf>, %10, %cst_7 [1] : vector<2x2xf32> to vector<2xf32>
    %12 = vector.shape_cast %11 : vector<2xf32> to vector<2x1xf32>
    %13 = vector.broadcast %12 : vector<2x1xf32> to vector<2x2xf32>
    %14 = arith.subf %10, %13 : vector<2x2xf32>
    %15 = math.exp %14 : vector<2x2xf32>
    %cst_8 = arith.constant dense<0.000000e+00> : vector<2xf32>
    %16 = vector.multi_reduction <add>, %15, %cst_8 [1] : vector<2x2xf32> to vector<2xf32>
    %17 = vector.shape_cast %16 : vector<2xf32> to vector<2x1xf32>
    %18 = tpu.reciprocal %17 {approx = true} : vector<2x1xf32> -> vector<2x1xf32>
    %19 = vector.broadcast %18 : vector<2x1xf32> to vector<2x2xf32>
    %20 = arith.mulf %15, %19 : vector<2x2xf32>
    %21 = arith.truncf %20 : vector<2x2xf32> to vector<2x2xbf16>
    %cst_9 = arith.constant dense<0.000000e+00> : vector<2x8xf32>
    %22 = tpu.matmul %21, %9, %cst_9 {dimension_numbers = #tpu.dot_dimension_numbers<[1], [0], [0], [1], [0, 0, 1, 1], [], []>} : vector<2x2xbf16>, vector<2x8xbf16>, vector<2x8xf32> -> vector<2x8xf32>
    %23 = arith.truncf %22 : vector<2x8xf32> to vector<2x8xbf16>
    %c0_10 = arith.constant 0 : index
    %c0_11 = arith.constant 0 : index
    %c0_12 = arith.constant 0 : index
    %24 = vector.load %arg2[%c0_10, %c0_11, %c0_12] : memref<1x2x32xbf16, #tpu.memory_space<vmem>>, vector<1x2x8xbf16>
    %25 = vector.shape_cast %24 : vector<1x2x8xbf16> to vector<2x8xbf16>
    %26 = vector.shape_cast %23 : vector<2x8xbf16> to vector<1x2x8xbf16>
    tpu.vector_store %arg2[%c0_10, %c0_11, %c0_12], %26 {strides = array<i32>} : memref<1x2x32xbf16, #tpu.memory_space<vmem>>, vector<1x2x8xbf16>,
    %c0_13 = arith.constant 0 : index
    %c0_14 = arith.constant 0 : index
    %c8 = arith.constant 8 : index
    %27 = vector.load %arg1[%c0_13, %c0_14, %c8] : memref<1x2x96xbf16, #tpu.memory_space<vmem>>, vector<1x2x8xbf16>
    %28 = vector.shape_cast %27 : vector<1x2x8xbf16> to vector<2x8xbf16>
    %29 = arith.extf %28 : vector<2x8xbf16> to vector<2x8xf32>
    %cst_15 = arith.constant 0.353553385 : f32
    %30 = vector.broadcast %cst_15 : f32 to vector<2x8xf32>
    %31 = arith.mulf %29, %30 : vector<2x8xf32>
    %32 = arith.truncf %31 : vector<2x8xf32> to vector<2x8xbf16>
    %c0_16 = arith.constant 0 : index
    %c0_17 = arith.constant 0 : index
    %c40 = arith.constant 40 : index
    %33 = vector.load %arg1[%c0_16, %c0_17, %c40] : memref<1x2x96xbf16, #tpu.memory_space<vmem>>, vector<1x2x8xbf16>
    %34 = vector.shape_cast %33 : vector<1x2x8xbf16> to vector<2x8xbf16>
    %c0_18 = arith.constant 0 : index
    %c0_19 = arith.constant 0 : index
    %c72 = arith.constant 72 : index
    %35 = vector.load %arg1[%c0_18, %c0_19, %c72] : memref<1x2x96xbf16, #tpu.memory_space<vmem>>, vector<1x2x8xbf16>
    %36 = vector.shape_cast %35 : vector<1x2x8xbf16> to vector<2x8xbf16>
    "tpu.trace_start"() <{level = 10 : i32, message = "qd,kd->qk"}> : () -> ()
    %cst_20 = arith.constant dense<0.000000e+00> : vector<2x2xf32>
    %37 = tpu.matmul %32, %34, %cst_20 {dimension_numbers = #tpu.dot_dimension_numbers<[1], [1], [0], [0], [0, 0, 1, 0], [], []>} : vector<2x8xbf16>, vector<2x8xbf16>, vector<2x2xf32> -> vector<2x2xf32>
    "tpu.trace_stop"() : () -> ()
    %cst_21 = arith.constant dense<0xFF800000> : vector<2xf32>
    %38 = vector.multi_reduction <maximumf>, %37, %cst_21 [1] : vector<2x2xf32> to vector<2xf32>
    %39 = vector.shape_cast %38 : vector<2xf32> to vector<2x1xf32>
    %40 = vector.broadcast %39 : vector<2x1xf32> to vector<2x2xf32>
    %41 = arith.subf %37, %40 : vector<2x2xf32>
    %42 = math.exp %41 : vector<2x2xf32>
    %cst_22 = arith.constant dense<0.000000e+00> : vector<2xf32>
    %43 = vector.multi_reduction <add>, %42, %cst_22 [1] : vector<2x2xf32> to vector<2xf32>
    %44 = vector.shape_cast %43 : vector<2xf32> to vector<2x1xf32>
    %45 = tpu.reciprocal %44 {approx = true} : vector<2x1xf32> -> vector<2x1xf32>
    %46 = vector.broadcast %45 : vector<2x1xf32> to vector<2x2xf32>
    %47 = arith.mulf %42, %46 : vector<2x2xf32>
    %48 = arith.truncf %47 : vector<2x2xf32> to vector<2x2xbf16>
    %cst_23 = arith.constant dense<0.000000e+00> : vector<2x8xf32>
    %49 = tpu.matmul %48, %36, %cst_23 {dimension_numbers = #tpu.dot_dimension_numbers<[1], [0], [0], [1], [0, 0, 1, 1], [], []>} : vector<2x2xbf16>, vector<2x8xbf16>, vector<2x8xf32> -> vector<2x8xf32>
    %50 = arith.truncf %49 : vector<2x8xf32> to vector<2x8xbf16>
    %c0_24 = arith.constant 0 : index
    %c0_25 = arith.constant 0 : index
    %c8_26 = arith.constant 8 : index
    %51 = vector.load %arg2[%c0_24, %c0_25, %c8_26] : memref<1x2x32xbf16, #tpu.memory_space<vmem>>, vector<1x2x8xbf16>
    %52 = vector.shape_cast %51 : vector<1x2x8xbf16> to vector<2x8xbf16>
    %53 = vector.shape_cast %50 : vector<2x8xbf16> to vector<1x2x8xbf16>
    tpu.vector_store %arg2[%c0_24, %c0_25, %c8_26], %53 {strides = array<i32>} : memref<1x2x32xbf16, #tpu.memory_space<vmem>>, vector<1x2x8xbf16>,
    %c0_27 = arith.constant 0 : index
    %c0_28 = arith.constant 0 : index
    %c16 = arith.constant 16 : index
    %54 = vector.load %arg1[%c0_27, %c0_28, %c16] : memref<1x2x96xbf16, #tpu.memory_space<vmem>>, vector<1x2x8xbf16>
    %55 = vector.shape_cast %54 : vector<1x2x8xbf16> to vector<2x8xbf16>
    %56 = arith.extf %55 : vector<2x8xbf16> to vector<2x8xf32>
    %cst_29 = arith.constant 0.353553385 : f32
    %57 = vector.broadcast %cst_29 : f32 to vector<2x8xf32>
    %58 = arith.mulf %56, %57 : vector<2x8xf32>
    %59 = arith.truncf %58 : vector<2x8xf32> to vector<2x8xbf16>
    %c0_30 = arith.constant 0 : index
    %c0_31 = arith.constant 0 : index
    %c48 = arith.constant 48 : index
    %60 = vector.load %arg1[%c0_30, %c0_31, %c48] : memref<1x2x96xbf16, #tpu.memory_space<vmem>>, vector<1x2x8xbf16>
    %61 = vector.shape_cast %60 : vector<1x2x8xbf16> to vector<2x8xbf16>
    %c0_32 = arith.constant 0 : index
    %c0_33 = arith.constant 0 : index
    %c80 = arith.constant 80 : index
    %62 = vector.load %arg1[%c0_32, %c0_33, %c80] : memref<1x2x96xbf16, #tpu.memory_space<vmem>>, vector<1x2x8xbf16>
    %63 = vector.shape_cast %62 : vector<1x2x8xbf16> to vector<2x8xbf16>
    "tpu.trace_start"() <{level = 10 : i32, message = "qd,kd->qk"}> : () -> ()
    %cst_34 = arith.constant dense<0.000000e+00> : vector<2x2xf32>
    %64 = tpu.matmul %59, %61, %cst_34 {dimension_numbers = #tpu.dot_dimension_numbers<[1], [1], [0], [0], [0, 0, 1, 0], [], []>} : vector<2x8xbf16>, vector<2x8xbf16>, vector<2x2xf32> -> vector<2x2xf32>
    "tpu.trace_stop"() : () -> ()
    %cst_35 = arith.constant dense<0xFF800000> : vector<2xf32>
    %65 = vector.multi_reduction <maximumf>, %64, %cst_35 [1] : vector<2x2xf32> to vector<2xf32>
    %66 = vector.shape_cast %65 : vector<2xf32> to vector<2x1xf32>
    %67 = vector.broadcast %66 : vector<2x1xf32> to vector<2x2xf32>
    %68 = arith.subf %64, %67 : vector<2x2xf32>
    %69 = math.exp %68 : vector<2x2xf32>
    %cst_36 = arith.constant dense<0.000000e+00> : vector<2xf32>
    %70 = vector.multi_reduction <add>, %69, %cst_36 [1] : vector<2x2xf32> to vector<2xf32>
    %71 = vector.shape_cast %70 : vector<2xf32> to vector<2x1xf32>
    %72 = tpu.reciprocal %71 {approx = true} : vector<2x1xf32> -> vector<2x1xf32>
    %73 = vector.broadcast %72 : vector<2x1xf32> to vector<2x2xf32>
    %74 = arith.mulf %69, %73 : vector<2x2xf32>
    %75 = arith.truncf %74 : vector<2x2xf32> to vector<2x2xbf16>
    %cst_37 = arith.constant dense<0.000000e+00> : vector<2x8xf32>
    %76 = tpu.matmul %75, %63, %cst_37 {dimension_numbers = #tpu.dot_dimension_numbers<[1], [0], [0], [1], [0, 0, 1, 1], [], []>} : vector<2x2xbf16>, vector<2x8xbf16>, vector<2x8xf32> -> vector<2x8xf32>
    %77 = arith.truncf %76 : vector<2x8xf32> to vector<2x8xbf16>
    %c0_38 = arith.constant 0 : index
    %c0_39 = arith.constant 0 : index
    %c16_40 = arith.constant 16 : index
    %78 = vector.load %arg2[%c0_38, %c0_39, %c16_40] : memref<1x2x32xbf16, #tpu.memory_space<vmem>>, vector<1x2x8xbf16>
    %79 = vector.shape_cast %78 : vector<1x2x8xbf16> to vector<2x8xbf16>
    %80 = vector.shape_cast %77 : vector<2x8xbf16> to vector<1x2x8xbf16>
    tpu.vector_store %arg2[%c0_38, %c0_39, %c16_40], %80 {strides = array<i32>} : memref<1x2x32xbf16, #tpu.memory_space<vmem>>, vector<1x2x8xbf16>,
    %c0_41 = arith.constant 0 : index
    %c0_42 = arith.constant 0 : index
    %c24 = arith.constant 24 : index
    %81 = vector.load %arg1[%c0_41, %c0_42, %c24] : memref<1x2x96xbf16, #tpu.memory_space<vmem>>, vector<1x2x8xbf16>
    %82 = vector.shape_cast %81 : vector<1x2x8xbf16> to vector<2x8xbf16>
    %83 = arith.extf %82 : vector<2x8xbf16> to vector<2x8xf32>
    %cst_43 = arith.constant 0.353553385 : f32
    %84 = vector.broadcast %cst_43 : f32 to vector<2x8xf32>
    %85 = arith.mulf %83, %84 : vector<2x8xf32>
    %86 = arith.truncf %85 : vector<2x8xf32> to vector<2x8xbf16>
    %c0_44 = arith.constant 0 : index
    %c0_45 = arith.constant 0 : index
    %c56 = arith.constant 56 : index
    %87 = vector.load %arg1[%c0_44, %c0_45, %c56] : memref<1x2x96xbf16, #tpu.memory_space<vmem>>, vector<1x2x8xbf16>
    %88 = vector.shape_cast %87 : vector<1x2x8xbf16> to vector<2x8xbf16>
    %c0_46 = arith.constant 0 : index
    %c0_47 = arith.constant 0 : index
    %c88 = arith.constant 88 : index
    %89 = vector.load %arg1[%c0_46, %c0_47, %c88] : memref<1x2x96xbf16, #tpu.memory_space<vmem>>, vector<1x2x8xbf16>
    %90 = vector.shape_cast %89 : vector<1x2x8xbf16> to vector<2x8xbf16>
    "tpu.trace_start"() <{level = 10 : i32, message = "qd,kd->qk"}> : () -> ()
    %cst_48 = arith.constant dense<0.000000e+00> : vector<2x2xf32>
    %91 = tpu.matmul %86, %88, %cst_48 {dimension_numbers = #tpu.dot_dimension_numbers<[1], [1], [0], [0], [0, 0, 1, 0], [], []>} : vector<2x8xbf16>, vector<2x8xbf16>, vector<2x2xf32> -> vector<2x2xf32>
    "tpu.trace_stop"() : () -> ()
    %cst_49 = arith.constant dense<0xFF800000> : vector<2xf32>
    %92 = vector.multi_reduction <maximumf>, %91, %cst_49 [1] : vector<2x2xf32> to vector<2xf32>
    %93 = vector.shape_cast %92 : vector<2xf32> to vector<2x1xf32>
    %94 = vector.broadcast %93 : vector<2x1xf32> to vector<2x2xf32>
    %95 = arith.subf %91, %94 : vector<2x2xf32>
    %96 = math.exp %95 : vector<2x2xf32>
    %cst_50 = arith.constant dense<0.000000e+00> : vector<2xf32>
    %97 = vector.multi_reduction <add>, %96, %cst_50 [1] : vector<2x2xf32> to vector<2xf32>
    %98 = vector.shape_cast %97 : vector<2xf32> to vector<2x1xf32>
    %99 = tpu.reciprocal %98 {approx = true} : vector<2x1xf32> -> vector<2x1xf32>
    %100 = vector.broadcast %99 : vector<2x1xf32> to vector<2x2xf32>
    %101 = arith.mulf %96, %100 : vector<2x2xf32>
    %102 = arith.truncf %101 : vector<2x2xf32> to vector<2x2xbf16>
    %cst_51 = arith.constant dense<0.000000e+00> : vector<2x8xf32>
    %103 = tpu.matmul %102, %90, %cst_51 {dimension_numbers = #tpu.dot_dimension_numbers<[1], [0], [0], [1], [0, 0, 1, 1], [], []>} : vector<2x2xbf16>, vector<2x8xbf16>, vector<2x8xf32> -> vector<2x8xf32>
    %104 = arith.truncf %103 : vector<2x8xf32> to vector<2x8xbf16>
    %c0_52 = arith.constant 0 : index
    %c0_53 = arith.constant 0 : index
    %c24_54 = arith.constant 24 : index
    %105 = vector.load %arg2[%c0_52, %c0_53, %c24_54] : memref<1x2x32xbf16, #tpu.memory_space<vmem>>, vector<1x2x8xbf16>
    %106 = vector.shape_cast %105 : vector<1x2x8xbf16> to vector<2x8xbf16>
    %107 = vector.shape_cast %104 : vector<2x8xbf16> to vector<1x2x8xbf16>
    tpu.vector_store %arg2[%c0_52, %c0_53, %c24_54], %107 {strides = array<i32>} : memref<1x2x32xbf16, #tpu.memory_space<vmem>>, vector<1x2x8xbf16>,
    return
  }
  func.func @transform_0(%arg0: i32) -> (i32, i32, i32) {
    %c0_i32 = arith.constant 0 : i32
    %c0_i32_0 = arith.constant 0 : i32
    %c0_i32_1 = arith.constant 0 : i32
    return %arg0, %c0_i32, %c0_i32_0 : i32, i32, i32
  }
  func.func @transform_1(%arg0: i32) -> (i32, i32, i32) {
    %c0_i32 = arith.constant 0 : i32
    %c0_i32_0 = arith.constant 0 : i32
    %c0_i32_1 = arith.constant 0 : i32
    return %arg0, %c0_i32, %c0_i32_0 : i32, i32, i32
  }
}

module attributes {stable_mosaic.version = 11 : i64} {
  func.func @_ln_linear_kernel(%arg0: i32, %arg1: memref<8x32xbf16, #tpu.memory_space<vmem>>, %arg2: memref<1x32xf32, #tpu.memory_space<vmem>>, %arg3: memref<1x32xf32, #tpu.memory_space<vmem>>, %arg4: memref<32x96xbf16, #tpu.memory_space<vmem>>, %arg5: memref<1x96xf32, #tpu.memory_space<vmem>>, %arg6: memref<8x96xbf16, #tpu.memory_space<vmem>>) attributes {dimension_semantics = [#tpu.dimension_semantics<parallel>], iteration_bounds = array<i64: 1>, scalar_prefetch = 0 : i64, scratch_operands = 0 : i64, tpu.core_type = #tpu.core_type<tc>, window_params = [{transform_indices = @transform_0, window_bounds = array<i64: 8, 32>}, {pipeline_mode = #tpu.pipeline_mode<synchronous>, transform_indices = @transform_1, window_bounds = array<i64: 1, 32>}, {pipeline_mode = #tpu.pipeline_mode<synchronous>, transform_indices = @transform_2, window_bounds = array<i64: 1, 32>}, {pipeline_mode = #tpu.pipeline_mode<synchronous>, transform_indices = @transform_3, window_bounds = array<i64: 32, 96>}, {pipeline_mode = #tpu.pipeline_mode<synchronous>, transform_indices = @transform_4, window_bounds = array<i64: 1, 96>}, {transform_indices = @transform_5, window_bounds = array<i64: 8, 96>}]} {
    %c0 = arith.constant 0 : index
    %c0_0 = arith.constant 0 : index
    %0 = vector.load %arg1[%c0, %c0_0] : memref<8x32xbf16, #tpu.memory_space<vmem>>, vector<8x32xbf16>
    %1 = arith.extf %0 : vector<8x32xbf16> to vector<8x32xf32>
    %cst = arith.constant dense<0.000000e+00> : vector<8xf32>
    %2 = vector.multi_reduction <add>, %1, %cst [1] : vector<8x32xf32> to vector<8xf32>
    %3 = vector.shape_cast %2 : vector<8xf32> to vector<8x1xf32>
    %cst_1 = arith.constant 3.200000e+01 : f32
    %4 = vector.broadcast %cst_1 : f32 to vector<8x1xf32>
    %5 = arith.divf %3, %4 : vector<8x1xf32>
    %6 = vector.broadcast %5 : vector<8x1xf32> to vector<8x32xf32>
    %7 = arith.subf %1, %6 : vector<8x32xf32>
    %8 = arith.mulf %7, %7 : vector<8x32xf32>
    %cst_2 = arith.constant dense<0.000000e+00> : vector<8xf32>
    %9 = vector.multi_reduction <add>, %8, %cst_2 [1] : vector<8x32xf32> to vector<8xf32>
    %10 = vector.shape_cast %9 : vector<8xf32> to vector<8x1xf32>
    %cst_3 = arith.constant 3.200000e+01 : f32
    %11 = vector.broadcast %cst_3 : f32 to vector<8x1xf32>
    %12 = arith.divf %10, %11 : vector<8x1xf32>
    %13 = vector.broadcast %5 : vector<8x1xf32> to vector<8x32xf32>
    %14 = arith.subf %1, %13 : vector<8x32xf32>
    %cst_4 = arith.constant 9.99999974E-6 : f32
    %15 = vector.broadcast %cst_4 : f32 to vector<8x1xf32>
    %16 = arith.addf %12, %15 : vector<8x1xf32>
    %17 = math.rsqrt %16 : vector<8x1xf32>
    %18 = vector.broadcast %17 : vector<8x1xf32> to vector<8x32xf32>
    %19 = arith.mulf %14, %18 : vector<8x32xf32>
    %c0_5 = arith.constant 0 : index
    %c0_6 = arith.constant 0 : index
    %20 = vector.load %arg2[%c0_5, %c0_6] : memref<1x32xf32, #tpu.memory_space<vmem>>, vector<1x32xf32>
    %21 = vector.broadcast %20 : vector<1x32xf32> to vector<8x32xf32>
    %22 = arith.mulf %19, %21 : vector<8x32xf32>
    %c0_7 = arith.constant 0 : index
    %c0_8 = arith.constant 0 : index
    %23 = vector.load %arg3[%c0_7, %c0_8] : memref<1x32xf32, #tpu.memory_space<vmem>>, vector<1x32xf32>
    %24 = vector.broadcast %23 : vector<1x32xf32> to vector<8x32xf32>
    %25 = arith.addf %22, %24 : vector<8x32xf32>
    %26 = arith.truncf %25 : vector<8x32xf32> to vector<8x32xbf16>
    %c0_9 = arith.constant 0 : index
    %c0_10 = arith.constant 0 : index
    %27 = vector.load %arg4[%c0_9, %c0_10] : memref<32x96xbf16, #tpu.memory_space<vmem>>, vector<32x96xbf16>
    %cst_11 = arith.constant dense<0.000000e+00> : vector<8x96xf32>
    %28 = tpu.matmul %26, %27, %cst_11 {dimension_numbers = #tpu.dot_dimension_numbers<[1], [0], [0], [1], [0, 0, 1, 1], [], []>} : vector<8x32xbf16>, vector<32x96xbf16>, vector<8x96xf32> -> vector<8x96xf32>
    %c0_12 = arith.constant 0 : index
    %c0_13 = arith.constant 0 : index
    %29 = vector.load %arg5[%c0_12, %c0_13] : memref<1x96xf32, #tpu.memory_space<vmem>>, vector<1x96xf32>
    %30 = vector.broadcast %29 : vector<1x96xf32> to vector<8x96xf32>
    %31 = arith.addf %28, %30 : vector<8x96xf32>
    %32 = arith.truncf %31 : vector<8x96xf32> to vector<8x96xbf16>
    %c0_14 = arith.constant 0 : index
    %c0_15 = arith.constant 0 : index
    %33 = vector.load %arg6[%c0_14, %c0_15] : memref<8x96xbf16, #tpu.memory_space<vmem>>, vector<8x96xbf16>
    tpu.vector_store %arg6[%c0_14, %c0_15], %32 {strides = array<i32>} : memref<8x96xbf16, #tpu.memory_space<vmem>>, vector<8x96xbf16>,
    return
  }
  func.func @transform_0(%arg0: i32) -> (i32, i32) {
    %c0_i32 = arith.constant 0 : i32
    %c0_i32_0 = arith.constant 0 : i32
    return %arg0, %c0_i32 : i32, i32
  }
  func.func @transform_1(%arg0: i32) -> (i32, i32) {
    %c0_i32 = arith.constant 0 : i32
    %c0_i32_0 = arith.constant 0 : i32
    %c0_i32_1 = arith.constant 0 : i32
    return %c0_i32, %c0_i32_0 : i32, i32
  }
  func.func @transform_2(%arg0: i32) -> (i32, i32) {
    %c0_i32 = arith.constant 0 : i32
    %c0_i32_0 = arith.constant 0 : i32
    %c0_i32_1 = arith.constant 0 : i32
    return %c0_i32, %c0_i32_0 : i32, i32
  }
  func.func @transform_3(%arg0: i32) -> (i32, i32) {
    %c0_i32 = arith.constant 0 : i32
    %c0_i32_0 = arith.constant 0 : i32
    %c0_i32_1 = arith.constant 0 : i32
    return %c0_i32, %c0_i32_0 : i32, i32
  }
  func.func @transform_4(%arg0: i32) -> (i32, i32) {
    %c0_i32 = arith.constant 0 : i32
    %c0_i32_0 = arith.constant 0 : i32
    %c0_i32_1 = arith.constant 0 : i32
    return %c0_i32, %c0_i32_0 : i32, i32
  }
  func.func @transform_5(%arg0: i32) -> (i32, i32) {
    %c0_i32 = arith.constant 0 : i32
    %c0_i32_0 = arith.constant 0 : i32
    return %arg0, %c0_i32 : i32, i32
  }
}

module attributes {stable_mosaic.version = 11 : i64} {
  func.func @_linear_kernel(%arg0: i32, %arg1: memref<8x32xbf16, #tpu.memory_space<vmem>>, %arg2: memref<32x32xbf16, #tpu.memory_space<vmem>>, %arg3: memref<1x32xf32, #tpu.memory_space<vmem>>, %arg4: memref<8x32xbf16, #tpu.memory_space<vmem>>) attributes {dimension_semantics = [#tpu.dimension_semantics<parallel>], iteration_bounds = array<i64: 1>, scalar_prefetch = 0 : i64, scratch_operands = 0 : i64, tpu.core_type = #tpu.core_type<tc>, window_params = [{transform_indices = @transform_0, window_bounds = array<i64: 8, 32>}, {pipeline_mode = #tpu.pipeline_mode<synchronous>, transform_indices = @transform_1, window_bounds = array<i64: 32, 32>}, {pipeline_mode = #tpu.pipeline_mode<synchronous>, transform_indices = @transform_2, window_bounds = array<i64: 1, 32>}, {transform_indices = @transform_3, window_bounds = array<i64: 8, 32>}]} {
    %c0 = arith.constant 0 : index
    %c0_0 = arith.constant 0 : index
    %0 = vector.load %arg1[%c0, %c0_0] : memref<8x32xbf16, #tpu.memory_space<vmem>>, vector<8x32xbf16>
    %c0_1 = arith.constant 0 : index
    %c0_2 = arith.constant 0 : index
    %1 = vector.load %arg2[%c0_1, %c0_2] : memref<32x32xbf16, #tpu.memory_space<vmem>>, vector<32x32xbf16>
    %cst = arith.constant dense<0.000000e+00> : vector<8x32xf32>
    %2 = tpu.matmul %0, %1, %cst {dimension_numbers = #tpu.dot_dimension_numbers<[1], [0], [0], [1], [0, 0, 1, 1], [], []>} : vector<8x32xbf16>, vector<32x32xbf16>, vector<8x32xf32> -> vector<8x32xf32>
    %c0_3 = arith.constant 0 : index
    %c0_4 = arith.constant 0 : index
    %3 = vector.load %arg3[%c0_3, %c0_4] : memref<1x32xf32, #tpu.memory_space<vmem>>, vector<1x32xf32>
    %4 = vector.broadcast %3 : vector<1x32xf32> to vector<8x32xf32>
    %5 = arith.addf %2, %4 : vector<8x32xf32>
    %6 = arith.truncf %5 : vector<8x32xf32> to vector<8x32xbf16>
    %c0_5 = arith.constant 0 : index
    %c0_6 = arith.constant 0 : index
    %7 = vector.load %arg4[%c0_5, %c0_6] : memref<8x32xbf16, #tpu.memory_space<vmem>>, vector<8x32xbf16>
    tpu.vector_store %arg4[%c0_5, %c0_6], %6 {strides = array<i32>} : memref<8x32xbf16, #tpu.memory_space<vmem>>, vector<8x32xbf16>,
    return
  }
  func.func @transform_0(%arg0: i32) -> (i32, i32) {
    %c0_i32 = arith.constant 0 : i32
    %c0_i32_0 = arith.constant 0 : i32
    return %arg0, %c0_i32 : i32, i32
  }
  func.func @transform_1(%arg0: i32) -> (i32, i32) {
    %c0_i32 = arith.constant 0 : i32
    %c0_i32_0 = arith.constant 0 : i32
    %c0_i32_1 = arith.constant 0 : i32
    return %c0_i32, %c0_i32_0 : i32, i32
  }
  func.func @transform_2(%arg0: i32) -> (i32, i32) {
    %c0_i32 = arith.constant 0 : i32
    %c0_i32_0 = arith.constant 0 : i32
    %c0_i32_1 = arith.constant 0 : i32
    return %c0_i32, %c0_i32_0 : i32, i32
  }
  func.func @transform_3(%arg0: i32) -> (i32, i32) {
    %c0_i32 = arith.constant 0 : i32
    %c0_i32_0 = arith.constant 0 : i32
    return %arg0, %c0_i32 : i32, i32
  }
}

module attributes {stable_mosaic.version = 11 : i64} {
  func.func @_linear_res_kernel(%arg0: i32, %arg1: memref<8x32xbf16, #tpu.memory_space<vmem>>, %arg2: memref<32x32xbf16, #tpu.memory_space<vmem>>, %arg3: memref<1x32xf32, #tpu.memory_space<vmem>>, %arg4: memref<8x32xbf16, #tpu.memory_space<vmem>>, %arg5: memref<8x32xbf16, #tpu.memory_space<vmem>>) attributes {dimension_semantics = [#tpu.dimension_semantics<parallel>], iteration_bounds = array<i64: 1>, scalar_prefetch = 0 : i64, scratch_operands = 0 : i64, tpu.core_type = #tpu.core_type<tc>, window_params = [{transform_indices = @transform_0, window_bounds = array<i64: 8, 32>}, {pipeline_mode = #tpu.pipeline_mode<synchronous>, transform_indices = @transform_1, window_bounds = array<i64: 32, 32>}, {pipeline_mode = #tpu.pipeline_mode<synchronous>, transform_indices = @transform_2, window_bounds = array<i64: 1, 32>}, {transform_indices = @transform_3, window_bounds = array<i64: 8, 32>}, {transform_indices = @transform_4, window_bounds = array<i64: 8, 32>}]} {
    %c0 = arith.constant 0 : index
    %c0_0 = arith.constant 0 : index
    %0 = vector.load %arg1[%c0, %c0_0] : memref<8x32xbf16, #tpu.memory_space<vmem>>, vector<8x32xbf16>
    %c0_1 = arith.constant 0 : index
    %c0_2 = arith.constant 0 : index
    %1 = vector.load %arg2[%c0_1, %c0_2] : memref<32x32xbf16, #tpu.memory_space<vmem>>, vector<32x32xbf16>
    %cst = arith.constant dense<0.000000e+00> : vector<8x32xf32>
    %2 = tpu.matmul %0, %1, %cst {dimension_numbers = #tpu.dot_dimension_numbers<[1], [0], [0], [1], [0, 0, 1, 1], [], []>} : vector<8x32xbf16>, vector<32x32xbf16>, vector<8x32xf32> -> vector<8x32xf32>
    %c0_3 = arith.constant 0 : index
    %c0_4 = arith.constant 0 : index
    %3 = vector.load %arg4[%c0_3, %c0_4] : memref<8x32xbf16, #tpu.memory_space<vmem>>, vector<8x32xbf16>
    %4 = arith.extf %3 : vector<8x32xbf16> to vector<8x32xf32>
    %5 = arith.addf %4, %2 : vector<8x32xf32>
    %c0_5 = arith.constant 0 : index
    %c0_6 = arith.constant 0 : index
    %6 = vector.load %arg3[%c0_5, %c0_6] : memref<1x32xf32, #tpu.memory_space<vmem>>, vector<1x32xf32>
    %7 = vector.broadcast %6 : vector<1x32xf32> to vector<8x32xf32>
    %8 = arith.addf %5, %7 : vector<8x32xf32>
    %9 = arith.truncf %8 : vector<8x32xf32> to vector<8x32xbf16>
    %c0_7 = arith.constant 0 : index
    %c0_8 = arith.constant 0 : index
    %10 = vector.load %arg5[%c0_7, %c0_8] : memref<8x32xbf16, #tpu.memory_space<vmem>>, vector<8x32xbf16>
    tpu.vector_store %arg5[%c0_7, %c0_8], %9 {strides = array<i32>} : memref<8x32xbf16, #tpu.memory_space<vmem>>, vector<8x32xbf16>,
    return
  }
  func.func @transform_0(%arg0: i32) -> (i32, i32) {
    %c0_i32 = arith.constant 0 : i32
    %c0_i32_0 = arith.constant 0 : i32
    return %arg0, %c0_i32 : i32, i32
  }
  func.func @transform_1(%arg0: i32) -> (i32, i32) {
    %c0_i32 = arith.constant 0 : i32
    %c0_i32_0 = arith.constant 0 : i32
    %c0_i32_1 = arith.constant 0 : i32
    return %c0_i32, %c0_i32_0 : i32, i32
  }
  func.func @transform_2(%arg0: i32) -> (i32, i32) {
    %c0_i32 = arith.constant 0 : i32
    %c0_i32_0 = arith.constant 0 : i32
    %c0_i32_1 = arith.constant 0 : i32
    return %c0_i32, %c0_i32_0 : i32, i32
  }
  func.func @transform_3(%arg0: i32) -> (i32, i32) {
    %c0_i32 = arith.constant 0 : i32
    %c0_i32_0 = arith.constant 0 : i32
    return %arg0, %c0_i32 : i32, i32
  }
  func.func @transform_4(%arg0: i32) -> (i32, i32) {
    %c0_i32 = arith.constant 0 : i32
    %c0_i32_0 = arith.constant 0 : i32
    return %arg0, %c0_i32 : i32, i32
  }
}

module attributes {stable_mosaic.version = 11 : i64} {
  func.func @_ln_linear_kernel(%arg0: i32, %arg1: memref<10x32xbf16, #tpu.memory_space<vmem>>, %arg2: memref<1x32xf32, #tpu.memory_space<vmem>>, %arg3: memref<1x32xf32, #tpu.memory_space<vmem>>, %arg4: memref<32x96xbf16, #tpu.memory_space<vmem>>, %arg5: memref<1x96xf32, #tpu.memory_space<vmem>>, %arg6: memref<10x96xbf16, #tpu.memory_space<vmem>>) attributes {dimension_semantics = [#tpu.dimension_semantics<parallel>], iteration_bounds = array<i64: 1>, scalar_prefetch = 0 : i64, scratch_operands = 0 : i64, tpu.core_type = #tpu.core_type<tc>, window_params = [{transform_indices = @transform_0, window_bounds = array<i64: 10, 32>}, {pipeline_mode = #tpu.pipeline_mode<synchronous>, transform_indices = @transform_1, window_bounds = array<i64: 1, 32>}, {pipeline_mode = #tpu.pipeline_mode<synchronous>, transform_indices = @transform_2, window_bounds = array<i64: 1, 32>}, {pipeline_mode = #tpu.pipeline_mode<synchronous>, transform_indices = @transform_3, window_bounds = array<i64: 32, 96>}, {pipeline_mode = #tpu.pipeline_mode<synchronous>, transform_indices = @transform_4, window_bounds = array<i64: 1, 96>}, {transform_indices = @transform_5, window_bounds = array<i64: 10, 96>}]} {
    %c0 = arith.constant 0 : index
    %c0_0 = arith.constant 0 : index
    %0 = vector.load %arg1[%c0, %c0_0] : memref<10x32xbf16, #tpu.memory_space<vmem>>, vector<10x32xbf16>
    %1 = arith.extf %0 : vector<10x32xbf16> to vector<10x32xf32>
    %cst = arith.constant dense<0.000000e+00> : vector<10xf32>
    %2 = vector.multi_reduction <add>, %1, %cst [1] : vector<10x32xf32> to vector<10xf32>
    %3 = vector.shape_cast %2 : vector<10xf32> to vector<10x1xf32>
    %cst_1 = arith.constant 3.200000e+01 : f32
    %4 = vector.broadcast %cst_1 : f32 to vector<10x1xf32>
    %5 = arith.divf %3, %4 : vector<10x1xf32>
    %6 = vector.broadcast %5 : vector<10x1xf32> to vector<10x32xf32>
    %7 = arith.subf %1, %6 : vector<10x32xf32>
    %8 = arith.mulf %7, %7 : vector<10x32xf32>
    %cst_2 = arith.constant dense<0.000000e+00> : vector<10xf32>
    %9 = vector.multi_reduction <add>, %8, %cst_2 [1] : vector<10x32xf32> to vector<10xf32>
    %10 = vector.shape_cast %9 : vector<10xf32> to vector<10x1xf32>
    %cst_3 = arith.constant 3.200000e+01 : f32
    %11 = vector.broadcast %cst_3 : f32 to vector<10x1xf32>
    %12 = arith.divf %10, %11 : vector<10x1xf32>
    %13 = vector.broadcast %5 : vector<10x1xf32> to vector<10x32xf32>
    %14 = arith.subf %1, %13 : vector<10x32xf32>
    %cst_4 = arith.constant 9.99999974E-6 : f32
    %15 = vector.broadcast %cst_4 : f32 to vector<10x1xf32>
    %16 = arith.addf %12, %15 : vector<10x1xf32>
    %17 = math.rsqrt %16 : vector<10x1xf32>
    %18 = vector.broadcast %17 : vector<10x1xf32> to vector<10x32xf32>
    %19 = arith.mulf %14, %18 : vector<10x32xf32>
    %c0_5 = arith.constant 0 : index
    %c0_6 = arith.constant 0 : index
    %20 = vector.load %arg2[%c0_5, %c0_6] : memref<1x32xf32, #tpu.memory_space<vmem>>, vector<1x32xf32>
    %21 = vector.broadcast %20 : vector<1x32xf32> to vector<10x32xf32>
    %22 = arith.mulf %19, %21 : vector<10x32xf32>
    %c0_7 = arith.constant 0 : index
    %c0_8 = arith.constant 0 : index
    %23 = vector.load %arg3[%c0_7, %c0_8] : memref<1x32xf32, #tpu.memory_space<vmem>>, vector<1x32xf32>
    %24 = vector.broadcast %23 : vector<1x32xf32> to vector<10x32xf32>
    %25 = arith.addf %22, %24 : vector<10x32xf32>
    %26 = arith.truncf %25 : vector<10x32xf32> to vector<10x32xbf16>
    %c0_9 = arith.constant 0 : index
    %c0_10 = arith.constant 0 : index
    %27 = vector.load %arg4[%c0_9, %c0_10] : memref<32x96xbf16, #tpu.memory_space<vmem>>, vector<32x96xbf16>
    %cst_11 = arith.constant dense<0.000000e+00> : vector<10x96xf32>
    %28 = tpu.matmul %26, %27, %cst_11 {dimension_numbers = #tpu.dot_dimension_numbers<[1], [0], [0], [1], [0, 0, 1, 1], [], []>} : vector<10x32xbf16>, vector<32x96xbf16>, vector<10x96xf32> -> vector<10x96xf32>
    %c0_12 = arith.constant 0 : index
    %c0_13 = arith.constant 0 : index
    %29 = vector.load %arg5[%c0_12, %c0_13] : memref<1x96xf32, #tpu.memory_space<vmem>>, vector<1x96xf32>
    %30 = vector.broadcast %29 : vector<1x96xf32> to vector<10x96xf32>
    %31 = arith.addf %28, %30 : vector<10x96xf32>
    %32 = arith.truncf %31 : vector<10x96xf32> to vector<10x96xbf16>
    %c0_14 = arith.constant 0 : index
    %c0_15 = arith.constant 0 : index
    %33 = vector.load %arg6[%c0_14, %c0_15] : memref<10x96xbf16, #tpu.memory_space<vmem>>, vector<10x96xbf16>
    tpu.vector_store %arg6[%c0_14, %c0_15], %32 {strides = array<i32>} : memref<10x96xbf16, #tpu.memory_space<vmem>>, vector<10x96xbf16>,
    return
  }
  func.func @transform_0(%arg0: i32) -> (i32, i32) {
    %c0_i32 = arith.constant 0 : i32
    %c0_i32_0 = arith.constant 0 : i32
    return %arg0, %c0_i32 : i32, i32
  }
  func.func @transform_1(%arg0: i32) -> (i32, i32) {
    %c0_i32 = arith.constant 0 : i32
    %c0_i32_0 = arith.constant 0 : i32
    %c0_i32_1 = arith.constant 0 : i32
    return %c0_i32, %c0_i32_0 : i32, i32
  }
  func.func @transform_2(%arg0: i32) -> (i32, i32) {
    %c0_i32 = arith.constant 0 : i32
    %c0_i32_0 = arith.constant 0 : i32
    %c0_i32_1 = arith.constant 0 : i32
    return %c0_i32, %c0_i32_0 : i32, i32
  }
  func.func @transform_3(%arg0: i32) -> (i32, i32) {
    %c0_i32 = arith.constant 0 : i32
    %c0_i32_0 = arith.constant 0 : i32
    %c0_i32_1 = arith.constant 0 : i32
    return %c0_i32, %c0_i32_0 : i32, i32
  }
  func.func @transform_4(%arg0: i32) -> (i32, i32) {
    %c0_i32 = arith.constant 0 : i32
    %c0_i32_0 = arith.constant 0 : i32
    %c0_i32_1 = arith.constant 0 : i32
    return %c0_i32, %c0_i32_0 : i32, i32
  }
  func.func @transform_5(%arg0: i32) -> (i32, i32) {
    %c0_i32 = arith.constant 0 : i32
    %c0_i32_0 = arith.constant 0 : i32
    return %arg0, %c0_i32 : i32, i32
  }
}

module attributes {stable_mosaic.version = 11 : i64} {
  func.func @_linear_kernel(%arg0: i32, %arg1: memref<10x32xbf16, #tpu.memory_space<vmem>>, %arg2: memref<32x32xbf16, #tpu.memory_space<vmem>>, %arg3: memref<1x32xf32, #tpu.memory_space<vmem>>, %arg4: memref<10x32xbf16, #tpu.memory_space<vmem>>) attributes {dimension_semantics = [#tpu.dimension_semantics<parallel>], iteration_bounds = array<i64: 1>, scalar_prefetch = 0 : i64, scratch_operands = 0 : i64, tpu.core_type = #tpu.core_type<tc>, window_params = [{transform_indices = @transform_0, window_bounds = array<i64: 10, 32>}, {pipeline_mode = #tpu.pipeline_mode<synchronous>, transform_indices = @transform_1, window_bounds = array<i64: 32, 32>}, {pipeline_mode = #tpu.pipeline_mode<synchronous>, transform_indices = @transform_2, window_bounds = array<i64: 1, 32>}, {transform_indices = @transform_3, window_bounds = array<i64: 10, 32>}]} {
    %c0 = arith.constant 0 : index
    %c0_0 = arith.constant 0 : index
    %0 = vector.load %arg1[%c0, %c0_0] : memref<10x32xbf16, #tpu.memory_space<vmem>>, vector<10x32xbf16>
    %c0_1 = arith.constant 0 : index
    %c0_2 = arith.constant 0 : index
    %1 = vector.load %arg2[%c0_1, %c0_2] : memref<32x32xbf16, #tpu.memory_space<vmem>>, vector<32x32xbf16>
    %cst = arith.constant dense<0.000000e+00> : vector<10x32xf32>
    %2 = tpu.matmul %0, %1, %cst {dimension_numbers = #tpu.dot_dimension_numbers<[1], [0], [0], [1], [0, 0, 1, 1], [], []>} : vector<10x32xbf16>, vector<32x32xbf16>, vector<10x32xf32> -> vector<10x32xf32>
    %c0_3 = arith.constant 0 : index
    %c0_4 = arith.constant 0 : index
    %3 = vector.load %arg3[%c0_3, %c0_4] : memref<1x32xf32, #tpu.memory_space<vmem>>, vector<1x32xf32>
    %4 = vector.broadcast %3 : vector<1x32xf32> to vector<10x32xf32>
    %5 = arith.addf %2, %4 : vector<10x32xf32>
    %6 = arith.truncf %5 : vector<10x32xf32> to vector<10x32xbf16>
    %c0_5 = arith.constant 0 : index
    %c0_6 = arith.constant 0 : index
    %7 = vector.load %arg4[%c0_5, %c0_6] : memref<10x32xbf16, #tpu.memory_space<vmem>>, vector<10x32xbf16>
    tpu.vector_store %arg4[%c0_5, %c0_6], %6 {strides = array<i32>} : memref<10x32xbf16, #tpu.memory_space<vmem>>, vector<10x32xbf16>,
    return
  }
  func.func @transform_0(%arg0: i32) -> (i32, i32) {
    %c0_i32 = arith.constant 0 : i32
    %c0_i32_0 = arith.constant 0 : i32
    return %arg0, %c0_i32 : i32, i32
  }
  func.func @transform_1(%arg0: i32) -> (i32, i32) {
    %c0_i32 = arith.constant 0 : i32
    %c0_i32_0 = arith.constant 0 : i32
    %c0_i32_1 = arith.constant 0 : i32
    return %c0_i32, %c0_i32_0 : i32, i32
  }
  func.func @transform_2(%arg0: i32) -> (i32, i32) {
    %c0_i32 = arith.constant 0 : i32
    %c0_i32_0 = arith.constant 0 : i32
    %c0_i32_1 = arith.constant 0 : i32
    return %c0_i32, %c0_i32_0 : i32, i32
  }
  func.func @transform_3(%arg0: i32) -> (i32, i32) {
    %c0_i32 = arith.constant 0 : i32
    %c0_i32_0 = arith.constant 0 : i32
    return %arg0, %c0_i32 : i32, i32
  }
}

module attributes {stable_mosaic.version = 11 : i64} {
  func.func @_ln_mlp_res_kernel(%arg0: i32, %arg1: i32, %arg2: memref<9x32xbf16, #tpu.memory_space<vmem>>, %arg3: memref<1x32xf32, #tpu.memory_space<vmem>>, %arg4: memref<1x32xf32, #tpu.memory_space<vmem>>, %arg5: memref<32x64xbf16, #tpu.memory_space<vmem>>, %arg6: memref<1x64xf32, #tpu.memory_space<vmem>>, %arg7: memref<64x32xbf16, #tpu.memory_space<vmem>>, %arg8: memref<1x32xf32, #tpu.memory_space<vmem>>, %arg9: memref<9x32xbf16, #tpu.memory_space<vmem>>, %arg10: memref<9x32xbf16, #tpu.memory_space<vmem>>, %arg11: memref<9x32xf32, #tpu.memory_space<vmem>>) attributes {dimension_semantics = [#tpu.dimension_semantics<parallel>, #tpu.dimension_semantics<arbitrary>], iteration_bounds = array<i64: 1, 1>, scalar_prefetch = 0 : i64, scratch_operands = 2 : i64, tpu.core_type = #tpu.core_type<tc>, window_params = [{transform_indices = @transform_0, window_bounds = array<i64: 9, 32>}, {pipeline_mode = #tpu.pipeline_mode<synchronous>, transform_indices = @transform_1, window_bounds = array<i64: 1, 32>}, {pipeline_mode = #tpu.pipeline_mode<synchronous>, transform_indices = @transform_2, window_bounds = array<i64: 1, 32>}, {transform_indices = @transform_3, window_bounds = array<i64: 32, 64>}, {transform_indices = @transform_4, window_bounds = array<i64: 1, 64>}, {transform_indices = @transform_5, window_bounds = array<i64: 64, 32>}, {pipeline_mode = #tpu.pipeline_mode<synchronous>, transform_indices = @transform_6, window_bounds = array<i64: 1, 32>}, {transform_indices = @transform_7, window_bounds = array<i64: 9, 32>}]} {
    %c0_i32 = arith.constant 0 : i32
    %0 = arith.cmpi eq, %arg1, %c0_i32 : i32
    %1 = arith.extui %0 : i1 to i32
    %c0_i32_0 = arith.constant 0 : i32
    %2 = arith.cmpi ne, %1, %c0_i32_0 : i32
    scf.if %2 {
      %c0_19 = arith.constant 0 : index
      %c0_20 = arith.constant 0 : index
      %31 = vector.load %arg2[%c0_19, %c0_20] : memref<9x32xbf16, #tpu.memory_space<vmem>>, vector<9x32xbf16>
      %32 = arith.extf %31 : vector<9x32xbf16> to vector<9x32xf32>
      %cst_21 = arith.constant dense<0.000000e+00> : vector<9xf32>
      %33 = vector.multi_reduction <add>, %32, %cst_21 [1] : vector<9x32xf32> to vector<9xf32>
      %34 = vector.shape_cast %33 : vector<9xf32> to vector<9x1xf32>
      %cst_22 = arith.constant 3.200000e+01 : f32
      %35 = vector.broadcast %cst_22 : f32 to vector<9x1xf32>
      %36 = arith.divf %34, %35 : vector<9x1xf32>
      %37 = vector.broadcast %36 : vector<9x1xf32> to vector<9x32xf32>
      %38 = arith.subf %32, %37 : vector<9x32xf32>
      %39 = arith.mulf %38, %38 : vector<9x32xf32>
      %cst_23 = arith.constant dense<0.000000e+00> : vector<9xf32>
      %40 = vector.multi_reduction <add>, %39, %cst_23 [1] : vector<9x32xf32> to vector<9xf32>
      %41 = vector.shape_cast %40 : vector<9xf32> to vector<9x1xf32>
      %cst_24 = arith.constant 3.200000e+01 : f32
      %42 = vector.broadcast %cst_24 : f32 to vector<9x1xf32>
      %43 = arith.divf %41, %42 : vector<9x1xf32>
      %44 = vector.broadcast %36 : vector<9x1xf32> to vector<9x32xf32>
      %45 = arith.subf %32, %44 : vector<9x32xf32>
      %cst_25 = arith.constant 9.99999974E-6 : f32
      %46 = vector.broadcast %cst_25 : f32 to vector<9x1xf32>
      %47 = arith.addf %43, %46 : vector<9x1xf32>
      %48 = math.rsqrt %47 : vector<9x1xf32>
      %49 = vector.broadcast %48 : vector<9x1xf32> to vector<9x32xf32>
      %50 = arith.mulf %45, %49 : vector<9x32xf32>
      %c0_26 = arith.constant 0 : index
      %c0_27 = arith.constant 0 : index
      %51 = vector.load %arg3[%c0_26, %c0_27] : memref<1x32xf32, #tpu.memory_space<vmem>>, vector<1x32xf32>
      %52 = vector.broadcast %51 : vector<1x32xf32> to vector<9x32xf32>
      %53 = arith.mulf %50, %52 : vector<9x32xf32>
      %c0_28 = arith.constant 0 : index
      %c0_29 = arith.constant 0 : index
      %54 = vector.load %arg4[%c0_28, %c0_29] : memref<1x32xf32, #tpu.memory_space<vmem>>, vector<1x32xf32>
      %55 = vector.broadcast %54 : vector<1x32xf32> to vector<9x32xf32>
      %56 = arith.addf %53, %55 : vector<9x32xf32>
      %57 = arith.truncf %56 : vector<9x32xf32> to vector<9x32xbf16>
      %c0_30 = arith.constant 0 : index
      %c0_31 = arith.constant 0 : index
      %58 = vector.load %arg10[%c0_30, %c0_31] : memref<9x32xbf16, #tpu.memory_space<vmem>>, vector<9x32xbf16>
      tpu.vector_store %arg10[%c0_30, %c0_31], %57 {strides = array<i32>} : memref<9x32xbf16, #tpu.memory_space<vmem>>, vector<9x32xbf16>,
      %cst_32 = arith.constant 0.000000e+00 : f32
      %59 = vector.broadcast %cst_32 : f32 to vector<9x32xf32>
      %c0_33 = arith.constant 0 : index
      %c0_34 = arith.constant 0 : index
      %60 = vector.load %arg11[%c0_33, %c0_34] : memref<9x32xf32, #tpu.memory_space<vmem>>, vector<9x32xf32>
      tpu.vector_store %arg11[%c0_33, %c0_34], %59 {strides = array<i32>} : memref<9x32xf32, #tpu.memory_space<vmem>>, vector<9x32xf32>,
    } else {
    }
    %c0 = arith.constant 0 : index
    %c0_1 = arith.constant 0 : index
    %3 = vector.load %arg10[%c0, %c0_1] : memref<9x32xbf16, #tpu.memory_space<vmem>>, vector<9x32xbf16>
    %c0_2 = arith.constant 0 : index
    %c0_3 = arith.constant 0 : index
    %4 = vector.load %arg5[%c0_2, %c0_3] : memref<32x64xbf16, #tpu.memory_space<vmem>>, vector<32x64xbf16>
    %cst = arith.constant dense<0.000000e+00> : vector<9x64xf32>
    %5 = tpu.matmul %3, %4, %cst {dimension_numbers = #tpu.dot_dimension_numbers<[1], [0], [0], [1], [0, 0, 1, 1], [], []>} : vector<9x32xbf16>, vector<32x64xbf16>, vector<9x64xf32> -> vector<9x64xf32>
    %c0_4 = arith.constant 0 : index
    %c0_5 = arith.constant 0 : index
    %6 = vector.load %arg6[%c0_4, %c0_5] : memref<1x64xf32, #tpu.memory_space<vmem>>, vector<1x64xf32>
    %7 = vector.broadcast %6 : vector<1x64xf32> to vector<9x64xf32>
    %8 = arith.addf %5, %7 : vector<9x64xf32>
    %cst_6 = arith.constant 5.000000e-01 : f32
    %9 = vector.broadcast %cst_6 : f32 to vector<9x64xf32>
    %10 = arith.mulf %9, %8 : vector<9x64xf32>
    %11 = arith.mulf %8, %8 : vector<9x64xf32>
    %12 = arith.mulf %11, %8 : vector<9x64xf32>
    %cst_7 = arith.constant 4.471500e-02 : f32
    %13 = vector.broadcast %cst_7 : f32 to vector<9x64xf32>
    %14 = arith.mulf %13, %12 : vector<9x64xf32>
    %15 = arith.addf %8, %14 : vector<9x64xf32>
    %cst_8 = arith.constant 0.797884583 : f32
    %16 = vector.broadcast %cst_8 : f32 to vector<9x64xf32>
    %17 = arith.mulf %16, %15 : vector<9x64xf32>
    %18 = math.tanh %17 : vector<9x64xf32>
    %cst_9 = arith.constant 1.000000e+00 : f32
    %19 = vector.broadcast %cst_9 : f32 to vector<9x64xf32>
    %20 = arith.addf %19, %18 : vector<9x64xf32>
    %21 = arith.mulf %10, %20 : vector<9x64xf32>
    %c0_10 = arith.constant 0 : index
    %c0_11 = arith.constant 0 : index
    %22 = vector.load %arg11[%c0_10, %c0_11] : memref<9x32xf32, #tpu.memory_space<vmem>>, vector<9x32xf32>
    %23 = arith.truncf %21 : vector<9x64xf32> to vector<9x64xbf16>
    %c0_12 = arith.constant 0 : index
    %c0_13 = arith.constant 0 : index
    %24 = vector.load %arg7[%c0_12, %c0_13] : memref<64x32xbf16, #tpu.memory_space<vmem>>, vector<64x32xbf16>
    %cst_14 = arith.constant dense<0.000000e+00> : vector<9x32xf32>
    %25 = tpu.matmul %23, %24, %cst_14 {dimension_numbers = #tpu.dot_dimension_numbers<[1], [0], [0], [1], [0, 0, 1, 1], [], []>} : vector<9x64xbf16>, vector<64x32xbf16>, vector<9x32xf32> -> vector<9x32xf32>
    %26 = arith.addf %22, %25 : vector<9x32xf32>
    %c0_15 = arith.constant 0 : index
    %c0_16 = arith.constant 0 : index
    %27 = vector.load %arg11[%c0_15, %c0_16] : memref<9x32xf32, #tpu.memory_space<vmem>>, vector<9x32xf32>
    tpu.vector_store %arg11[%c0_15, %c0_16], %26 {strides = array<i32>} : memref<9x32xf32, #tpu.memory_space<vmem>>, vector<9x32xf32>,
    %c0_i32_17 = arith.constant 0 : i32
    %28 = arith.cmpi eq, %arg1, %c0_i32_17 : i32
    %29 = arith.extui %28 : i1 to i32
    %c0_i32_18 = arith.constant 0 : i32
    %30 = arith.cmpi ne, %29, %c0_i32_18 : i32
    scf.if %30 {
      %c0_19 = arith.constant 0 : index
      %c0_20 = arith.constant 0 : index
      %31 = vector.load %arg2[%c0_19, %c0_20] : memref<9x32xbf16, #tpu.memory_space<vmem>>, vector<9x32xbf16>
      %32 = arith.extf %31 : vector<9x32xbf16> to vector<9x32xf32>
      %c0_21 = arith.constant 0 : index
      %c0_22 = arith.constant 0 : index
      %33 = vector.load %arg11[%c0_21, %c0_22] : memref<9x32xf32, #tpu.memory_space<vmem>>, vector<9x32xf32>
      %34 = arith.addf %32, %33 : vector<9x32xf32>
      %c0_23 = arith.constant 0 : index
      %c0_24 = arith.constant 0 : index
      %35 = vector.load %arg8[%c0_23, %c0_24] : memref<1x32xf32, #tpu.memory_space<vmem>>, vector<1x32xf32>
      %36 = vector.broadcast %35 : vector<1x32xf32> to vector<9x32xf32>
      %37 = arith.addf %34, %36 : vector<9x32xf32>
      %38 = arith.truncf %37 : vector<9x32xf32> to vector<9x32xbf16>
      %c0_25 = arith.constant 0 : index
      %c0_26 = arith.constant 0 : index
      %39 = vector.load %arg9[%c0_25, %c0_26] : memref<9x32xbf16, #tpu.memory_space<vmem>>, vector<9x32xbf16>
      tpu.vector_store %arg9[%c0_25, %c0_26], %38 {strides = array<i32>} : memref<9x32xbf16, #tpu.memory_space<vmem>>, vector<9x32xbf16>,
    } else {
    }
    return
  }
  func.func @transform_0(%arg0: i32, %arg1: i32) -> (i32, i32) {
    %c0_i32 = arith.constant 0 : i32
    %c0_i32_0 = arith.constant 0 : i32
    return %arg0, %c0_i32 : i32, i32
  }
  func.func @transform_1(%arg0: i32, %arg1: i32) -> (i32, i32) {
    %c0_i32 = arith.constant 0 : i32
    %c0_i32_0 = arith.constant 0 : i32
    %c0_i32_1 = arith.constant 0 : i32
    return %c0_i32, %c0_i32_0 : i32, i32
  }
  func.func @transform_2(%arg0: i32, %arg1: i32) -> (i32, i32) {
    %c0_i32 = arith.constant 0 : i32
    %c0_i32_0 = arith.constant 0 : i32
    %c0_i32_1 = arith.constant 0 : i32
    return %c0_i32, %c0_i32_0 : i32, i32
  }
  func.func @transform_3(%arg0: i32, %arg1: i32) -> (i32, i32) {
    %c0_i32 = arith.constant 0 : i32
    %c0_i32_0 = arith.constant 0 : i32
    return %c0_i32, %arg1 : i32, i32
  }
  func.func @transform_4(%arg0: i32, %arg1: i32) -> (i32, i32) {
    %c0_i32 = arith.constant 0 : i32
    %c0_i32_0 = arith.constant 0 : i32
    return %c0_i32, %arg1 : i32, i32
  }
  func.func @transform_5(%arg0: i32, %arg1: i32) -> (i32, i32) {
    %c0_i32 = arith.constant 0 : i32
    %c0_i32_0 = arith.constant 0 : i32
    return %arg1, %c0_i32 : i32, i32
  }
  func.func @transform_6(%arg0: i32, %arg1: i32) -> (i32, i32) {
    %c0_i32 = arith.constant 0 : i32
    %c0_i32_0 = arith.constant 0 : i32
    %c0_i32_1 = arith.constant 0 : i32
    return %c0_i32, %c0_i32_0 : i32, i32
  }
  func.func @transform_7(%arg0: i32, %arg1: i32) -> (i32, i32) {
    %c0_i32 = arith.constant 0 : i32
    %c0_i32_0 = arith.constant 0 : i32
    return %arg0, %c0_i32 : i32, i32
  }
}

module attributes {stable_mosaic.version = 11 : i64} {
  func.func @_layernorm_kernel(%arg0: i32, %arg1: memref<2x32xbf16, #tpu.memory_space<vmem>>, %arg2: memref<1x32xf32, #tpu.memory_space<vmem>>, %arg3: memref<1x32xf32, #tpu.memory_space<vmem>>, %arg4: memref<2x32xbf16, #tpu.memory_space<vmem>>) attributes {dimension_semantics = [#tpu.dimension_semantics<parallel>], iteration_bounds = array<i64: 1>, scalar_prefetch = 0 : i64, scratch_operands = 0 : i64, tpu.core_type = #tpu.core_type<tc>, window_params = [{transform_indices = @transform_0, window_bounds = array<i64: 2, 32>}, {pipeline_mode = #tpu.pipeline_mode<synchronous>, transform_indices = @transform_1, window_bounds = array<i64: 1, 32>}, {pipeline_mode = #tpu.pipeline_mode<synchronous>, transform_indices = @transform_2, window_bounds = array<i64: 1, 32>}, {transform_indices = @transform_3, window_bounds = array<i64: 2, 32>}]} {
    %c0 = arith.constant 0 : index
    %c0_0 = arith.constant 0 : index
    %0 = vector.load %arg1[%c0, %c0_0] : memref<2x32xbf16, #tpu.memory_space<vmem>>, vector<2x32xbf16>
    %1 = arith.extf %0 : vector<2x32xbf16> to vector<2x32xf32>
    %cst = arith.constant dense<0.000000e+00> : vector<2xf32>
    %2 = vector.multi_reduction <add>, %1, %cst [1] : vector<2x32xf32> to vector<2xf32>
    %3 = vector.shape_cast %2 : vector<2xf32> to vector<2x1xf32>
    %cst_1 = arith.constant 3.200000e+01 : f32
    %4 = vector.broadcast %cst_1 : f32 to vector<2x1xf32>
    %5 = arith.divf %3, %4 : vector<2x1xf32>
    %6 = vector.broadcast %5 : vector<2x1xf32> to vector<2x32xf32>
    %7 = arith.subf %1, %6 : vector<2x32xf32>
    %8 = arith.mulf %7, %7 : vector<2x32xf32>
    %cst_2 = arith.constant dense<0.000000e+00> : vector<2xf32>
    %9 = vector.multi_reduction <add>, %8, %cst_2 [1] : vector<2x32xf32> to vector<2xf32>
    %10 = vector.shape_cast %9 : vector<2xf32> to vector<2x1xf32>
    %cst_3 = arith.constant 3.200000e+01 : f32
    %11 = vector.broadcast %cst_3 : f32 to vector<2x1xf32>
    %12 = arith.divf %10, %11 : vector<2x1xf32>
    %13 = vector.broadcast %5 : vector<2x1xf32> to vector<2x32xf32>
    %14 = arith.subf %1, %13 : vector<2x32xf32>
    %cst_4 = arith.constant 9.99999997E-7 : f32
    %15 = vector.broadcast %cst_4 : f32 to vector<2x1xf32>
    %16 = arith.addf %12, %15 : vector<2x1xf32>
    %17 = math.rsqrt %16 : vector<2x1xf32>
    %18 = vector.broadcast %17 : vector<2x1xf32> to vector<2x32xf32>
    %19 = arith.mulf %14, %18 : vector<2x32xf32>
    %c0_5 = arith.constant 0 : index
    %c0_6 = arith.constant 0 : index
    %20 = vector.load %arg2[%c0_5, %c0_6] : memref<1x32xf32, #tpu.memory_space<vmem>>, vector<1x32xf32>
    %21 = vector.broadcast %20 : vector<1x32xf32> to vector<2x32xf32>
    %22 = arith.mulf %19, %21 : vector<2x32xf32>
    %c0_7 = arith.constant 0 : index
    %c0_8 = arith.constant 0 : index
    %23 = vector.load %arg3[%c0_7, %c0_8] : memref<1x32xf32, #tpu.memory_space<vmem>>, vector<1x32xf32>
    %24 = vector.broadcast %23 : vector<1x32xf32> to vector<2x32xf32>
    %25 = arith.addf %22, %24 : vector<2x32xf32>
    %26 = arith.truncf %25 : vector<2x32xf32> to vector<2x32xbf16>
    %c0_9 = arith.constant 0 : index
    %c0_10 = arith.constant 0 : index
    %27 = vector.load %arg4[%c0_9, %c0_10] : memref<2x32xbf16, #tpu.memory_space<vmem>>, vector<2x32xbf16>
    tpu.vector_store %arg4[%c0_9, %c0_10], %26 {strides = array<i32>} : memref<2x32xbf16, #tpu.memory_space<vmem>>, vector<2x32xbf16>,
    return
  }
  func.func @transform_0(%arg0: i32) -> (i32, i32) {
    %c0_i32 = arith.constant 0 : i32
    %c0_i32_0 = arith.constant 0 : i32
    return %arg0, %c0_i32 : i32, i32
  }
  func.func @transform_1(%arg0: i32) -> (i32, i32) {
    %c0_i32 = arith.constant 0 : i32
    %c0_i32_0 = arith.constant 0 : i32
    %c0_i32_1 = arith.constant 0 : i32
    return %c0_i32, %c0_i32_0 : i32, i32
  }
  func.func @transform_2(%arg0: i32) -> (i32, i32) {
    %c0_i32 = arith.constant 0 : i32
    %c0_i32_0 = arith.constant 0 : i32
    %c0_i32_1 = arith.constant 0 : i32
    return %c0_i32, %c0_i32_0 : i32, i32
  }
  func.func @transform_3(%arg0: i32) -> (i32, i32) {
    %c0_i32 = arith.constant 0 : i32
    %c0_i32_0 = arith.constant 0 : i32
    return %arg0, %c0_i32 : i32, i32
  }
}

</mosaic_0001>

<llo_original>
// kernel: _lambda_.30
$region0: #{_lambda_.30}
  #allocation0 [shape = 'u32[]', space=smem, size = 0x4, offset = 0x4, fixed_abs, tag = 'smem constant byte address 0x4 - core index']
  #allocation1 [shape = 'u32[144,128]{1,0:T(1,128)}', space=vmem, size = 0x12000, scoped, tag = 'internal scratch']
  %s0 = inlined_call_operand.vmem [shape: bf16[8,256], index: 0, kind: input, shape index: {}]
  %s1 = inlined_call_operand.vmem [shape: bf16[256,32], index: 1, kind: input, shape index: {}]
  %s2 = inlined_call_operand.vmem [shape: f32[1,32], index: 2, kind: input, shape index: {}]
  %s3 = inlined_call_operand.vmem [shape: f32[8,32], index: 3, kind: output, shape index: {}]
  %s4 = sld [smem:[#allocation0]]
  $region22: #{_lambda_.30} parent=0
    _
  %s6 = ssub.s32 1, %s4
  %s7 = scalar_select 0, %s6, %s4
  // Predicated region
  $region2: #{_lambda_.30} parent=0 // pred_check
    _
  $region3: #{_lambda_.30} parent=0 // pred_check_branch
    %9 = sbr.rel (0) target = $region5
  $region4: #{_lambda_.30} parent=0 // pred_region
    _
  $region5: #{_lambda_.30} parent=0 // pred_fallthru
    _
  // Predicated region
  $region6: #{_lambda_.30} parent=0 // pred_check
    _
  $region7: #{_lambda_.30} parent=0 // pred_check_branch
    %11 = sbr.rel (0) target = $region9
  $region8: #{_lambda_.30} parent=0 // pred_region
    _
  $region9: #{_lambda_.30} parent=0 // pred_fallthru
    _
  // Predicated region
  $region10: #{_lambda_.30} parent=0 // pred_check
    _
  $region11: #{_lambda_.30} parent=0 // pred_check_branch
    %13 = sbr.rel (0) target = $region13
  $region12: #{_lambda_.30} parent=0 // pred_region
    _
  $region13: #{_lambda_.30} parent=0 // pred_fallthru
    _
  %v15 = vld [vmem:[%s0] sm:$0xff]
  %v16 = vld [vmem:[%s1] sm:$0xf]
  %v17 = vld [vmem:[%s1 + $0x4] sm:$0xf]
  %v18 = vld [vmem:[%s1 + $0x8] sm:$0xf]
  %v19 = vld [vmem:[%s1 + $0xc] sm:$0xf]
  %v20 = vld [vmem:[%s1 + $0x10] sm:$0xf]
  %v21 = vld [vmem:[%s1 + $0x14] sm:$0xf]
  %v22 = vld [vmem:[%s1 + $0x18] sm:$0xf]
  %v23 = vld [vmem:[%s1 + $0x1c] sm:$0xf]
  %v24 = vld [vmem:[%s1 + $0x20] sm:$0xf]
  %v25 = vld [vmem:[%s1 + $0x24] sm:$0xf]
  %v26 = vld [vmem:[%s1 + $0x28] sm:$0xf]
  %v27 = vld [vmem:[%s1 + $0x2c] sm:$0xf]
  %v28 = vld [vmem:[%s1 + $0x30] sm:$0xf]
  %v29 = vld [vmem:[%s1 + $0x34] sm:$0xf]
  %v30 = vld [vmem:[%s1 + $0x38] sm:$0xf]
  %v31 = vld [vmem:[%s1 + $0x3c] sm:$0xf]
  %v32 = vld [vmem:[%s1 + $0x40] sm:$0xf]
  %v33 = vld [vmem:[%s1 + $0x44] sm:$0xf]
  %v34 = vld [vmem:[%s1 + $0x48] sm:$0xf]
  %v35 = vld [vmem:[%s1 + $0x4c] sm:$0xf]
  %v36 = vld [vmem:[%s1 + $0x50] sm:$0xf]
  %v37 = vld [vmem:[%s1 + $0x54] sm:$0xf]
  %v38 = vld [vmem:[%s1 + $0x58] sm:$0xf]
  %v39 = vld [vmem:[%s1 + $0x5c] sm:$0xf]
  %v40 = vld [vmem:[%s1 + $0x60] sm:$0xf]
  %v41 = vld [vmem:[%s1 + $0x64] sm:$0xf]
  %v42 = vld [vmem:[%s1 + $0x68] sm:$0xf]
  %v43 = vld [vmem:[%s1 + $0x6c] sm:$0xf]
  %v44 = vld [vmem:[%s1 + $0x70] sm:$0xf]
  %v45 = vld [vmem:[%s1 + $0x74] sm:$0xf]
  %v46 = vld [vmem:[%s1 + $0x78] sm:$0xf]
  %v47 = vld [vmem:[%s1 + $0x7c] sm:$0xf]
  %v48 = vld [vmem:[%s2] sm:$0x1]
  %v50 = vlaneseq
  %v51 = vshrl.u32 %v50, 7
  %v52 = vsub.s32 0, %v51
  %v53 = vrot.slane %v48, %v52
  %v56 = vunpack.c.l.b16 %v15
  %v57 = vunpack.c.h.b16 %v15
  %v58 = vpack.c.b16 %v56, %v56
  %v59 = vpack.c.b16 %v57, %v57
  %v94 = vunpack.c.l.b16 %v16
  %v95 = vunpack.c.l.b16 %v17
  %v96 = vunpack.c.l.b16 %v18
  %v97 = vunpack.c.l.b16 %v19
  %v98 = vunpack.c.l.b16 %v20
  %v99 = vunpack.c.l.b16 %v21
  %v100 = vunpack.c.l.b16 %v22
  %v101 = vunpack.c.l.b16 %v23
  %v102 = vunpack.c.l.b16 %v24
  %v103 = vunpack.c.l.b16 %v25
  %v104 = vunpack.c.l.b16 %v26
  %v105 = vunpack.c.l.b16 %v27
  %v106 = vunpack.c.l.b16 %v28
  %v107 = vunpack.c.l.b16 %v29
  %v108 = vunpack.c.l.b16 %v30
  %v109 = vunpack.c.l.b16 %v31
  %v110 = vunpack.c.l.b16 %v32
  %v111 = vunpack.c.l.b16 %v33
  %v112 = vunpack.c.l.b16 %v34
  %v113 = vunpack.c.l.b16 %v35
  %v114 = vunpack.c.l.b16 %v36
  %v115 = vunpack.c.l.b16 %v37
  %v116 = vunpack.c.l.b16 %v38
  %v117 = vunpack.c.l.b16 %v39
  %v118 = vunpack.c.l.b16 %v40
  %v119 = vunpack.c.l.b16 %v41
  %v120 = vunpack.c.l.b16 %v42
  %v121 = vunpack.c.l.b16 %v43
  %v122 = vunpack.c.l.b16 %v44
  %v123 = vunpack.c.l.b16 %v45
  %v124 = vunpack.c.l.b16 %v46
  %v125 = vunpack.c.l.b16 %v47
  %v126 = vpack.c.b16 %v95, %v94
  %v127 = vpack.c.b16 %v97, %v96
  %v128 = vpack.c.b16 %v99, %v98
  %v129 = vpack.c.b16 %v101, %v100
  %v130 = vpack.c.b16 %v103, %v102
  %v131 = vpack.c.b16 %v105, %v104
  %v132 = vpack.c.b16 %v107, %v106
  %v133 = vpack.c.b16 %v109, %v108
  %v134 = vpack.c.b16 %v111, %v110
  %v135 = vpack.c.b16 %v113, %v112
  %v136 = vpack.c.b16 %v115, %v114
  %v137 = vpack.c.b16 %v117, %v116
  %v138 = vpack.c.b16 %v119, %v118
  %v139 = vpack.c.b16 %v121, %v120
  %v140 = vpack.c.b16 %v123, %v122
  %v141 = vpack.c.b16 %v125, %v124
  %158 = vmatprep.subr.bf16.mxu0 0
  %159 = vmatpush1.bf16.msra.mxu0 %v133
  %160 = vmatprep.subr.bf16.mxu0 0
  %161 = vmatpush1.bf16.msra.mxu0 %v132
  %162 = vmatprep.subr.bf16.mxu0 0
  %163 = vmatpush1.bf16.msra.mxu0 %v131
  %164 = vmatprep.subr.bf16.mxu0 0
  %165 = vmatpush1.bf16.msra.mxu0 %v130
  %166 = vmatprep.subr.bf16.mxu0 0
  %167 = vmatpush1.bf16.msra.mxu0 %v129
  %168 = vmatprep.subr.bf16.mxu0 0
  %169 = vmatpush1.bf16.msra.mxu0 %v128
  %170 = vmatprep.subr.bf16.mxu0 0
  %171 = vmatpush1.bf16.msra.mxu0 %v127
  %172 = vmatprep.subr.bf16.mxu0 0
  %173 = vmatpush1.bf16.msra.mxu0 %v126
  %174 = vmatprep.subr.bf16.mxu0 0
  %175 = vmatpush2.bf16.msra.mxu0 %v141
  %176 = vmatprep.subr.bf16.mxu0 0
  %177 = vmatpush2.bf16.msra.mxu0 %v140
  %178 = vmatprep.subr.bf16.mxu0 0
  %179 = vmatpush2.bf16.msra.mxu0 %v139
  %180 = vmatprep.subr.bf16.mxu0 0
  %181 = vmatpush2.bf16.msra.mxu0 %v138
  %182 = vmatprep.subr.bf16.mxu0 0
  %183 = vmatpush2.bf16.msra.mxu0 %v137
  %184 = vmatprep.subr.bf16.mxu0 0
  %185 = vmatpush2.bf16.msra.mxu0 %v136
  %186 = vmatprep.subr.bf16.mxu0 0
  %187 = vmatpush2.bf16.msra.mxu0 %v135
  %188 = vmatprep.subr.bf16.mxu0 0
  %189 = vmatpush2.bf16.msra.mxu0 %v134
  %190 = vmatprep.mubr.bf16.mxu0 %v59
  %191 = vmatmul.mubr.bf16.gmra.mxu0 %v58
  %v192 = vpop.f32.mrf.mxu0
  %v193 = vadd.f32 %v53, %v192
  %v194 = vpop.f32.mrf.mxu0
  %v195 = vpop.f32.mrf.mxu0
  %v196 = vpop.f32.mrf.mxu0
  %197 = vdwg.mxu0
  %vm198 = vcmask 261120
  %199 = vst.msk [vmem:[%s3] sm:$0xff] %vm198, %v193
  // Predicated region
  $region14: #{_lambda_.30} parent=0 // pred_check
    _
  $region15: #{_lambda_.30} parent=0 // pred_check_branch
    %201 = sbr.rel (0) target = $region17
  $region16: #{_lambda_.30} parent=0 // pred_region
    _
  $region17: #{_lambda_.30} parent=0 // pred_fallthru
    _
  // Predicated region
  $region18: #{_lambda_.30} parent=0 // pred_check
    _
  $region19: #{_lambda_.30} parent=0 // pred_check_branch
    %203 = sbr.rel (0) target = $region21
  $region20: #{_lambda_.30} parent=0 // pred_region
    _
  $region21: #{_lambda_.30} parent=0 // pred_fallthru
    _

// kernel: _lambda_.33
$region0: #{_lambda_.33}
  #allocation0 [shape = 'u32[]', space=smem, size = 0x4, offset = 0x4, fixed_abs, tag = 'smem constant byte address 0x4 - core index']
  #allocation1 [shape = 'u32[144,128]{1,0:T(1,128)}', space=vmem, size = 0x12000, scoped, tag = 'internal scratch']
  %s0 = inlined_call_operand.vmem [shape: bf16[10,32], index: 0, kind: input, shape index: {}]
  %s1 = inlined_call_operand.vmem [shape: bf16[32,32], index: 1, kind: input, shape index: {}]
  %s2 = inlined_call_operand.vmem [shape: f32[1,32], index: 2, kind: input, shape index: {}]
  %s3 = inlined_call_operand.vmem [shape: bf16[10,32], index: 3, kind: input, shape index: {}]
  %s4 = inlined_call_operand.vmem [shape: bf16[10,32], index: 4, kind: output, shape index: {}]
  %s5 = sld [smem:[#allocation0]]
  $region26: #{_lambda_.33} parent=0
    _
  %s7 = ssub.s32 1, %s5
  %s8 = scalar_select 0, %s7, %s5
  // Predicated region
  $region2: #{_lambda_.33} parent=0 // pred_check
    _
  $region3: #{_lambda_.33} parent=0 // pred_check_branch
    %10 = sbr.rel (0) target = $region5
  $region4: #{_lambda_.33} parent=0 // pred_region
    _
  $region5: #{_lambda_.33} parent=0 // pred_fallthru
    _
  // Predicated region
  $region6: #{_lambda_.33} parent=0 // pred_check
    _
  $region7: #{_lambda_.33} parent=0 // pred_check_branch
    %12 = sbr.rel (0) target = $region9
  $region8: #{_lambda_.33} parent=0 // pred_region
    _
  $region9: #{_lambda_.33} parent=0 // pred_fallthru
    _
  // Predicated region
  $region10: #{_lambda_.33} parent=0 // pred_check
    _
  $region11: #{_lambda_.33} parent=0 // pred_check_branch
    %14 = sbr.rel (0) target = $region13
  $region12: #{_lambda_.33} parent=0 // pred_region
    _
  $region13: #{_lambda_.33} parent=0 // pred_fallthru
    _
  // Predicated region
  $region14: #{_lambda_.33} parent=0 // pred_check
    _
  $region15: #{_lambda_.33} parent=0 // pred_check_branch
    %16 = sbr.rel (0) target = $region17
  $region16: #{_lambda_.33} parent=0 // pred_region
    _
  $region17: #{_lambda_.33} parent=0 // pred_fallthru
    _
  %v18 = vld [vmem:[%s0] sm:$0xf]
  %v19 = vld [vmem:[%s0 + $0x4] sm:$0x1]
  %v20 = vld [vmem:[%s1] sm:$0xf]
  %v21 = vld [vmem:[%s1 + $0x4] sm:$0xf]
  %v22 = vld [vmem:[%s1 + $0x8] sm:$0xf]
  %v23 = vld [vmem:[%s1 + $0xc] sm:$0xf]
  %v26 = vunpack.c.l.b16 %v18
  %v27 = vunpack.c.l.b16 %v19
  %v28 = vpack.c.b16 %v27, %v26
  %v33 = vunpack.c.l.b16 %v20
  %v34 = vunpack.c.l.b16 %v21
  %v35 = vunpack.c.l.b16 %v22
  %v36 = vunpack.c.l.b16 %v23
  %v37 = vpack.c.b16 %v34, %v33
  %v38 = vpack.c.b16 %v36, %v35
  %vm41 = vcmask 261120
  %v43 = vsel %vm41, %v28, 0
  %45 = vmatprep.subr.bf16.mxu0 0
  %46 = vmatpush1.bf16.msra.mxu0 0
  %47 = vmatprep.subr.bf16.mxu0 0
  %48 = vmatpush1.bf16.msra.mxu0 0
  %49 = vmatprep.subr.bf16.mxu0 0
  %50 = vmatpush1.bf16.msra.mxu0 0
  %51 = vmatprep.subr.bf16.mxu0 0
  %52 = vmatpush1.bf16.msra.mxu0 0
  %53 = vmatprep.subr.bf16.mxu0 0
  %54 = vmatpush1.bf16.msra.mxu0 0
  %55 = vmatprep.subr.bf16.mxu0 0
  %56 = vmatpush1.bf16.msra.mxu0 0
  %57 = vmatprep.subr.bf16.mxu0 0
  %58 = vmatpush1.bf16.msra.mxu0 %v38
  %59 = vmatprep.subr.bf16.mxu0 0
  %60 = vmatpush1.bf16.msra.mxu0 %v37
  %61 = vmatprep.subr.bf16.mxu0 0
  %62 = vmatpush2.bf16.msra.mxu0 0
  %63 = vmatprep.subr.bf16.mxu0 0
  %64 = vmatpush2.bf16.msra.mxu0 0
  %65 = vmatprep.subr.bf16.mxu0 0
  %66 = vmatpush2.bf16.msra.mxu0 0
  %67 = vmatprep.subr.bf16.mxu0 0
  %68 = vmatpush2.bf16.msra.mxu0 0
  %69 = vmatprep.subr.bf16.mxu0 0
  %70 = vmatpush2.bf16.msra.mxu0 0
  %71 = vmatprep.subr.bf16.mxu0 0
  %72 = vmatpush2.bf16.msra.mxu0 0
  %73 = vmatprep.subr.bf16.mxu0 0
  %74 = vmatpush2.bf16.msra.mxu0 0
  %75 = vmatprep.subr.bf16.mxu0 0
  %76 = vmatpush2.bf16.msra.mxu0 0
  %77 = vmatprep.mubr.bf16.mxu0 0
  %78 = vmatmul.mubr.bf16.gmra.mxu0 %v43
  %v79 = vpop.f32.mrf.mxu0
  %v80 = vadd.f32 0.0, %v79
  %v81 = vpop.f32.mrf.mxu0
  %v82 = vpop.f32.mrf.mxu0
  %v83 = vadd.f32 0.0, %v82
  %v84 = vpop.f32.mrf.mxu0
  %85 = vdwg.mxu0
  %v86 = vld [vmem:[%s3] sm:$0xf]
  %v87 = vld [vmem:[%s3 + $0x4] sm:$0x1]
  %v88 = vunpack.c.l.bf16 %v86
  %v89 = vunpack.c.l.bf16 %v87
  %v90 = vadd.f32 %v88, %v80
  %v91 = vadd.f32 %v89, %v83
  %v92 = vld [vmem:[%s2] sm:$0x1]
  %v94 = vlaneseq
  %v95 = vshrl.u32 %v94, 7
  %v96 = vsub.s32 0, %v95
  %v97 = vrot.slane %v92, %v96
  %v99 = vadd.f32 %v90, %v97
  %v100 = vadd.f32 %v91, %v97
  %v101 = vpack.c.bf16 %v100, %v99
  %v103 = vunpack.c.l.b16 %v101
  %v104 = vunpack.c.h.b16 %v101
  %v105 = vpack.c.b16 %v103, %v103
  %v106 = vpack.c.b16 %v104, %v104
  %vm109 = vcmask 257024
  %110 = vst.msk [vmem:[%s4] sm:$0xf] %vm109, %v105
  %vm111 = vcmask 253952
  %112 = vst.msk [vmem:[%s4 + $0x4] sm:$0x1] %vm111, %v106
  // Predicated region
  $region18: #{_lambda_.33} parent=0 // pred_check
    _
  $region19: #{_lambda_.33} parent=0 // pred_check_branch
    %114 = sbr.rel (0) target = $region21
  $region20: #{_lambda_.33} parent=0 // pred_region
    _
  $region21: #{_lambda_.33} parent=0 // pred_fallthru
    _
  // Predicated region
  $region22: #{_lambda_.33} parent=0 // pred_check
    _
  $region23: #{_lambda_.33} parent=0 // pred_check_branch
    %116 = sbr.rel (0) target = $region25
  $region24: #{_lambda_.33} parent=0 // pred_region
    _
  $region25: #{_lambda_.33} parent=0 // pred_fallthru
    _

// kernel: _lambda_.31
$region0: #{_lambda_.31}
  #allocation0 [shape = 'u32[]', space=smem, size = 0x4, offset = 0x4, fixed_abs, tag = 'smem constant byte address 0x4 - core index']
  #allocation1 [shape = 'u32[144,128]{1,0:T(1,128)}', space=vmem, size = 0x12000, scoped, tag = 'internal scratch']
  %s0 = inlined_call_operand.vmem [shape: bf16[10,32], index: 0, kind: input, shape index: {}]
  %s1 = inlined_call_operand.vmem [shape: f32[1,32], index: 1, kind: input, shape index: {}]
  %s2 = inlined_call_operand.vmem [shape: f32[1,32], index: 2, kind: input, shape index: {}]
  %s3 = inlined_call_operand.vmem [shape: bf16[32,96], index: 3, kind: input, shape index: {}]
  %s4 = inlined_call_operand.vmem [shape: f32[1,96], index: 4, kind: input, shape index: {}]
  %s5 = inlined_call_operand.vmem [shape: bf16[10,96], index: 5, kind: output, shape index: {}]
  %s6 = sld [smem:[#allocation0]]
  $region30: #{_lambda_.31} parent=0
    _
  %s8 = ssub.s32 1, %s6
  %s9 = scalar_select 0, %s8, %s6
  // Predicated region
  $region2: #{_lambda_.31} parent=0 // pred_check
    _
  $region3: #{_lambda_.31} parent=0 // pred_check_branch
    %11 = sbr.rel (0) target = $region5
  $region4: #{_lambda_.31} parent=0 // pred_region
    _
  $region5: #{_lambda_.31} parent=0 // pred_fallthru
    _
  // Predicated region
  $region6: #{_lambda_.31} parent=0 // pred_check
    _
  $region7: #{_lambda_.31} parent=0 // pred_check_branch
    %13 = sbr.rel (0) target = $region9
  $region8: #{_lambda_.31} parent=0 // pred_region
    _
  $region9: #{_lambda_.31} parent=0 // pred_fallthru
    _
  // Predicated region
  $region10: #{_lambda_.31} parent=0 // pred_check
    _
  $region11: #{_lambda_.31} parent=0 // pred_check_branch
    %15 = sbr.rel (0) target = $region13
  $region12: #{_lambda_.31} parent=0 // pred_region
    _
  $region13: #{_lambda_.31} parent=0 // pred_fallthru
    _
  // Predicated region
  $region14: #{_lambda_.31} parent=0 // pred_check
    _
  $region15: #{_lambda_.31} parent=0 // pred_check_branch
    %17 = sbr.rel (0) target = $region17
  $region16: #{_lambda_.31} parent=0 // pred_region
    _
  $region17: #{_lambda_.31} parent=0 // pred_fallthru
    _
  // Predicated region
  $region18: #{_lambda_.31} parent=0 // pred_check
    _
  $region19: #{_lambda_.31} parent=0 // pred_check_branch
    %19 = sbr.rel (0) target = $region21
  $region20: #{_lambda_.31} parent=0 // pred_region
    _
  $region21: #{_lambda_.31} parent=0 // pred_fallthru
    _
  %v21 = vld [vmem:[%s0] sm:$0xf]
  %v22 = vld [vmem:[%s0 + $0x4] sm:$0x1]
  %v23 = vunpack.c.l.bf16 %v21
  %v24 = vunpack.c.l.bf16 %v22
  %vm25 = vcmask 261120
  %v26 = vsel %vm25, %v23, 0.0
  %27 = vadd.xlane.f32.xlu0 %v26
  %v28 = vpop.xlane.xlu0 %27
  %vm29 = vcmask 254976
  %v30 = vsel %vm29, %v24, 0.0
  %31 = vadd.xlane.f32.xlu0 %v30
  %v32 = vpop.xlane.xlu0 %31
  %v33 = vrcp.pop 32.0
  %v34 = vmul.f32 %v28, %v33
  %v35 = vmul.f32 %v32, %v33
  %v36 = vsub.f32 %v23, %v34
  %v37 = vsub.f32 %v24, %v35
  %v38 = vmul.f32 %v36, %v36
  %v39 = vmul.f32 %v37, %v37
  %v40 = vsel %vm25, %v38, 0.0
  %41 = vadd.xlane.f32.xlu0 %v40
  %v42 = vpop.xlane.xlu0 %41
  %v43 = vsel %vm29, %v39, 0.0
  %44 = vadd.xlane.f32.xlu0 %v43
  %v45 = vpop.xlane.xlu0 %44
  %v46 = vmul.f32 %v42, %v33
  %v47 = vmul.f32 %v45, %v33
  %v48 = vadd.f32 %v46, 1e-06
  %v49 = vadd.f32 %v47, 1e-06
  %v50 = vrsqrt.pop %v48
  %v51 = vrsqrt.pop %v49
  %v52 = vmul.f32 %v36, %v50
  %v53 = vmul.f32 %v37, %v51
  %v54 = vld [vmem:[%s1] sm:$0x1]
  %v56 = vlaneseq
  %v57 = vshrl.u32 %v56, 7
  %v58 = vsub.s32 0, %v57
  %v59 = vrot.slane %v54, %v58
  %v61 = vmul.f32 %v52, %v59
  %v62 = vmul.f32 %v53, %v59
  %v63 = vld [vmem:[%s2] sm:$0x1]
  %v65 = vlaneseq
  %v66 = vshrl.u32 %v65, 7
  %v67 = vsub.s32 0, %v66
  %v68 = vrot.slane %v63, %v67
  %v70 = vadd.f32 %v61, %v68
  %v71 = vadd.f32 %v62, %v68
  %v72 = vpack.c.bf16 %v71, %v70
  %v73 = vld [vmem:[%s3] sm:$0xf]
  %v74 = vld [vmem:[%s3 + $0x4] sm:$0xf]
  %v75 = vld [vmem:[%s3 + $0x8] sm:$0xf]
  %v76 = vld [vmem:[%s3 + $0xc] sm:$0xf]
  %v77 = vld [vmem:[%s4] sm:$0x1]
  %v79 = vlaneseq
  %v80 = vshrl.u32 %v79, 7
  %v81 = vsub.s32 0, %v80
  %v82 = vrot.slane %v77, %v81
  %v88 = vunpack.c.l.b16 %v73
  %v89 = vunpack.c.l.b16 %v74
  %v90 = vunpack.c.l.b16 %v75
  %v91 = vunpack.c.l.b16 %v76
  %v92 = vpack.c.b16 %v89, %v88
  %v93 = vpack.c.b16 %v91, %v90
  %v97 = vsel %vm25, %v72, 0
  %99 = vmatprep.subr.bf16.mxu0 0
  %100 = vmatpush1.bf16.msra.mxu0 0
  %101 = vmatprep.subr.bf16.mxu0 0
  %102 = vmatpush1.bf16.msra.mxu0 0
  %103 = vmatprep.subr.bf16.mxu0 0
  %104 = vmatpush1.bf16.msra.mxu0 0
  %105 = vmatprep.subr.bf16.mxu0 0
  %106 = vmatpush1.bf16.msra.mxu0 0
  %107 = vmatprep.subr.bf16.mxu0 0
  %108 = vmatpush1.bf16.msra.mxu0 0
  %109 = vmatprep.subr.bf16.mxu0 0
  %110 = vmatpush1.bf16.msra.mxu0 0
  %111 = vmatprep.subr.bf16.mxu0 0
  %112 = vmatpush1.bf16.msra.mxu0 %v93
  %113 = vmatprep.subr.bf16.mxu0 0
  %114 = vmatpush1.bf16.msra.mxu0 %v92
  %115 = vmatprep.subr.bf16.mxu0 0
  %116 = vmatpush2.bf16.msra.mxu0 0
  %117 = vmatprep.subr.bf16.mxu0 0
  %118 = vmatpush2.bf16.msra.mxu0 0
  %119 = vmatprep.subr.bf16.mxu0 0
  %120 = vmatpush2.bf16.msra.mxu0 0
  %121 = vmatprep.subr.bf16.mxu0 0
  %122 = vmatpush2.bf16.msra.mxu0 0
  %123 = vmatprep.subr.bf16.mxu0 0
  %124 = vmatpush2.bf16.msra.mxu0 0
  %125 = vmatprep.subr.bf16.mxu0 0
  %126 = vmatpush2.bf16.msra.mxu0 0
  %127 = vmatprep.subr.bf16.mxu0 0
  %128 = vmatpush2.bf16.msra.mxu0 0
  %129 = vmatprep.subr.bf16.mxu0 0
  %130 = vmatpush2.bf16.msra.mxu0 0
  %131 = vmatprep.mubr.bf16.mxu0 0
  %132 = vmatmul.mubr.bf16.gmra.mxu0 %v97
  %v133 = vpop.f32.mrf.mxu0
  %v134 = vadd.f32 %v82, %v133
  %v135 = vpop.f32.mrf.mxu0
  %v136 = vpop.f32.mrf.mxu0
  %v137 = vadd.f32 %v82, %v136
  %v138 = vpop.f32.mrf.mxu0
  %139 = vdwg.mxu0
  %v140 = vpack.c.bf16 %v137, %v134
  %v142 = vunpack.c.l.b16 %v140
  %v143 = vunpack.c.h.b16 %v140
  %v144 = vpack.c.b16 %v142, %v142
  %v145 = vpack.c.b16 %v143, %v143
  %vm148 = vcmask 781312
  %149 = vst.msk [vmem:[%s5] sm:$0xf] %vm148, %v144
  %vm150 = vcmask 778240
  %151 = vst.msk [vmem:[%s5 + $0x4] sm:$0x1] %vm150, %v145
  // Predicated region
  $region22: #{_lambda_.31} parent=0 // pred_check
    _
  $region23: #{_lambda_.31} parent=0 // pred_check_branch
    %153 = sbr.rel (0) target = $region25
  $region24: #{_lambda_.31} parent=0 // pred_region
    _
  $region25: #{_lambda_.31} parent=0 // pred_fallthru
    _
  // Predicated region
  $region26: #{_lambda_.31} parent=0 // pred_check
    _
  $region27: #{_lambda_.31} parent=0 // pred_check_branch
    %155 = sbr.rel (0) target = $region29
  $region28: #{_lambda_.31} parent=0 // pred_region
    _
  $region29: #{_lambda_.31} parent=0 // pred_fallthru
    _

// kernel: _lambda_.32
$region0: #{_lambda_.32}
  #allocation0 [shape = 'u32[]', space=smem, size = 0x4, offset = 0x4, fixed_abs, tag = 'smem constant byte address 0x4 - core index']
  #allocation1 [shape = 'u32[144,128]{1,0:T(1,128)}', space=vmem, size = 0x12000, scoped, tag = 'internal scratch']
  %s0 = inlined_call_operand.vmem [shape: bf16[2,5,96], index: 0, kind: input, shape index: {}]
  %s1 = inlined_call_operand.vmem [shape: bf16[2,5,32], index: 1, kind: output, shape index: {}]
  %s2 = sld [smem:[#allocation0]]
  $region37: #{_lambda_.32} parent=0
    _
  %s4 = ssub.s32 1, %s2
  %s5 = scalar_select 0, %s4, %s2
  loop: start=0, step=1, limit=4
  $region2: #{_lambda_.32} parent=0 // loop_pre_header
    _
  $region3: #{_lambda_.32} parent=0 // loop_header
    %s7 = sphi 0, %s11
    %p8 = scmp.ge.s32.totalorder %s7, 4
    %s17 = sphi 0, %s19
    %s20 = sphi 0, %s17
    %s21 = sphi 0, %s20
    %s37 = sphi 0, %s21
    %s43 = sphi 0, %s45
    %s46 = sphi 0, %s43
    %s47 = sphi 0, %s46
    %s63 = sphi 0, %s47
  $region4: #{_lambda_.32} parent=0 // loop_header_branch
    %10 = sbr.rel (%p8) target = $region8
  $region5: #{_lambda_.32} parent=0 // loop_body
    %s12 = ssub.s32 %s7, 1
    %s13 = ssub.s32 %s7, 2
    %s14 = sadd.s32 %s7, 1
    %s15 = ssub.s32 %s7, %s14
    %p16 = scmp.eq.s32.totalorder %s15, 0
    %s18 = sadd.s32 %s17, 1
    %s19 = scalar_select %p16, %s17, %s18
    %p22 = pneg %p16
    %p23 = scmp.eq.s32.totalorder %s7, 1
    %p24 = por %p22, %p23
    %p25 = scmp.ne.s32.totalorder %s17, %s20
    %p26 = scmp.eq.s32.totalorder %s7, 0
    %p27 = por %p25, %p26
    %p28 = scmp.ne.s32.totalorder %s17, %s20
    %p29 = scmp.eq.s32.totalorder %s12, 1
    %p30 = por %p28, %p29
    %p31 = scmp.ne.s32.totalorder %s20, %s21
    %p32 = scmp.eq.s32.totalorder %s12, 0
    %p33 = por %p31, %p32
    %p34 = scmp.ne.s32.totalorder %s20, %s21
    %p35 = scmp.eq.s32.totalorder %s13, 1
    %p36 = por %p34, %p35
    %p38 = scmp.ne.s32.totalorder %s21, %s37
    %p39 = scmp.eq.s32.totalorder %s13, 0
    %p40 = por %p38, %p39
    %s41 = ssub.s32 %s7, %s14
    %p42 = scmp.eq.s32.totalorder %s41, 0
    %s44 = sadd.s32 %s43, 1
    %s45 = scalar_select %p42, %s43, %s44
    %p48 = pneg %p42
    %p49 = scmp.eq.s32.totalorder %s7, 1
    %p50 = por %p48, %p49
    %p51 = scmp.ne.s32.totalorder %s43, %s46
    %p52 = scmp.eq.s32.totalorder %s7, 0
    %p53 = por %p51, %p52
    %p54 = scmp.ne.s32.totalorder %s43, %s46
    %p55 = scmp.eq.s32.totalorder %s12, 1
    %p56 = por %p54, %p55
    %p57 = scmp.ne.s32.totalorder %s46, %s47
    %p58 = scmp.eq.s32.totalorder %s12, 0
    %p59 = por %p57, %p58
    %p60 = scmp.ne.s32.totalorder %s46, %s47
    %p61 = scmp.eq.s32.totalorder %s13, 1
    %p62 = por %p60, %p61
    %p64 = scmp.ne.s32.totalorder %s47, %s63
    %p65 = scmp.eq.s32.totalorder %s13, 0
    %p66 = por %p64, %p65
    %p67 = scmp.le.s32.totalorder 1, %s7
    %p68 = scmp.lt.s32.totalorder %s7, 3
    %p69 = pnand %p67, %p68
    %p70 = pneg %p69
    // Predicated region
    $region9: #{_lambda_.32} parent=5 // pred_check
      _
    $region10: #{_lambda_.32} parent=5 // pred_check_branch
      %72 = sbr.rel (%p69) target = $region12
    $region11: #{_lambda_.32} parent=5 // pred_region
      %s73 = ssub.s32 %s7, 1
    $region12: #{_lambda_.32} parent=5 // pred_fallthru
      _
    %p74 = scmp.lt.s32.totalorder %s7, 2
    // Predicated region
    $region13: #{_lambda_.32} parent=5 // pred_check
      %p75 = pneg %p74
    $region14: #{_lambda_.32} parent=5 // pred_check_branch
      %77 = sbr.rel (%p75) target = $region16
    $region15: #{_lambda_.32} parent=5 // pred_region
      // Predicated region
      $region17: #{_lambda_.32} parent=15 // pred_check
        %p78 = pneg %p27
      $region18: #{_lambda_.32} parent=15 // pred_check_branch
        %80 = sbr.rel (%p78) target = $region20
      $region19: #{_lambda_.32} parent=15 // pred_region
        %p81 = scmp.lt.s32.totalorder %s7, 1
        %s82 = scalar_select %p81, %s7, 1
        %s83 = smul.addr %s82, 4
        %s84 = scalar_lea.vmem %s0, %s83
      $region20: #{_lambda_.32} parent=15 // pred_fallthru
        _
    $region16: #{_lambda_.32} parent=5 // pred_fallthru
      _
    %p85 = scmp.le.s32.totalorder 1, %s7
    %p86 = scmp.lt.s32.totalorder %s7, 3
    %p87 = pnand %p85, %p86
    %p88 = pneg %p87
    // Predicated region
    $region21: #{_lambda_.32} parent=5 // pred_check
      _
    $region22: #{_lambda_.32} parent=5 // pred_check_branch
      %90 = sbr.rel (%p87) target = $region24
    $region23: #{_lambda_.32} parent=5 // pred_region
      %s91 = ssub.s32 %s7, 1
      %p92 = scmp.lt.s32.totalorder %s12, 1
      %s93 = scalar_select %p92, %s12, 1
      %s94 = smul.addr %s93, 4
      %s95 = scalar_lea.vmem %s0, %s94
      %p96 = pneg %p33
      %p97 = pneg %p30
      %p98 = pneg %p59
      %p99 = pneg %p56
      %p100 = scmp.lt.s32.totalorder %s12, 1
      %s101 = scalar_select %p100, %s12, 1
      %s102 = smul.addr %s101, 4
      %s103 = scalar_lea.vmem %s1, %s102
      %p104 = scmp.lt.s32.totalorder %s12, 1
      %s105 = scalar_select %p104, %s12, 1
      %s106 = smul.addr %s105, 4
      %s107 = scalar_lea.vmem %s0, %s106
      %p108 = scmp.lt.s32.totalorder %s12, 1
      %s109 = scalar_select %p108, %s12, 1
      %s110 = smul.addr %s109, 4
      %s111 = scalar_lea.vmem %s1, %s110
      %v113 = vld [vmem:[%s107] sm:$0x7]
      %v114 = vunpack.c.l.bf16 %v113
      %v115 = vmul.f32 %v114, 0.35355338
      %v116 = vpack.c.bf16 %v115, %v115
      %v118 = vunpack.c.l.b16 %v113
      %v119 = vpack.c.b16 %v118, %v118
      %120 = vrot.lane.b32.xlu0 %v119, 96
      %v121 = vpop.permute.xlu0 %120
      %vm122 = vcmask 64512
      %v124 = vsel %vm122, %v116, 0
      %v127 = vsel %vm122, %v121, 0
      %129 = vmatprep.subr.bf16.mxu0 0
      %130 = vmatpush1.bf16.xpose.msra.mxu0 0
      %131 = vmatprep.subr.bf16.mxu0 0
      %132 = vmatpush1.bf16.xpose.msra.mxu0 0
      %133 = vmatprep.subr.bf16.mxu0 0
      %134 = vmatpush1.bf16.xpose.msra.mxu0 0
      %135 = vmatprep.subr.bf16.mxu0 0
      %136 = vmatpush1.bf16.xpose.msra.mxu0 0
      %137 = vmatprep.subr.bf16.mxu0 0
      %138 = vmatpush1.bf16.xpose.msra.mxu0 0
      %139 = vmatprep.subr.bf16.mxu0 0
      %140 = vmatpush1.bf16.xpose.msra.mxu0 0
      %141 = vmatprep.subr.bf16.mxu0 0
      %142 = vmatpush1.bf16.xpose.msra.mxu0 0
      %143 = vmatprep.subr.bf16.mxu0 0
      %144 = vmatpush1.bf16.xpose.msra.mxu0 %v127
      %145 = vmatprep.subr.bf16.mxu0 0
      %146 = vmatpush2.bf16.xpose.msra.mxu0 0
      %147 = vmatprep.subr.bf16.mxu0 0
      %148 = vmatpush2.bf16.xpose.msra.mxu0 0
      %149 = vmatprep.subr.bf16.mxu0 0
      %150 = vmatpush2.bf16.xpose.msra.mxu0 0
      %151 = vmatprep.subr.bf16.mxu0 0
      %152 = vmatpush2.bf16.xpose.msra.mxu0 0
      %153 = vmatprep.subr.bf16.mxu0 0
      %154 = vmatpush2.bf16.xpose.msra.mxu0 0
      %155 = vmatprep.subr.bf16.mxu0 0
      %156 = vmatpush2.bf16.xpose.msra.mxu0 0
      %157 = vmatprep.subr.bf16.mxu0 0
      %158 = vmatpush2.bf16.xpose.msra.mxu0 0
      %159 = vmatprep.subr.bf16.mxu0 0
      %160 = vmatpush2.bf16.xpose.msra.mxu0 0
      %161 = vmatprep.mubr.bf16.mxu0 0
      %162 = vmatmul.mubr.bf16.gmra.mxu0 %v124
      %v163 = vpop.f32.mrf.mxu0
      %v164 = vadd.f32 0.0, %v163
      %v165 = vpop.f32.mrf.mxu0
      %v166 = vpop.f32.mrf.mxu0
      %v167 = vpop.f32.mrf.mxu0
      %168 = vdwg.mxu0
      %vm169 = vcmask 36864
      %v170 = vsel %vm169, %v164, -inf
      %171 = vmax.xlane.f32.xlu0 %v170
      %v172 = vpop.xlane.xlu0 %171
      %v173 = vsub.f32 %v164, %v172
      %v174 = vmul.f32 %v173, 1.442695
      %v175 = vpow.pop %v174
      %v176 = vsel %vm169, %v175, 0.0
      %177 = vadd.xlane.f32.xlu0 %v176
      %v178 = vpop.xlane.xlu0 %177
      %v179 = vrcp.pop %v178
      %v180 = vmul.f32 %v175, %v179
      %v181 = vpack.c.bf16 %v180, %v180
      %182 = vrot.lane.b32.xlu0 %v119, 64
      %v183 = vpop.permute.xlu0 %182
      %vm184 = vcmask 39936
      %v186 = vsel %vm184, %v181, 0
      %vm188 = vcmask 1041408
      %vm189 = vcmask 1042432
      %v190 = vsel %vm188, 4294967295, 65535
      %v191 = vsel %vm189, %v190, 0
      %v193 = vand.u32 %v183, %v191
      %195 = vmatprep.subr.bf16.mxu0 0
      %196 = vmatpush1.bf16.msra.mxu0 0
      %197 = vmatprep.subr.bf16.mxu0 0
      %198 = vmatpush1.bf16.msra.mxu0 0
      %199 = vmatprep.subr.bf16.mxu0 0
      %200 = vmatpush1.bf16.msra.mxu0 0
      %201 = vmatprep.subr.bf16.mxu0 0
      %202 = vmatpush1.bf16.msra.mxu0 0
      %203 = vmatprep.subr.bf16.mxu0 0
      %204 = vmatpush1.bf16.msra.mxu0 0
      %205 = vmatprep.subr.bf16.mxu0 0
      %206 = vmatpush1.bf16.msra.mxu0 0
      %207 = vmatprep.subr.bf16.mxu0 0
      %208 = vmatpush1.bf16.msra.mxu0 0
      %209 = vmatprep.subr.bf16.mxu0 0
      %210 = vmatpush1.bf16.msra.mxu0 %v193
      %211 = vmatprep.subr.bf16.mxu0 0
      %212 = vmatpush2.bf16.msra.mxu0 0
      %213 = vmatprep.subr.bf16.mxu0 0
      %214 = vmatpush2.bf16.msra.mxu0 0
      %215 = vmatprep.subr.bf16.mxu0 0
      %216 = vmatpush2.bf16.msra.mxu0 0
      %217 = vmatprep.subr.bf16.mxu0 0
      %218 = vmatpush2.bf16.msra.mxu0 0
      %219 = vmatprep.subr.bf16.mxu0 0
      %220 = vmatpush2.bf16.msra.mxu0 0
      %221 = vmatprep.subr.bf16.mxu0 0
      %222 = vmatpush2.bf16.msra.mxu0 0
      %223 = vmatprep.subr.bf16.mxu0 0
      %224 = vmatpush2.bf16.msra.mxu0 0
      %225 = vmatprep.subr.bf16.mxu0 0
      %226 = vmatpush2.bf16.msra.mxu0 0
      %227 = vmatprep.mubr.bf16.mxu0 0
      %228 = vmatmul.mubr.bf16.gmra.mxu0 %v186
      %v229 = vpop.f32.mrf.mxu0
      %v230 = vadd.f32 0.0, %v229
      %v231 = vpop.f32.mrf.mxu0
      %v232 = vpop.f32.mrf.mxu0
      %v233 = vpop.f32.mrf.mxu0
      %234 = vdwg.mxu0
      %v235 = vpack.c.bf16 %v230, %v230
      %vm236 = vcmask 59392
      %vm237 = vsmask.f32 2304
      %vm238 = vmand %vm236, %vm237
      %v239 = vld [vmem:[%s111] sm:$0x7]
      %v240 = vsel %vm238, %v235, %v239
      %241 = vst [vmem:[%s111] sm:$0x7] %v240
      %v242 = vld [vmem:[%s107] sm:$0x7]
      %v243 = vunpack.c.l.bf16 %v242
      %v244 = vmul.f32 %v243, 0.35355338
      %v245 = vpack.c.bf16 %v244, %v244
      %247 = vrot.lane.b32.xlu0 %v245, 120
      %v248 = vpop.permute.xlu0 %247
      %v250 = vunpack.c.l.b16 %v242
      %v251 = vpack.c.b16 %v250, %v250
      %252 = vrot.lane.b32.xlu0 %v251, 88
      %v253 = vpop.permute.xlu0 %252
      %v255 = vsel %vm122, %v248, 0
      %v258 = vsel %vm122, %v253, 0
      %260 = vmatprep.subr.bf16.mxu0 0
      %261 = vmatpush1.bf16.xpose.msra.mxu0 0
      %262 = vmatprep.subr.bf16.mxu0 0
      %263 = vmatpush1.bf16.xpose.msra.mxu0 0
      %264 = vmatprep.subr.bf16.mxu0 0
      %265 = vmatpush1.bf16.xpose.msra.mxu0 0
      %266 = vmatprep.subr.bf16.mxu0 0
      %267 = vmatpush1.bf16.xpose.msra.mxu0 0
      %268 = vmatprep.subr.bf16.mxu0 0
      %269 = vmatpush1.bf16.xpose.msra.mxu0 0
      %270 = vmatprep.subr.bf16.mxu0 0
      %271 = vmatpush1.bf16.xpose.msra.mxu0 0
      %272 = vmatprep.subr.bf16.mxu0 0
      %273 = vmatpush1.bf16.xpose.msra.mxu0 0
      %274 = vmatprep.subr.bf16.mxu0 0
      %275 = vmatpush1.bf16.xpose.msra.mxu0 %v258
      %276 = vmatprep.subr.bf16.mxu0 0
      %277 = vmatpush2.bf16.xpose.msra.mxu0 0
      %278 = vmatprep.subr.bf16.mxu0 0
      %279 = vmatpush2.bf16.xpose.msra.mxu0 0
      %280 = vmatprep.subr.bf16.mxu0 0
      %281 = vmatpush2.bf16.xpose.msra.mxu0 0
      %282 = vmatprep.subr.bf16.mxu0 0
      %283 = vmatpush2.bf16.xpose.msra.mxu0 0
      %284 = vmatprep.subr.bf16.mxu0 0
      %285 = vmatpush2.bf16.xpose.msra.mxu0 0
      %286 = vmatprep.subr.bf16.mxu0 0
      %287 = vmatpush2.bf16.xpose.msra.mxu0 0
      %288 = vmatprep.subr.bf16.mxu0 0
      %289 = vmatpush2.bf16.xpose.msra.mxu0 0
      %290 = vmatprep.subr.bf16.mxu0 0
      %291 = vmatpush2.bf16.xpose.msra.mxu0 0
      %292 = vmatprep.mubr.bf16.mxu0 0
      %293 = vmatmul.mubr.bf16.gmra.mxu0 %v255
      %v294 = vpop.f32.mrf.mxu0
      %v295 = vadd.f32 0.0, %v294
      %v296 = vpop.f32.mrf.mxu0
      %v297 = vpop.f32.mrf.mxu0
      %v298 = vpop.f32.mrf.mxu0
      %299 = vdwg.mxu0
      %v300 = vsel %vm169, %v295, -inf
      %301 = vmax.xlane.f32.xlu0 %v300
      %v302 = vpop.xlane.xlu0 %301
      %v303 = vsub.f32 %v295, %v302
      %v304 = vmul.f32 %v303, 1.442695
      %v305 = vpow.pop %v304
      %v306 = vsel %vm169, %v305, 0.0
      %307 = vadd.xlane.f32.xlu0 %v306
      %v308 = vpop.xlane.xlu0 %307
      %v309 = vrcp.pop %v308
      %v310 = vmul.f32 %v305, %v309
      %v311 = vpack.c.bf16 %v310, %v310
      %312 = vrot.lane.b32.xlu0 %v251, 56
      %v313 = vpop.permute.xlu0 %312
      %v315 = vsel %vm184, %v311, 0
      %v318 = vand.u32 %v313, %v191
      %320 = vmatprep.subr.bf16.mxu0 0
      %321 = vmatpush1.bf16.msra.mxu0 0
      %322 = vmatprep.subr.bf16.mxu0 0
      %323 = vmatpush1.bf16.msra.mxu0 0
      %324 = vmatprep.subr.bf16.mxu0 0
      %325 = vmatpush1.bf16.msra.mxu0 0
      %326 = vmatprep.subr.bf16.mxu0 0
      %327 = vmatpush1.bf16.msra.mxu0 0
      %328 = vmatprep.subr.bf16.mxu0 0
      %329 = vmatpush1.bf16.msra.mxu0 0
      %330 = vmatprep.subr.bf16.mxu0 0
      %331 = vmatpush1.bf16.msra.mxu0 0
      %332 = vmatprep.subr.bf16.mxu0 0
      %333 = vmatpush1.bf16.msra.mxu0 0
      %334 = vmatprep.subr.bf16.mxu0 0
      %335 = vmatpush1.bf16.msra.mxu0 %v318
      %336 = vmatprep.subr.bf16.mxu0 0
      %337 = vmatpush2.bf16.msra.mxu0 0
      %338 = vmatprep.subr.bf16.mxu0 0
      %339 = vmatpush2.bf16.msra.mxu0 0
      %340 = vmatprep.subr.bf16.mxu0 0
      %341 = vmatpush2.bf16.msra.mxu0 0
      %342 = vmatprep.subr.bf16.mxu0 0
      %343 = vmatpush2.bf16.msra.mxu0 0
      %344 = vmatprep.subr.bf16.mxu0 0
      %345 = vmatpush2.bf16.msra.mxu0 0
      %346 = vmatprep.subr.bf16.mxu0 0
      %347 = vmatpush2.bf16.msra.mxu0 0
      %348 = vmatprep.subr.bf16.mxu0 0
      %349 = vmatpush2.bf16.msra.mxu0 0
      %350 = vmatprep.subr.bf16.mxu0 0
      %351 = vmatpush2.bf16.msra.mxu0 0
      %352 = vmatprep.mubr.bf16.mxu0 0
      %353 = vmatmul.mubr.bf16.gmra.mxu0 %v315
      %v354 = vpop.f32.mrf.mxu0
      %v355 = vadd.f32 0.0, %v354
      %v356 = vpop.f32.mrf.mxu0
      %v357 = vpop.f32.mrf.mxu0
      %v358 = vpop.f32.mrf.mxu0
      %359 = vdwg.mxu0
      %v360 = vpack.c.bf16 %v355, %v355
      %v362 = vunpack.c.l.b16 %v360
      %v363 = vpack.c.b16 %v362, %v362
      %364 = vrot.lane.b32.xlu0 %v363, 8
      %v365 = vpop.permute.xlu0 %364
      %vm367 = vcmask 124992
      %vm368 = vmand %vm367, %vm237
      %v369 = vld [vmem:[%s111] sm:$0x7]
      %v370 = vsel %vm368, %v365, %v369
      %371 = vst [vmem:[%s111] sm:$0x7] %v370
      %v372 = vld [vmem:[%s107] sm:$0x7]
      %v373 = vunpack.c.l.bf16 %v372
      %v374 = vmul.f32 %v373, 0.35355338
      %v375 = vpack.c.bf16 %v374, %v374
      %377 = vrot.lane.b32.xlu0 %v375, 112
      %v378 = vpop.permute.xlu0 %377
      %v380 = vunpack.c.l.b16 %v372
      %v381 = vpack.c.b16 %v380, %v380
      %382 = vrot.lane.b32.xlu0 %v381, 80
      %v383 = vpop.permute.xlu0 %382
      %v385 = vsel %vm122, %v378, 0
      %v388 = vsel %vm122, %v383, 0
      %390 = vmatprep.subr.bf16.mxu0 0
      %391 = vmatpush1.bf16.xpose.msra.mxu0 0
      %392 = vmatprep.subr.bf16.mxu0 0
      %393 = vmatpush1.bf16.xpose.msra.mxu0 0
      %394 = vmatprep.subr.bf16.mxu0 0
      %395 = vmatpush1.bf16.xpose.msra.mxu0 0
      %396 = vmatprep.subr.bf16.mxu0 0
      %397 = vmatpush1.bf16.xpose.msra.mxu0 0
      %398 = vmatprep.subr.bf16.mxu0 0
      %399 = vmatpush1.bf16.xpose.msra.mxu0 0
      %400 = vmatprep.subr.bf16.mxu0 0
      %401 = vmatpush1.bf16.xpose.msra.mxu0 0
      %402 = vmatprep.subr.bf16.mxu0 0
      %403 = vmatpush1.bf16.xpose.msra.mxu0 0
      %404 = vmatprep.subr.bf16.mxu0 0
      %405 = vmatpush1.bf16.xpose.msra.mxu0 %v388
      %406 = vmatprep.subr.bf16.mxu0 0
      %407 = vmatpush2.bf16.xpose.msra.mxu0 0
      %408 = vmatprep.subr.bf16.mxu0 0
      %409 = vmatpush2.bf16.xpose.msra.mxu0 0
      %410 = vmatprep.subr.bf16.mxu0 0
      %411 = vmatpush2.bf16.xpose.msra.mxu0 0
      %412 = vmatprep.subr.bf16.mxu0 0
      %413 = vmatpush2.bf16.xpose.msra.mxu0 0
      %414 = vmatprep.subr.bf16.mxu0 0
      %415 = vmatpush2.bf16.xpose.msra.mxu0 0
      %416 = vmatprep.subr.bf16.mxu0 0
      %417 = vmatpush2.bf16.xpose.msra.mxu0 0
      %418 = vmatprep.subr.bf16.mxu0 0
      %419 = vmatpush2.bf16.xpose.msra.mxu0 0
      %420 = vmatprep.subr.bf16.mxu0 0
      %421 = vmatpush2.bf16.xpose.msra.mxu0 0
      %422 = vmatprep.mubr.bf16.mxu0 0
      %423 = vmatmul.mubr.bf16.gmra.mxu0 %v385
      %v424 = vpop.f32.mrf.mxu0
      %v425 = vadd.f32 0.0, %v424
      %v426 = vpop.f32.mrf.mxu0
      %v427 = vpop.f32.mrf.mxu0
      %v428 = vpop.f32.mrf.mxu0
      %429 = vdwg.mxu0
      %v430 = vsel %vm169, %v425, -inf
      %431 = vmax.xlane.f32.xlu0 %v430
      %v432 = vpop.xlane.xlu0 %431
      %v433 = vsub.f32 %v425, %v432
      %v434 = vmul.f32 %v433, 1.442695
      %v435 = vpow.pop %v434
      %v436 = vsel %vm169, %v435, 0.0
      %437 = vadd.xlane.f32.xlu0 %v436
      %v438 = vpop.xlane.xlu0 %437
      %v439 = vrcp.pop %v438
      %v440 = vmul.f32 %v435, %v439
      %v441 = vpack.c.bf16 %v440, %v440
      %442 = vrot.lane.b32.xlu0 %v381, 48
      %v443 = vpop.permute.xlu0 %442
      %v445 = vsel %vm184, %v441, 0
      %v448 = vand.u32 %v443, %v191
      %450 = vmatprep.subr.bf16.mxu0 0
      %451 = vmatpush1.bf16.msra.mxu0 0
      %452 = vmatprep.subr.bf16.mxu0 0
      %453 = vmatpush1.bf16.msra.mxu0 0
      %454 = vmatprep.subr.bf16.mxu0 0
      %455 = vmatpush1.bf16.msra.mxu0 0
      %456 = vmatprep.subr.bf16.mxu0 0
      %457 = vmatpush1.bf16.msra.mxu0 0
      %458 = vmatprep.subr.bf16.mxu0 0
      %459 = vmatpush1.bf16.msra.mxu0 0
      %460 = vmatprep.subr.bf16.mxu0 0
      %461 = vmatpush1.bf16.msra.mxu0 0
      %462 = vmatprep.subr.bf16.mxu0 0
      %463 = vmatpush1.bf16.msra.mxu0 0
      %464 = vmatprep.subr.bf16.mxu0 0
      %465 = vmatpush1.bf16.msra.mxu0 %v448
      %466 = vmatprep.subr.bf16.mxu0 0
      %467 = vmatpush2.bf16.msra.mxu0 0
      %468 = vmatprep.subr.bf16.mxu0 0
      %469 = vmatpush2.bf16.msra.mxu0 0
      %470 = vmatprep.subr.bf16.mxu0 0
      %471 = vmatpush2.bf16.msra.mxu0 0
      %472 = vmatprep.subr.bf16.mxu0 0
      %473 = vmatpush2.bf16.msra.mxu0 0
      %474 = vmatprep.subr.bf16.mxu0 0
      %475 = vmatpush2.bf16.msra.mxu0 0
      %476 = vmatprep.subr.bf16.mxu0 0
      %477 = vmatpush2.bf16.msra.mxu0 0
      %478 = vmatprep.subr.bf16.mxu0 0
      %479 = vmatpush2.bf16.msra.mxu0 0
      %480 = vmatprep.subr.bf16.mxu0 0
      %481 = vmatpush2.bf16.msra.mxu0 0
      %482 = vmatprep.mubr.bf16.mxu0 0
      %483 = vmatmul.mubr.bf16.gmra.mxu0 %v445
      %v484 = vpop.f32.mrf.mxu0
      %v485 = vadd.f32 0.0, %v484
      %v486 = vpop.f32.mrf.mxu0
      %v487 = vpop.f32.mrf.mxu0
      %v488 = vpop.f32.mrf.mxu0
      %489 = vdwg.mxu0
      %v490 = vpack.c.bf16 %v485, %v485
      %v492 = vunpack.c.l.b16 %v490
      %v493 = vpack.c.b16 %v492, %v492
      %494 = vrot.lane.b32.xlu0 %v493, 16
      %v495 = vpop.permute.xlu0 %494
      %vm497 = vcmask 190592
      %vm498 = vmand %vm497, %vm237
      %v499 = vld [vmem:[%s111] sm:$0x7]
      %v500 = vsel %vm498, %v495, %v499
      %501 = vst [vmem:[%s111] sm:$0x7] %v500
      %v502 = vld [vmem:[%s107] sm:$0x7]
      %v503 = vunpack.c.l.bf16 %v502
      %v504 = vmul.f32 %v503, 0.35355338
      %v505 = vpack.c.bf16 %v504, %v504
      %507 = vrot.lane.b32.xlu0 %v505, 104
      %v508 = vpop.permute.xlu0 %507
      %v510 = vunpack.c.l.b16 %v502
      %v511 = vpack.c.b16 %v510, %v510
      %512 = vrot.lane.b32.xlu0 %v511, 72
      %v513 = vpop.permute.xlu0 %512
      %v515 = vsel %vm122, %v508, 0
      %v518 = vsel %vm122, %v513, 0
      %520 = vmatprep.subr.bf16.mxu0 0
      %521 = vmatpush1.bf16.xpose.msra.mxu0 0
      %522 = vmatprep.subr.bf16.mxu0 0
      %523 = vmatpush1.bf16.xpose.msra.mxu0 0
      %524 = vmatprep.subr.bf16.mxu0 0
      %525 = vmatpush1.bf16.xpose.msra.mxu0 0
      %526 = vmatprep.subr.bf16.mxu0 0
      %527 = vmatpush1.bf16.xpose.msra.mxu0 0
      %528 = vmatprep.subr.bf16.mxu0 0
      %529 = vmatpush1.bf16.xpose.msra.mxu0 0
      %530 = vmatprep.subr.bf16.mxu0 0
      %531 = vmatpush1.bf16.xpose.msra.mxu0 0
      %532 = vmatprep.subr.bf16.mxu0 0
      %533 = vmatpush1.bf16.xpose.msra.mxu0 0
      %534 = vmatprep.subr.bf16.mxu0 0
      %535 = vmatpush1.bf16.xpose.msra.mxu0 %v518
      %536 = vmatprep.subr.bf16.mxu0 0
      %537 = vmatpush2.bf16.xpose.msra.mxu0 0
      %538 = vmatprep.subr.bf16.mxu0 0
      %539 = vmatpush2.bf16.xpose.msra.mxu0 0
      %540 = vmatprep.subr.bf16.mxu0 0
      %541 = vmatpush2.bf16.xpose.msra.mxu0 0
      %542 = vmatprep.subr.bf16.mxu0 0
      %543 = vmatpush2.bf16.xpose.msra.mxu0 0
      %544 = vmatprep.subr.bf16.mxu0 0
      %545 = vmatpush2.bf16.xpose.msra.mxu0 0
      %546 = vmatprep.subr.bf16.mxu0 0
      %547 = vmatpush2.bf16.xpose.msra.mxu0 0
      %548 = vmatprep.subr.bf16.mxu0 0
      %549 = vmatpush2.bf16.xpose.msra.mxu0 0
      %550 = vmatprep.subr.bf16.mxu0 0
      %551 = vmatpush2.bf16.xpose.msra.mxu0 0
      %552 = vmatprep.mubr.bf16.mxu0 0
      %553 = vmatmul.mubr.bf16.gmra.mxu0 %v515
      %v554 = vpop.f32.mrf.mxu0
      %v555 = vadd.f32 0.0, %v554
      %v556 = vpop.f32.mrf.mxu0
      %v557 = vpop.f32.mrf.mxu0
      %v558 = vpop.f32.mrf.mxu0
      %559 = vdwg.mxu0
      %v560 = vsel %vm169, %v555, -inf
      %561 = vmax.xlane.f32.xlu0 %v560
      %v562 = vpop.xlane.xlu0 %561
      %v563 = vsub.f32 %v555, %v562
      %v564 = vmul.f32 %v563, 1.442695
      %v565 = vpow.pop %v564
      %v566 = vsel %vm169, %v565, 0.0
      %567 = vadd.xlane.f32.xlu0 %v566
      %v568 = vpop.xlane.xlu0 %567
      %v569 = vrcp.pop %v568
      %v570 = vmul.f32 %v565, %v569
      %v571 = vpack.c.bf16 %v570, %v570
      %572 = vrot.lane.b32.xlu0 %v511, 40
      %v573 = vpop.permute.xlu0 %572
      %v575 = vsel %vm184, %v571, 0
      %v578 = vand.u32 %v573, %v191
      %580 = vmatprep.subr.bf16.mxu0 0
      %581 = vmatpush1.bf16.msra.mxu0 0
      %582 = vmatprep.subr.bf16.mxu0 0
      %583 = vmatpush1.bf16.msra.mxu0 0
      %584 = vmatprep.subr.bf16.mxu0 0
      %585 = vmatpush1.bf16.msra.mxu0 0
      %586 = vmatprep.subr.bf16.mxu0 0
      %587 = vmatpush1.bf16.msra.mxu0 0
      %588 = vmatprep.subr.bf16.mxu0 0
      %589 = vmatpush1.bf16.msra.mxu0 0
      %590 = vmatprep.subr.bf16.mxu0 0
      %591 = vmatpush1.bf16.msra.mxu0 0
      %592 = vmatprep.subr.bf16.mxu0 0
      %593 = vmatpush1.bf16.msra.mxu0 0
      %594 = vmatprep.subr.bf16.mxu0 0
      %595 = vmatpush1.bf16.msra.mxu0 %v578
      %596 = vmatprep.subr.bf16.mxu0 0
      %597 = vmatpush2.bf16.msra.mxu0 0
      %598 = vmatprep.subr.bf16.mxu0 0
      %599 = vmatpush2.bf16.msra.mxu0 0
      %600 = vmatprep.subr.bf16.mxu0 0
      %601 = vmatpush2.bf16.msra.mxu0 0
      %602 = vmatprep.subr.bf16.mxu0 0
      %603 = vmatpush2.bf16.msra.mxu0 0
      %604 = vmatprep.subr.bf16.mxu0 0
      %605 = vmatpush2.bf16.msra.mxu0 0
      %606 = vmatprep.subr.bf16.mxu0 0
      %607 = vmatpush2.bf16.msra.mxu0 0
      %608 = vmatprep.subr.bf16.mxu0 0
      %609 = vmatpush2.bf16.msra.mxu0 0
      %610 = vmatprep.subr.bf16.mxu0 0
      %611 = vmatpush2.bf16.msra.mxu0 0
      %612 = vmatprep.mubr.bf16.mxu0 0
      %613 = vmatmul.mubr.bf16.gmra.mxu0 %v575
      %v614 = vpop.f32.mrf.mxu0
      %v615 = vadd.f32 0.0, %v614
      %v616 = vpop.f32.mrf.mxu0
      %v617 = vpop.f32.mrf.mxu0
      %v618 = vpop.f32.mrf.mxu0
      %619 = vdwg.mxu0
      %v620 = vpack.c.bf16 %v615, %v615
      %v622 = vunpack.c.l.b16 %v620
      %v623 = vpack.c.b16 %v622, %v622
      %624 = vrot.lane.b32.xlu0 %v623, 24
      %v625 = vpop.permute.xlu0 %624
      %vm627 = vcmask 256192
      %vm628 = vmand %vm627, %vm237
      %v629 = vld [vmem:[%s111] sm:$0x7]
      %v630 = vsel %vm628, %v625, %v629
      %631 = vst [vmem:[%s111] sm:$0x7] %v630
      %p632 = scmp.lt.s32.totalorder %s12, 1
      %s633 = scalar_select %p632, %s12, 1
      %s634 = smul.addr %s633, 4
      %s635 = scalar_lea.vmem %s1, %s634
      // Predicated region
      $region25: #{_lambda_.32} parent=23 // pred_check
        %p636 = pneg %p56
      $region26: #{_lambda_.32} parent=23 // pred_check_branch
        %638 = sbr.rel (%p636) target = $region28
      $region27: #{_lambda_.32} parent=23 // pred_region
        _
      $region28: #{_lambda_.32} parent=23 // pred_fallthru
        _
    $region24: #{_lambda_.32} parent=5 // pred_fallthru
      _
    %p639 = scmp.le.s32.totalorder 2, %s7
    // Predicated region
    $region29: #{_lambda_.32} parent=5 // pred_check
      %p640 = pneg %p639
    $region30: #{_lambda_.32} parent=5 // pred_check_branch
      %642 = sbr.rel (%p640) target = $region32
    $region31: #{_lambda_.32} parent=5 // pred_region
      %s643 = ssub.s32 %s7, 2
      // Predicated region
      $region33: #{_lambda_.32} parent=31 // pred_check
        %p644 = pneg %p62
      $region34: #{_lambda_.32} parent=31 // pred_check_branch
        %646 = sbr.rel (%p644) target = $region36
      $region35: #{_lambda_.32} parent=31 // pred_region
        %p647 = scmp.lt.s32.totalorder %s13, 1
        %s648 = scalar_select %p647, %s13, 1
        %s649 = smul.addr %s648, 4
        %s650 = scalar_lea.vmem %s1, %s649
      $region36: #{_lambda_.32} parent=31 // pred_fallthru
        _
    $region32: #{_lambda_.32} parent=5 // pred_fallthru
      _
  $region6: #{_lambda_.32} parent=0 // loop_footer
    %s11 = sadd.s32 1, %s7
  $region7: #{_lambda_.32} parent=0 // loop_footer_branch
    %6 = sbr.rel target = $region3
  $region8: #{_lambda_.32} parent=0 // loop_exit
    _

// kernel: _lambda_.34
$region0: #{_lambda_.34}
  #allocation0 [shape = 'u32[]', space=smem, size = 0x4, offset = 0x4, fixed_abs, tag = 'smem constant byte address 0x4 - core index']
  #allocation1 [shape = 'u32[144,128]{1,0:T(1,128)}', space=vmem, size = 0x12000, scoped, tag = 'internal scratch']
  #allocation2 [shape = 'bf16[10,32]{1,0:T(8,128)(2,1)}', space=vmem, size = 0x1000, scoped, tag = 'scratch operand']
  #allocation3 [shape = 'f32[10,32]{1,0:T(8,128)}', space=vmem, size = 0x2000, scoped, tag = 'scratch operand']
  %s0 = inlined_call_operand.vmem [shape: bf16[10,32], index: 0, kind: input, shape index: {}]
  %s1 = inlined_call_operand.vmem [shape: f32[1,32], index: 1, kind: input, shape index: {}]
  %s2 = inlined_call_operand.vmem [shape: f32[1,32], index: 2, kind: input, shape index: {}]
  %s3 = inlined_call_operand.vmem [shape: bf16[32,64], index: 3, kind: input, shape index: {}]
  %s4 = inlined_call_operand.vmem [shape: f32[1,64], index: 4, kind: input, shape index: {}]
  %s5 = inlined_call_operand.vmem [shape: bf16[64,32], index: 5, kind: input, shape index: {}]
  %s6 = inlined_call_operand.vmem [shape: f32[1,32], index: 6, kind: input, shape index: {}]
  %s7 = inlined_call_operand.vmem [shape: bf16[10,32], index: 7, kind: output, shape index: {}]
  %s8 = sld [smem:[#allocation0]]
  $region46: #{_lambda_.34} parent=0
    _
  %s10 = ssub.s32 1, %s8
  %s11 = scalar_select 0, %s10, %s8
  // Predicated region
  $region2: #{_lambda_.34} parent=0 // pred_check
    _
  $region3: #{_lambda_.34} parent=0 // pred_check_branch
    %13 = sbr.rel (0) target = $region5
  $region4: #{_lambda_.34} parent=0 // pred_region
    _
  $region5: #{_lambda_.34} parent=0 // pred_fallthru
    _
  // Predicated region
  $region6: #{_lambda_.34} parent=0 // pred_check
    _
  $region7: #{_lambda_.34} parent=0 // pred_check_branch
    %15 = sbr.rel (0) target = $region9
  $region8: #{_lambda_.34} parent=0 // pred_region
    _
  $region9: #{_lambda_.34} parent=0 // pred_fallthru
    _
  // Predicated region
  $region10: #{_lambda_.34} parent=0 // pred_check
    _
  $region11: #{_lambda_.34} parent=0 // pred_check_branch
    %17 = sbr.rel (0) target = $region13
  $region12: #{_lambda_.34} parent=0 // pred_region
    _
  $region13: #{_lambda_.34} parent=0 // pred_fallthru
    _
  // Predicated region
  $region14: #{_lambda_.34} parent=0 // pred_check
    _
  $region15: #{_lambda_.34} parent=0 // pred_check_branch
    %19 = sbr.rel (0) target = $region17
  $region16: #{_lambda_.34} parent=0 // pred_region
    _
  $region17: #{_lambda_.34} parent=0 // pred_fallthru
    _
  // Predicated region
  $region18: #{_lambda_.34} parent=0 // pred_check
    _
  $region19: #{_lambda_.34} parent=0 // pred_check_branch
    %21 = sbr.rel (0) target = $region21
  $region20: #{_lambda_.34} parent=0 // pred_region
    _
  $region21: #{_lambda_.34} parent=0 // pred_fallthru
    _
  // Predicated region
  $region22: #{_lambda_.34} parent=0 // pred_check
    _
  $region23: #{_lambda_.34} parent=0 // pred_check_branch
    %23 = sbr.rel (0) target = $region25
  $region24: #{_lambda_.34} parent=0 // pred_region
    _
  $region25: #{_lambda_.34} parent=0 // pred_fallthru
    _
  // Predicated region
  $region26: #{_lambda_.34} parent=0 // pred_check
    _
  $region27: #{_lambda_.34} parent=0 // pred_check_branch
    %25 = sbr.rel (0) target = $region29
  $region28: #{_lambda_.34} parent=0 // pred_region
    _
  $region29: #{_lambda_.34} parent=0 // pred_fallthru
    _
  %p27 = scmp.eq.s32.totalorder 0, 0
  // Predicated region
  $region30: #{_lambda_.34} parent=0 // pred_check
    %p28 = pneg %p27
  $region31: #{_lambda_.34} parent=0 // pred_check_branch
    %30 = sbr.rel (%p28) target = $region33
  $region32: #{_lambda_.34} parent=0 // pred_region
    %v31 = vld [vmem:[%s0] sm:$0xf]
    %v32 = vld [vmem:[%s0 + $0x4] sm:$0x1]
    %v33 = vunpack.c.l.bf16 %v31
    %v34 = vunpack.c.l.bf16 %v32
    %vm35 = vcmask 261120
    %v36 = vsel %vm35, %v33, 0.0
    %37 = vadd.xlane.f32.xlu0 %v36
    %v38 = vpop.xlane.xlu0 %37
    %vm39 = vcmask 254976
    %v40 = vsel %vm39, %v34, 0.0
    %41 = vadd.xlane.f32.xlu0 %v40
    %v42 = vpop.xlane.xlu0 %41
    %v43 = vrcp.pop 32.0
    %v44 = vmul.f32 %v38, %v43
    %v45 = vmul.f32 %v42, %v43
    %v46 = vsub.f32 %v33, %v44
    %v47 = vsub.f32 %v34, %v45
    %v48 = vmul.f32 %v46, %v46
    %v49 = vmul.f32 %v47, %v47
    %v50 = vsel %vm35, %v48, 0.0
    %51 = vadd.xlane.f32.xlu0 %v50
    %v52 = vpop.xlane.xlu0 %51
    %v53 = vsel %vm39, %v49, 0.0
    %54 = vadd.xlane.f32.xlu0 %v53
    %v55 = vpop.xlane.xlu0 %54
    %v56 = vmul.f32 %v52, %v43
    %v57 = vmul.f32 %v55, %v43
    %v58 = vadd.f32 %v56, 1e-06
    %v59 = vadd.f32 %v57, 1e-06
    %v60 = vrsqrt.pop %v58
    %v61 = vrsqrt.pop %v59
    %v62 = vmul.f32 %v46, %v60
    %v63 = vmul.f32 %v47, %v61
    %v64 = vld [vmem:[%s1] sm:$0x1]
    %v66 = vlaneseq
    %v67 = vshrl.u32 %v66, 7
    %v68 = vsub.s32 0, %v67
    %v69 = vrot.slane %v64, %v68
    %v71 = vmul.f32 %v62, %v69
    %v72 = vmul.f32 %v63, %v69
    %v73 = vld [vmem:[%s2] sm:$0x1]
    %v75 = vlaneseq
    %v76 = vshrl.u32 %v75, 7
    %v77 = vsub.s32 0, %v76
    %v78 = vrot.slane %v73, %v77
    %v80 = vadd.f32 %v71, %v78
    %v81 = vadd.f32 %v72, %v78
    %v82 = vpack.c.bf16 %v81, %v80
    %v84 = vunpack.c.l.b16 %v82
    %v85 = vunpack.c.h.b16 %v82
    %v86 = vpack.c.b16 %v84, %v84
    %v87 = vpack.c.b16 %v85, %v85
    %vm90 = vcmask 257024
    %91 = vst.msk [vmem:[#allocation2] sm:$0xf] %vm90, %v86
    %vm92 = vcmask 253952
    %93 = vst.msk [vmem:[#allocation2 + $0x4] sm:$0x1] %vm92, %v87
    %94 = vst.msk [vmem:[#allocation3] sm:$0xff] %vm35, 0.0
    %95 = vst.msk [vmem:[#allocation3 + $0x8] sm:$0x3] %vm39, 0.0
  $region33: #{_lambda_.34} parent=0 // pred_fallthru
    _
  %v96 = vld [vmem:[#allocation2] sm:$0xf]
  %v97 = vld [vmem:[#allocation2 + $0x4] sm:$0x1]
  %v98 = vld [vmem:[%s3] sm:$0xf]
  %v99 = vld [vmem:[%s3 + $0x4] sm:$0xf]
  %v100 = vld [vmem:[%s3 + $0x8] sm:$0xf]
  %v101 = vld [vmem:[%s3 + $0xc] sm:$0xf]
  %v102 = vld [vmem:[%s4] sm:$0x1]
  %v104 = vlaneseq
  %v105 = vshrl.u32 %v104, 7
  %v106 = vsub.s32 0, %v105
  %v107 = vrot.slane %v102, %v106
  %v111 = vunpack.c.l.b16 %v96
  %v112 = vunpack.c.l.b16 %v97
  %v113 = vpack.c.b16 %v112, %v111
  %v118 = vunpack.c.l.b16 %v98
  %v119 = vunpack.c.l.b16 %v99
  %v120 = vunpack.c.l.b16 %v100
  %v121 = vunpack.c.l.b16 %v101
  %v122 = vpack.c.b16 %v119, %v118
  %v123 = vpack.c.b16 %v121, %v120
  %vm126 = vcmask 261120
  %v128 = vsel %vm126, %v113, 0
  %130 = vmatprep.subr.bf16.mxu0 0
  %131 = vmatpush1.bf16.msra.mxu0 0
  %132 = vmatprep.subr.bf16.mxu0 0
  %133 = vmatpush1.bf16.msra.mxu0 0
  %134 = vmatprep.subr.bf16.mxu0 0
  %135 = vmatpush1.bf16.msra.mxu0 0
  %136 = vmatprep.subr.bf16.mxu0 0
  %137 = vmatpush1.bf16.msra.mxu0 0
  %138 = vmatprep.subr.bf16.mxu0 0
  %139 = vmatpush1.bf16.msra.mxu0 0
  %140 = vmatprep.subr.bf16.mxu0 0
  %141 = vmatpush1.bf16.msra.mxu0 0
  %142 = vmatprep.subr.bf16.mxu0 0
  %143 = vmatpush1.bf16.msra.mxu0 %v123
  %144 = vmatprep.subr.bf16.mxu0 0
  %145 = vmatpush1.bf16.msra.mxu0 %v122
  %146 = vmatprep.subr.bf16.mxu0 0
  %147 = vmatpush2.bf16.msra.mxu0 0
  %148 = vmatprep.subr.bf16.mxu0 0
  %149 = vmatpush2.bf16.msra.mxu0 0
  %150 = vmatprep.subr.bf16.mxu0 0
  %151 = vmatpush2.bf16.msra.mxu0 0
  %152 = vmatprep.subr.bf16.mxu0 0
  %153 = vmatpush2.bf16.msra.mxu0 0
  %154 = vmatprep.subr.bf16.mxu0 0
  %155 = vmatpush2.bf16.msra.mxu0 0
  %156 = vmatprep.subr.bf16.mxu0 0
  %157 = vmatpush2.bf16.msra.mxu0 0
  %158 = vmatprep.subr.bf16.mxu0 0
  %159 = vmatpush2.bf16.msra.mxu0 0
  %160 = vmatprep.subr.bf16.mxu0 0
  %161 = vmatpush2.bf16.msra.mxu0 0
  %162 = vmatprep.mubr.bf16.mxu0 0
  %163 = vmatmul.mubr.bf16.gmra.mxu0 %v128
  %v164 = vpop.f32.mrf.mxu0
  %v165 = vadd.f32 %v107, %v164
  %v166 = vpop.f32.mrf.mxu0
  %v167 = vpop.f32.mrf.mxu0
  %v168 = vadd.f32 %v107, %v167
  %v169 = vpop.f32.mrf.mxu0
  %170 = vdwg.mxu0
  %v171 = vmul.f32 %v165, 0.5
  %v172 = vmul.f32 %v168, 0.5
  %v173 = vmul.f32 %v165, %v165
  %v174 = vmul.f32 %v168, %v168
  %v175 = vmul.f32 %v173, %v165
  %v176 = vmul.f32 %v174, %v168
  %v177 = vmul.f32 %v175, 0.044715
  %v178 = vmul.f32 %v176, 0.044715
  %v179 = vadd.f32 %v165, %v177
  %v180 = vadd.f32 %v168, %v178
  %v181 = vmul.f32 %v179, 0.7978846
  %v182 = vmul.f32 %v180, 0.7978846
  %v183 = vtanh.pop %v181
  %v184 = vtanh.pop %v182
  %v185 = vadd.f32 %v183, 1.0
  %v186 = vadd.f32 %v184, 1.0
  %v187 = vmul.f32 %v171, %v185
  %v188 = vmul.f32 %v172, %v186
  %v189 = vld [vmem:[#allocation3] sm:$0xff]
  %v190 = vld [vmem:[#allocation3 + $0x8] sm:$0x3]
  %v191 = vpack.c.bf16 %v188, %v187
  %v192 = vld [vmem:[%s5] sm:$0xf]
  %v193 = vld [vmem:[%s5 + $0x4] sm:$0xf]
  %v194 = vld [vmem:[%s5 + $0x8] sm:$0xf]
  %v195 = vld [vmem:[%s5 + $0xc] sm:$0xf]
  %v196 = vld [vmem:[%s5 + $0x10] sm:$0xf]
  %v197 = vld [vmem:[%s5 + $0x14] sm:$0xf]
  %v198 = vld [vmem:[%s5 + $0x18] sm:$0xf]
  %v199 = vld [vmem:[%s5 + $0x1c] sm:$0xf]
  %v208 = vunpack.c.l.b16 %v192
  %v209 = vunpack.c.l.b16 %v193
  %v210 = vunpack.c.l.b16 %v194
  %v211 = vunpack.c.l.b16 %v195
  %v212 = vunpack.c.l.b16 %v196
  %v213 = vunpack.c.l.b16 %v197
  %v214 = vunpack.c.l.b16 %v198
  %v215 = vunpack.c.l.b16 %v199
  %v216 = vpack.c.b16 %v209, %v208
  %v217 = vpack.c.b16 %v211, %v210
  %v218 = vpack.c.b16 %v213, %v212
  %v219 = vpack.c.b16 %v215, %v214
  %vm224 = vcmask 523264
  %v226 = vsel %vm224, %v191, 0
  %228 = vmatprep.subr.bf16.mxu0 0
  %229 = vmatpush1.bf16.msra.mxu0 0
  %230 = vmatprep.subr.bf16.mxu0 0
  %231 = vmatpush1.bf16.msra.mxu0 0
  %232 = vmatprep.subr.bf16.mxu0 0
  %233 = vmatpush1.bf16.msra.mxu0 0
  %234 = vmatprep.subr.bf16.mxu0 0
  %235 = vmatpush1.bf16.msra.mxu0 0
  %236 = vmatprep.subr.bf16.mxu0 0
  %237 = vmatpush1.bf16.msra.mxu0 %v219
  %238 = vmatprep.subr.bf16.mxu0 0
  %239 = vmatpush1.bf16.msra.mxu0 %v218
  %240 = vmatprep.subr.bf16.mxu0 0
  %241 = vmatpush1.bf16.msra.mxu0 %v217
  %242 = vmatprep.subr.bf16.mxu0 0
  %243 = vmatpush1.bf16.msra.mxu0 %v216
  %244 = vmatprep.subr.bf16.mxu0 0
  %245 = vmatpush2.bf16.msra.mxu0 0
  %246 = vmatprep.subr.bf16.mxu0 0
  %247 = vmatpush2.bf16.msra.mxu0 0
  %248 = vmatprep.subr.bf16.mxu0 0
  %249 = vmatpush2.bf16.msra.mxu0 0
  %250 = vmatprep.subr.bf16.mxu0 0
  %251 = vmatpush2.bf16.msra.mxu0 0
  %252 = vmatprep.subr.bf16.mxu0 0
  %253 = vmatpush2.bf16.msra.mxu0 0
  %254 = vmatprep.subr.bf16.mxu0 0
  %255 = vmatpush2.bf16.msra.mxu0 0
  %256 = vmatprep.subr.bf16.mxu0 0
  %257 = vmatpush2.bf16.msra.mxu0 0
  %258 = vmatprep.subr.bf16.mxu0 0
  %259 = vmatpush2.bf16.msra.mxu0 0
  %260 = vmatprep.mubr.bf16.mxu0 0
  %261 = vmatmul.mubr.bf16.gmra.mxu0 %v226
  %v262 = vpop.f32.mrf.mxu0
  %v263 = vadd.f32 0.0, %v262
  %v264 = vpop.f32.mrf.mxu0
  %v265 = vpop.f32.mrf.mxu0
  %v266 = vadd.f32 0.0, %v265
  %v267 = vpop.f32.mrf.mxu0
  %268 = vdwg.mxu0
  %v269 = vadd.f32 %v189, %v263
  %v270 = vadd.f32 %v190, %v266
  %271 = vst.msk [vmem:[#allocation3] sm:$0xff] %vm126, %v269
  %vm272 = vcmask 254976
  %273 = vst.msk [vmem:[#allocation3 + $0x8] sm:$0x3] %vm272, %v270
  // Predicated region
  $region34: #{_lambda_.34} parent=0 // pred_check
    %p274 = pneg %p27
  $region35: #{_lambda_.34} parent=0 // pred_check_branch
    %276 = sbr.rel (%p274) target = $region37
  $region36: #{_lambda_.34} parent=0 // pred_region
    %v277 = vld [vmem:[%s0] sm:$0xf]
    %v278 = vld [vmem:[%s0 + $0x4] sm:$0x1]
    %v279 = vunpack.c.l.bf16 %v277
    %v280 = vunpack.c.l.bf16 %v278
    %v281 = vld [vmem:[#allocation3] sm:$0xff]
    %v282 = vld [vmem:[#allocation3 + $0x8] sm:$0x3]
    %v283 = vadd.f32 %v279, %v281
    %v284 = vadd.f32 %v280, %v282
    %v285 = vld [vmem:[%s6] sm:$0x1]
    %v287 = vlaneseq
    %v288 = vshrl.u32 %v287, 7
    %v289 = vsub.s32 0, %v288
    %v290 = vrot.slane %v285, %v289
    %v292 = vadd.f32 %v283, %v290
    %v293 = vadd.f32 %v284, %v290
    %v294 = vpack.c.bf16 %v293, %v292
    %v296 = vunpack.c.l.b16 %v294
    %v297 = vunpack.c.h.b16 %v294
    %v298 = vpack.c.b16 %v296, %v296
    %v299 = vpack.c.b16 %v297, %v297
    %vm302 = vcmask 257024
    %303 = vst.msk [vmem:[%s7] sm:$0xf] %vm302, %v298
    %vm304 = vcmask 253952
    %305 = vst.msk [vmem:[%s7 + $0x4] sm:$0x1] %vm304, %v299
  $region37: #{_lambda_.34} parent=0 // pred_fallthru
    _
  // Predicated region
  $region38: #{_lambda_.34} parent=0 // pred_check
    _
  $region39: #{_lambda_.34} parent=0 // pred_check_branch
    %307 = sbr.rel (0) target = $region41
  $region40: #{_lambda_.34} parent=0 // pred_region
    _
  $region41: #{_lambda_.34} parent=0 // pred_fallthru
    _
  // Predicated region
  $region42: #{_lambda_.34} parent=0 // pred_check
    _
  $region43: #{_lambda_.34} parent=0 // pred_check_branch
    %309 = sbr.rel (0) target = $region45
  $region44: #{_lambda_.34} parent=0 // pred_region
    _
  $region45: #{_lambda_.34} parent=0 // pred_fallthru
    _

// kernel: _lambda_.39
$region0: #{_lambda_.39}
  #allocation0 [shape = 'u32[]', space=smem, size = 0x4, offset = 0x4, fixed_abs, tag = 'smem constant byte address 0x4 - core index']
  #allocation1 [shape = 'u32[144,128]{1,0:T(1,128)}', space=vmem, size = 0x12000, scoped, tag = 'internal scratch']
  %s0 = inlined_call_operand.vmem [shape: bf16[8,32], index: 0, kind: input, shape index: {}]
  %s1 = inlined_call_operand.vmem [shape: f32[1,32], index: 1, kind: input, shape index: {}]
  %s2 = inlined_call_operand.vmem [shape: f32[1,32], index: 2, kind: input, shape index: {}]
  %s3 = inlined_call_operand.vmem [shape: bf16[32,96], index: 3, kind: input, shape index: {}]
  %s4 = inlined_call_operand.vmem [shape: f32[1,96], index: 4, kind: input, shape index: {}]
  %s5 = inlined_call_operand.vmem [shape: bf16[8,96], index: 5, kind: output, shape index: {}]
  %s6 = sld [smem:[#allocation0]]
  $region30: #{_lambda_.39} parent=0
    _
  %s8 = ssub.s32 1, %s6
  %s9 = scalar_select 0, %s8, %s6
  // Predicated region
  $region2: #{_lambda_.39} parent=0 // pred_check
    _
  $region3: #{_lambda_.39} parent=0 // pred_check_branch
    %11 = sbr.rel (0) target = $region5
  $region4: #{_lambda_.39} parent=0 // pred_region
    _
  $region5: #{_lambda_.39} parent=0 // pred_fallthru
    _
  // Predicated region
  $region6: #{_lambda_.39} parent=0 // pred_check
    _
  $region7: #{_lambda_.39} parent=0 // pred_check_branch
    %13 = sbr.rel (0) target = $region9
  $region8: #{_lambda_.39} parent=0 // pred_region
    _
  $region9: #{_lambda_.39} parent=0 // pred_fallthru
    _
  // Predicated region
  $region10: #{_lambda_.39} parent=0 // pred_check
    _
  $region11: #{_lambda_.39} parent=0 // pred_check_branch
    %15 = sbr.rel (0) target = $region13
  $region12: #{_lambda_.39} parent=0 // pred_region
    _
  $region13: #{_lambda_.39} parent=0 // pred_fallthru
    _
  // Predicated region
  $region14: #{_lambda_.39} parent=0 // pred_check
    _
  $region15: #{_lambda_.39} parent=0 // pred_check_branch
    %17 = sbr.rel (0) target = $region17
  $region16: #{_lambda_.39} parent=0 // pred_region
    _
  $region17: #{_lambda_.39} parent=0 // pred_fallthru
    _
  // Predicated region
  $region18: #{_lambda_.39} parent=0 // pred_check
    _
  $region19: #{_lambda_.39} parent=0 // pred_check_branch
    %19 = sbr.rel (0) target = $region21
  $region20: #{_lambda_.39} parent=0 // pred_region
    _
  $region21: #{_lambda_.39} parent=0 // pred_fallthru
    _
  %v21 = vld [vmem:[%s0] sm:$0xf]
  %v22 = vunpack.c.l.bf16 %v21
  %vm23 = vcmask 261120
  %v24 = vsel %vm23, %v22, 0.0
  %25 = vadd.xlane.f32.xlu0 %v24
  %v26 = vpop.xlane.xlu0 %25
  %v27 = vrcp.pop 32.0
  %v28 = vmul.f32 %v26, %v27
  %v29 = vsub.f32 %v22, %v28
  %v30 = vmul.f32 %v29, %v29
  %v31 = vsel %vm23, %v30, 0.0
  %32 = vadd.xlane.f32.xlu0 %v31
  %v33 = vpop.xlane.xlu0 %32
  %v34 = vmul.f32 %v33, %v27
  %v35 = vadd.f32 %v34, 1e-05
  %v36 = vrsqrt.pop %v35
  %v37 = vmul.f32 %v29, %v36
  %v38 = vld [vmem:[%s1] sm:$0x1]
  %v40 = vlaneseq
  %v41 = vshrl.u32 %v40, 7
  %v42 = vsub.s32 0, %v41
  %v43 = vrot.slane %v38, %v42
  %v45 = vmul.f32 %v37, %v43
  %v46 = vld [vmem:[%s2] sm:$0x1]
  %v48 = vlaneseq
  %v49 = vshrl.u32 %v48, 7
  %v50 = vsub.s32 0, %v49
  %v51 = vrot.slane %v46, %v50
  %v53 = vadd.f32 %v45, %v51
  %v54 = vpack.c.bf16 %v53, %v53
  %v55 = vld [vmem:[%s3] sm:$0xf]
  %v56 = vld [vmem:[%s3 + $0x4] sm:$0xf]
  %v57 = vld [vmem:[%s3 + $0x8] sm:$0xf]
  %v58 = vld [vmem:[%s3 + $0xc] sm:$0xf]
  %v59 = vld [vmem:[%s4] sm:$0x1]
  %v61 = vlaneseq
  %v62 = vshrl.u32 %v61, 7
  %v63 = vsub.s32 0, %v62
  %v64 = vrot.slane %v59, %v63
  %v70 = vunpack.c.l.b16 %v55
  %v71 = vunpack.c.l.b16 %v56
  %v72 = vunpack.c.l.b16 %v57
  %v73 = vunpack.c.l.b16 %v58
  %v74 = vpack.c.b16 %v71, %v70
  %v75 = vpack.c.b16 %v73, %v72
  %v79 = vsel %vm23, %v54, 0
  %81 = vmatprep.subr.bf16.mxu0 0
  %82 = vmatpush1.bf16.msra.mxu0 0
  %83 = vmatprep.subr.bf16.mxu0 0
  %84 = vmatpush1.bf16.msra.mxu0 0
  %85 = vmatprep.subr.bf16.mxu0 0
  %86 = vmatpush1.bf16.msra.mxu0 0
  %87 = vmatprep.subr.bf16.mxu0 0
  %88 = vmatpush1.bf16.msra.mxu0 0
  %89 = vmatprep.subr.bf16.mxu0 0
  %90 = vmatpush1.bf16.msra.mxu0 0
  %91 = vmatprep.subr.bf16.mxu0 0
  %92 = vmatpush1.bf16.msra.mxu0 0
  %93 = vmatprep.subr.bf16.mxu0 0
  %94 = vmatpush1.bf16.msra.mxu0 %v75
  %95 = vmatprep.subr.bf16.mxu0 0
  %96 = vmatpush1.bf16.msra.mxu0 %v74
  %97 = vmatprep.subr.bf16.mxu0 0
  %98 = vmatpush2.bf16.msra.mxu0 0
  %99 = vmatprep.subr.bf16.mxu0 0
  %100 = vmatpush2.bf16.msra.mxu0 0
  %101 = vmatprep.subr.bf16.mxu0 0
  %102 = vmatpush2.bf16.msra.mxu0 0
  %103 = vmatprep.subr.bf16.mxu0 0
  %104 = vmatpush2.bf16.msra.mxu0 0
  %105 = vmatprep.subr.bf16.mxu0 0
  %106 = vmatpush2.bf16.msra.mxu0 0
  %107 = vmatprep.subr.bf16.mxu0 0
  %108 = vmatpush2.bf16.msra.mxu0 0
  %109 = vmatprep.subr.bf16.mxu0 0
  %110 = vmatpush2.bf16.msra.mxu0 0
  %111 = vmatprep.subr.bf16.mxu0 0
  %112 = vmatpush2.bf16.msra.mxu0 0
  %113 = vmatprep.mubr.bf16.mxu0 0
  %114 = vmatmul.mubr.bf16.gmra.mxu0 %v79
  %v115 = vpop.f32.mrf.mxu0
  %v116 = vadd.f32 %v64, %v115
  %v117 = vpop.f32.mrf.mxu0
  %v118 = vpop.f32.mrf.mxu0
  %v119 = vpop.f32.mrf.mxu0
  %120 = vdwg.mxu0
  %v121 = vpack.c.bf16 %v116, %v116
  %vm122 = vcmask 781312
  %123 = vst.msk [vmem:[%s5] sm:$0xf] %vm122, %v121
  // Predicated region
  $region22: #{_lambda_.39} parent=0 // pred_check
    _
  $region23: #{_lambda_.39} parent=0 // pred_check_branch
    %125 = sbr.rel (0) target = $region25
  $region24: #{_lambda_.39} parent=0 // pred_region
    _
  $region25: #{_lambda_.39} parent=0 // pred_fallthru
    _
  // Predicated region
  $region26: #{_lambda_.39} parent=0 // pred_check
    _
  $region27: #{_lambda_.39} parent=0 // pred_check_branch
    %127 = sbr.rel (0) target = $region29
  $region28: #{_lambda_.39} parent=0 // pred_region
    _
  $region29: #{_lambda_.39} parent=0 // pred_fallthru
    _

// kernel: _lambda_.41
$region0: #{_lambda_.41}
  #allocation0 [shape = 'u32[]', space=smem, size = 0x4, offset = 0x4, fixed_abs, tag = 'smem constant byte address 0x4 - core index']
  #allocation1 [shape = 'u32[144,128]{1,0:T(1,128)}', space=vmem, size = 0x12000, scoped, tag = 'internal scratch']
  %s0 = inlined_call_operand.vmem [shape: bf16[8,32], index: 0, kind: input, shape index: {}]
  %s1 = inlined_call_operand.vmem [shape: bf16[32,32], index: 1, kind: input, shape index: {}]
  %s2 = inlined_call_operand.vmem [shape: f32[1,32], index: 2, kind: input, shape index: {}]
  %s3 = inlined_call_operand.vmem [shape: bf16[8,32], index: 3, kind: output, shape index: {}]
  %s4 = sld [smem:[#allocation0]]
  $region22: #{_lambda_.41} parent=0
    _
  %s6 = ssub.s32 1, %s4
  %s7 = scalar_select 0, %s6, %s4
  // Predicated region
  $region2: #{_lambda_.41} parent=0 // pred_check
    _
  $region3: #{_lambda_.41} parent=0 // pred_check_branch
    %9 = sbr.rel (0) target = $region5
  $region4: #{_lambda_.41} parent=0 // pred_region
    _
  $region5: #{_lambda_.41} parent=0 // pred_fallthru
    _
  // Predicated region
  $region6: #{_lambda_.41} parent=0 // pred_check
    _
  $region7: #{_lambda_.41} parent=0 // pred_check_branch
    %11 = sbr.rel (0) target = $region9
  $region8: #{_lambda_.41} parent=0 // pred_region
    _
  $region9: #{_lambda_.41} parent=0 // pred_fallthru
    _
  // Predicated region
  $region10: #{_lambda_.41} parent=0 // pred_check
    _
  $region11: #{_lambda_.41} parent=0 // pred_check_branch
    %13 = sbr.rel (0) target = $region13
  $region12: #{_lambda_.41} parent=0 // pred_region
    _
  $region13: #{_lambda_.41} parent=0 // pred_fallthru
    _
  %v15 = vld [vmem:[%s0] sm:$0xf]
  %v16 = vld [vmem:[%s1] sm:$0xf]
  %v17 = vld [vmem:[%s1 + $0x4] sm:$0xf]
  %v18 = vld [vmem:[%s1 + $0x8] sm:$0xf]
  %v19 = vld [vmem:[%s1 + $0xc] sm:$0xf]
  %v20 = vld [vmem:[%s2] sm:$0x1]
  %v22 = vlaneseq
  %v23 = vshrl.u32 %v22, 7
  %v24 = vsub.s32 0, %v23
  %v25 = vrot.slane %v20, %v24
  %v31 = vunpack.c.l.b16 %v16
  %v32 = vunpack.c.l.b16 %v17
  %v33 = vunpack.c.l.b16 %v18
  %v34 = vunpack.c.l.b16 %v19
  %v35 = vpack.c.b16 %v32, %v31
  %v36 = vpack.c.b16 %v34, %v33
  %vm39 = vcmask 261120
  %v41 = vsel %vm39, %v15, 0
  %43 = vmatprep.subr.bf16.mxu0 0
  %44 = vmatpush1.bf16.msra.mxu0 0
  %45 = vmatprep.subr.bf16.mxu0 0
  %46 = vmatpush1.bf16.msra.mxu0 0
  %47 = vmatprep.subr.bf16.mxu0 0
  %48 = vmatpush1.bf16.msra.mxu0 0
  %49 = vmatprep.subr.bf16.mxu0 0
  %50 = vmatpush1.bf16.msra.mxu0 0
  %51 = vmatprep.subr.bf16.mxu0 0
  %52 = vmatpush1.bf16.msra.mxu0 0
  %53 = vmatprep.subr.bf16.mxu0 0
  %54 = vmatpush1.bf16.msra.mxu0 0
  %55 = vmatprep.subr.bf16.mxu0 0
  %56 = vmatpush1.bf16.msra.mxu0 %v36
  %57 = vmatprep.subr.bf16.mxu0 0
  %58 = vmatpush1.bf16.msra.mxu0 %v35
  %59 = vmatprep.subr.bf16.mxu0 0
  %60 = vmatpush2.bf16.msra.mxu0 0
  %61 = vmatprep.subr.bf16.mxu0 0
  %62 = vmatpush2.bf16.msra.mxu0 0
  %63 = vmatprep.subr.bf16.mxu0 0
  %64 = vmatpush2.bf16.msra.mxu0 0
  %65 = vmatprep.subr.bf16.mxu0 0
  %66 = vmatpush2.bf16.msra.mxu0 0
  %67 = vmatprep.subr.bf16.mxu0 0
  %68 = vmatpush2.bf16.msra.mxu0 0
  %69 = vmatprep.subr.bf16.mxu0 0
  %70 = vmatpush2.bf16.msra.mxu0 0
  %71 = vmatprep.subr.bf16.mxu0 0
  %72 = vmatpush2.bf16.msra.mxu0 0
  %73 = vmatprep.subr.bf16.mxu0 0
  %74 = vmatpush2.bf16.msra.mxu0 0
  %75 = vmatprep.mubr.bf16.mxu0 0
  %76 = vmatmul.mubr.bf16.gmra.mxu0 %v41
  %v77 = vpop.f32.mrf.mxu0
  %v78 = vadd.f32 %v25, %v77
  %v79 = vpop.f32.mrf.mxu0
  %v80 = vpop.f32.mrf.mxu0
  %v81 = vpop.f32.mrf.mxu0
  %82 = vdwg.mxu0
  %v83 = vpack.c.bf16 %v78, %v78
  %vm84 = vcmask 257024
  %85 = vst.msk [vmem:[%s3] sm:$0xf] %vm84, %v83
  // Predicated region
  $region14: #{_lambda_.41} parent=0 // pred_check
    _
  $region15: #{_lambda_.41} parent=0 // pred_check_branch
    %87 = sbr.rel (0) target = $region17
  $region16: #{_lambda_.41} parent=0 // pred_region
    _
  $region17: #{_lambda_.41} parent=0 // pred_fallthru
    _
  // Predicated region
  $region18: #{_lambda_.41} parent=0 // pred_check
    _
  $region19: #{_lambda_.41} parent=0 // pred_check_branch
    %89 = sbr.rel (0) target = $region21
  $region20: #{_lambda_.41} parent=0 // pred_region
    _
  $region21: #{_lambda_.41} parent=0 // pred_fallthru
    _

// kernel: _lambda_.40
$region0: #{_lambda_.40}
  #allocation0 [shape = 'u32[]', space=smem, size = 0x4, offset = 0x4, fixed_abs, tag = 'smem constant byte address 0x4 - core index']
  #allocation1 [shape = 'u32[144,128]{1,0:T(1,128)}', space=vmem, size = 0x12000, scoped, tag = 'internal scratch']
  %s0 = inlined_call_operand.vmem [shape: bf16[4,2,96], index: 0, kind: input, shape index: {}]
  %s1 = inlined_call_operand.vmem [shape: bf16[4,2,32], index: 1, kind: output, shape index: {}]
  %s2 = sld [smem:[#allocation0]]
  $region37: #{_lambda_.40} parent=0
    _
  %s4 = ssub.s32 1, %s2
  %s5 = scalar_select 0, %s4, %s2
  loop: start=0, step=1, limit=6
  $region2: #{_lambda_.40} parent=0 // loop_pre_header
    _
  $region3: #{_lambda_.40} parent=0 // loop_header
    %s7 = sphi 0, %s11
    %p8 = scmp.ge.s32.totalorder %s7, 6
    %s17 = sphi 0, %s19
    %s20 = sphi 0, %s17
    %s21 = sphi 0, %s20
    %s37 = sphi 0, %s21
    %s43 = sphi 0, %s45
    %s46 = sphi 0, %s43
    %s47 = sphi 0, %s46
    %s63 = sphi 0, %s47
  $region4: #{_lambda_.40} parent=0 // loop_header_branch
    %10 = sbr.rel (%p8) target = $region8
  $region5: #{_lambda_.40} parent=0 // loop_body
    %s12 = ssub.s32 %s7, 1
    %s13 = ssub.s32 %s7, 2
    %s14 = sadd.s32 %s7, 1
    %s15 = ssub.s32 %s7, %s14
    %p16 = scmp.eq.s32.totalorder %s15, 0
    %s18 = sadd.s32 %s17, 1
    %s19 = scalar_select %p16, %s17, %s18
    %p22 = pneg %p16
    %p23 = scmp.eq.s32.totalorder %s7, 3
    %p24 = por %p22, %p23
    %p25 = scmp.ne.s32.totalorder %s17, %s20
    %p26 = scmp.eq.s32.totalorder %s7, 0
    %p27 = por %p25, %p26
    %p28 = scmp.ne.s32.totalorder %s17, %s20
    %p29 = scmp.eq.s32.totalorder %s12, 3
    %p30 = por %p28, %p29
    %p31 = scmp.ne.s32.totalorder %s20, %s21
    %p32 = scmp.eq.s32.totalorder %s12, 0
    %p33 = por %p31, %p32
    %p34 = scmp.ne.s32.totalorder %s20, %s21
    %p35 = scmp.eq.s32.totalorder %s13, 3
    %p36 = por %p34, %p35
    %p38 = scmp.ne.s32.totalorder %s21, %s37
    %p39 = scmp.eq.s32.totalorder %s13, 0
    %p40 = por %p38, %p39
    %s41 = ssub.s32 %s7, %s14
    %p42 = scmp.eq.s32.totalorder %s41, 0
    %s44 = sadd.s32 %s43, 1
    %s45 = scalar_select %p42, %s43, %s44
    %p48 = pneg %p42
    %p49 = scmp.eq.s32.totalorder %s7, 3
    %p50 = por %p48, %p49
    %p51 = scmp.ne.s32.totalorder %s43, %s46
    %p52 = scmp.eq.s32.totalorder %s7, 0
    %p53 = por %p51, %p52
    %p54 = scmp.ne.s32.totalorder %s43, %s46
    %p55 = scmp.eq.s32.totalorder %s12, 3
    %p56 = por %p54, %p55
    %p57 = scmp.ne.s32.totalorder %s46, %s47
    %p58 = scmp.eq.s32.totalorder %s12, 0
    %p59 = por %p57, %p58
    %p60 = scmp.ne.s32.totalorder %s46, %s47
    %p61 = scmp.eq.s32.totalorder %s13, 3
    %p62 = por %p60, %p61
    %p64 = scmp.ne.s32.totalorder %s47, %s63
    %p65 = scmp.eq.s32.totalorder %s13, 0
    %p66 = por %p64, %p65
    %p67 = scmp.le.s32.totalorder 1, %s7
    %p68 = scmp.lt.s32.totalorder %s7, 5
    %p69 = pnand %p67, %p68
    %p70 = pneg %p69
    // Predicated region
    $region9: #{_lambda_.40} parent=5 // pred_check
      _
    $region10: #{_lambda_.40} parent=5 // pred_check_branch
      %72 = sbr.rel (%p69) target = $region12
    $region11: #{_lambda_.40} parent=5 // pred_region
      %s73 = ssub.s32 %s7, 1
    $region12: #{_lambda_.40} parent=5 // pred_fallthru
      _
    %p74 = scmp.lt.s32.totalorder %s7, 4
    // Predicated region
    $region13: #{_lambda_.40} parent=5 // pred_check
      %p75 = pneg %p74
    $region14: #{_lambda_.40} parent=5 // pred_check_branch
      %77 = sbr.rel (%p75) target = $region16
    $region15: #{_lambda_.40} parent=5 // pred_region
      // Predicated region
      $region17: #{_lambda_.40} parent=15 // pred_check
        %p78 = pneg %p27
      $region18: #{_lambda_.40} parent=15 // pred_check_branch
        %80 = sbr.rel (%p78) target = $region20
      $region19: #{_lambda_.40} parent=15 // pred_region
        %p81 = scmp.lt.s32.totalorder %s7, 3
        %s82 = scalar_select %p81, %s7, 3
        %s83 = scalar_lea.vmem %s0, %s82
      $region20: #{_lambda_.40} parent=15 // pred_fallthru
        _
    $region16: #{_lambda_.40} parent=5 // pred_fallthru
      _
    %p84 = scmp.le.s32.totalorder 1, %s7
    %p85 = scmp.lt.s32.totalorder %s7, 5
    %p86 = pnand %p84, %p85
    %p87 = pneg %p86
    // Predicated region
    $region21: #{_lambda_.40} parent=5 // pred_check
      _
    $region22: #{_lambda_.40} parent=5 // pred_check_branch
      %89 = sbr.rel (%p86) target = $region24
    $region23: #{_lambda_.40} parent=5 // pred_region
      %s90 = ssub.s32 %s7, 1
      %p91 = scmp.lt.s32.totalorder %s12, 3
      %s92 = scalar_select %p91, %s12, 3
      %s93 = scalar_lea.vmem %s0, %s92
      %p94 = pneg %p33
      %p95 = pneg %p30
      %p96 = pneg %p59
      %p97 = pneg %p56
      %p98 = scmp.lt.s32.totalorder %s12, 3
      %s99 = scalar_select %p98, %s12, 3
      %s100 = scalar_lea.vmem %s1, %s99
      %p101 = scmp.lt.s32.totalorder %s12, 3
      %s102 = scalar_select %p101, %s12, 3
      %s103 = scalar_lea.vmem %s0, %s102
      %p104 = scmp.lt.s32.totalorder %s12, 3
      %s105 = scalar_select %p104, %s12, 3
      %s106 = scalar_lea.vmem %s1, %s105
      %v108 = vld [vmem:[%s103] sm:$0x1]
      %v109 = vunpack.c.l.bf16 %v108
      %v110 = vmul.f32 %v109, 0.35355338
      %v111 = vpack.c.bf16 %v110, %v110
      %v114 = vunpack.c.l.s4 1966171168
      %v115 = vunpack.c.0.s8 %v114
      %v116 = vlaneseq
      %v117 = vshrl.u32 %v116, 7
      %v118 = vsub.s32 %v115, %v117
      %v119 = vrot.slane %v108, %v118
      %v121 = vunpack.c.l.s4 1966171168
      %v122 = vunpack.c.0.s8 %v121
      %v123 = vlaneseq
      %v124 = vshrl.u32 %v123, 7
      %v125 = vsub.s32 %v122, %v124
      %v126 = vrot.slane %v119, %v125
      %127 = vrot.lane.b32.xlu0 %v126, 96
      %v128 = vpop.permute.xlu0 %127
      %vm129 = vcmask 64512
      %v131 = vsel %vm129, %v111, 0
      %v134 = vsel %vm129, %v128, 0
      %136 = vmatprep.subr.bf16.mxu0 0
      %137 = vmatpush1.bf16.xpose.msra.mxu0 0
      %138 = vmatprep.subr.bf16.mxu0 0
      %139 = vmatpush1.bf16.xpose.msra.mxu0 0
      %140 = vmatprep.subr.bf16.mxu0 0
      %141 = vmatpush1.bf16.xpose.msra.mxu0 0
      %142 = vmatprep.subr.bf16.mxu0 0
      %143 = vmatpush1.bf16.xpose.msra.mxu0 0
      %144 = vmatprep.subr.bf16.mxu0 0
      %145 = vmatpush1.bf16.xpose.msra.mxu0 0
      %146 = vmatprep.subr.bf16.mxu0 0
      %147 = vmatpush1.bf16.xpose.msra.mxu0 0
      %148 = vmatprep.subr.bf16.mxu0 0
      %149 = vmatpush1.bf16.xpose.msra.mxu0 0
      %150 = vmatprep.subr.bf16.mxu0 0
      %151 = vmatpush1.bf16.xpose.msra.mxu0 %v134
      %152 = vmatprep.subr.bf16.mxu0 0
      %153 = vmatpush2.bf16.xpose.msra.mxu0 0
      %154 = vmatprep.subr.bf16.mxu0 0
      %155 = vmatpush2.bf16.xpose.msra.mxu0 0
      %156 = vmatprep.subr.bf16.mxu0 0
      %157 = vmatpush2.bf16.xpose.msra.mxu0 0
      %158 = vmatprep.subr.bf16.mxu0 0
      %159 = vmatpush2.bf16.xpose.msra.mxu0 0
      %160 = vmatprep.subr.bf16.mxu0 0
      %161 = vmatpush2.bf16.xpose.msra.mxu0 0
      %162 = vmatprep.subr.bf16.mxu0 0
      %163 = vmatpush2.bf16.xpose.msra.mxu0 0
      %164 = vmatprep.subr.bf16.mxu0 0
      %165 = vmatpush2.bf16.xpose.msra.mxu0 0
      %166 = vmatprep.subr.bf16.mxu0 0
      %167 = vmatpush2.bf16.xpose.msra.mxu0 0
      %168 = vmatprep.mubr.bf16.mxu0 0
      %169 = vmatmul.mubr.bf16.gmra.mxu0 %v131
      %v170 = vpop.f32.mrf.mxu0
      %v171 = vadd.f32 0.0, %v170
      %v172 = vpop.f32.mrf.mxu0
      %v173 = vpop.f32.mrf.mxu0
      %v174 = vpop.f32.mrf.mxu0
      %175 = vdwg.mxu0
      %vm176 = vcmask 9216
      %v177 = vsel %vm176, %v171, -inf
      %178 = vmax.xlane.f32.xlu0 %v177
      %v179 = vpop.xlane.xlu0 %178
      %v180 = vsub.f32 %v171, %v179
      %v181 = vmul.f32 %v180, 1.442695
      %v182 = vpow.pop %v181
      %v183 = vsel %vm176, %v182, 0.0
      %184 = vadd.xlane.f32.xlu0 %v183
      %v185 = vpop.xlane.xlu0 %184
      %v186 = vrcp.pop %v185
      %v187 = vmul.f32 %v182, %v186
      %v188 = vpack.c.bf16 %v187, %v187
      %189 = vrot.lane.b32.xlu0 %v126, 64
      %v190 = vpop.permute.xlu0 %189
      %vm191 = vcmask 15360
      %v193 = vsel %vm191, %v188, 0
      %vm195 = vcmask 1040384
      %v197 = vsel %vm195, %v190, 0
      %199 = vmatprep.subr.bf16.mxu0 0
      %200 = vmatpush1.bf16.msra.mxu0 0
      %201 = vmatprep.subr.bf16.mxu0 0
      %202 = vmatpush1.bf16.msra.mxu0 0
      %203 = vmatprep.subr.bf16.mxu0 0
      %204 = vmatpush1.bf16.msra.mxu0 0
      %205 = vmatprep.subr.bf16.mxu0 0
      %206 = vmatpush1.bf16.msra.mxu0 0
      %207 = vmatprep.subr.bf16.mxu0 0
      %208 = vmatpush1.bf16.msra.mxu0 0
      %209 = vmatprep.subr.bf16.mxu0 0
      %210 = vmatpush1.bf16.msra.mxu0 0
      %211 = vmatprep.subr.bf16.mxu0 0
      %212 = vmatpush1.bf16.msra.mxu0 0
      %213 = vmatprep.subr.bf16.mxu0 0
      %214 = vmatpush1.bf16.msra.mxu0 %v197
      %215 = vmatprep.subr.bf16.mxu0 0
      %216 = vmatpush2.bf16.msra.mxu0 0
      %217 = vmatprep.subr.bf16.mxu0 0
      %218 = vmatpush2.bf16.msra.mxu0 0
      %219 = vmatprep.subr.bf16.mxu0 0
      %220 = vmatpush2.bf16.msra.mxu0 0
      %221 = vmatprep.subr.bf16.mxu0 0
      %222 = vmatpush2.bf16.msra.mxu0 0
      %223 = vmatprep.subr.bf16.mxu0 0
      %224 = vmatpush2.bf16.msra.mxu0 0
      %225 = vmatprep.subr.bf16.mxu0 0
      %226 = vmatpush2.bf16.msra.mxu0 0
      %227 = vmatprep.subr.bf16.mxu0 0
      %228 = vmatpush2.bf16.msra.mxu0 0
      %229 = vmatprep.subr.bf16.mxu0 0
      %230 = vmatpush2.bf16.msra.mxu0 0
      %231 = vmatprep.mubr.bf16.mxu0 0
      %232 = vmatmul.mubr.bf16.gmra.mxu0 %v193
      %v233 = vpop.f32.mrf.mxu0
      %v234 = vadd.f32 0.0, %v233
      %v235 = vpop.f32.mrf.mxu0
      %v236 = vpop.f32.mrf.mxu0
      %v237 = vpop.f32.mrf.mxu0
      %238 = vdwg.mxu0
      %v239 = vpack.c.bf16 %v234, %v234
      %vm240 = vcmask 57344
      %241 = vst.msk [vmem:[%s106] sm:$0x1] %vm240, %v239
      %v242 = vld [vmem:[%s103] sm:$0x1]
      %v243 = vunpack.c.l.bf16 %v242
      %v244 = vmul.f32 %v243, 0.35355338
      %v245 = vpack.c.bf16 %v244, %v244
      %247 = vrot.lane.b32.xlu0 %v245, 120
      %v248 = vpop.permute.xlu0 %247
      %v251 = vunpack.c.l.s4 1966171168
      %v252 = vunpack.c.0.s8 %v251
      %v253 = vlaneseq
      %v254 = vshrl.u32 %v253, 7
      %v255 = vsub.s32 %v252, %v254
      %v256 = vrot.slane %v242, %v255
      %v258 = vunpack.c.l.s4 1966171168
      %v259 = vunpack.c.0.s8 %v258
      %v260 = vlaneseq
      %v261 = vshrl.u32 %v260, 7
      %v262 = vsub.s32 %v259, %v261
      %v263 = vrot.slane %v256, %v262
      %264 = vrot.lane.b32.xlu0 %v263, 88
      %v265 = vpop.permute.xlu0 %264
      %v267 = vsel %vm129, %v248, 0
      %v270 = vsel %vm129, %v265, 0
      %272 = vmatprep.subr.bf16.mxu0 0
      %273 = vmatpush1.bf16.xpose.msra.mxu0 0
      %274 = vmatprep.subr.bf16.mxu0 0
      %275 = vmatpush1.bf16.xpose.msra.mxu0 0
      %276 = vmatprep.subr.bf16.mxu0 0
      %277 = vmatpush1.bf16.xpose.msra.mxu0 0
      %278 = vmatprep.subr.bf16.mxu0 0
      %279 = vmatpush1.bf16.xpose.msra.mxu0 0
      %280 = vmatprep.subr.bf16.mxu0 0
      %281 = vmatpush1.bf16.xpose.msra.mxu0 0
      %282 = vmatprep.subr.bf16.mxu0 0
      %283 = vmatpush1.bf16.xpose.msra.mxu0 0
      %284 = vmatprep.subr.bf16.mxu0 0
      %285 = vmatpush1.bf16.xpose.msra.mxu0 0
      %286 = vmatprep.subr.bf16.mxu0 0
      %287 = vmatpush1.bf16.xpose.msra.mxu0 %v270
      %288 = vmatprep.subr.bf16.mxu0 0
      %289 = vmatpush2.bf16.xpose.msra.mxu0 0
      %290 = vmatprep.subr.bf16.mxu0 0
      %291 = vmatpush2.bf16.xpose.msra.mxu0 0
      %292 = vmatprep.subr.bf16.mxu0 0
      %293 = vmatpush2.bf16.xpose.msra.mxu0 0
      %294 = vmatprep.subr.bf16.mxu0 0
      %295 = vmatpush2.bf16.xpose.msra.mxu0 0
      %296 = vmatprep.subr.bf16.mxu0 0
      %297 = vmatpush2.bf16.xpose.msra.mxu0 0
      %298 = vmatprep.subr.bf16.mxu0 0
      %299 = vmatpush2.bf16.xpose.msra.mxu0 0
      %300 = vmatprep.subr.bf16.mxu0 0
      %301 = vmatpush2.bf16.xpose.msra.mxu0 0
      %302 = vmatprep.subr.bf16.mxu0 0
      %303 = vmatpush2.bf16.xpose.msra.mxu0 0
      %304 = vmatprep.mubr.bf16.mxu0 0
      %305 = vmatmul.mubr.bf16.gmra.mxu0 %v267
      %v306 = vpop.f32.mrf.mxu0
      %v307 = vadd.f32 0.0, %v306
      %v308 = vpop.f32.mrf.mxu0
      %v309 = vpop.f32.mrf.mxu0
      %v310 = vpop.f32.mrf.mxu0
      %311 = vdwg.mxu0
      %v312 = vsel %vm176, %v307, -inf
      %313 = vmax.xlane.f32.xlu0 %v312
      %v314 = vpop.xlane.xlu0 %313
      %v315 = vsub.f32 %v307, %v314
      %v316 = vmul.f32 %v315, 1.442695
      %v317 = vpow.pop %v316
      %v318 = vsel %vm176, %v317, 0.0
      %319 = vadd.xlane.f32.xlu0 %v318
      %v320 = vpop.xlane.xlu0 %319
      %v321 = vrcp.pop %v320
      %v322 = vmul.f32 %v317, %v321
      %v323 = vpack.c.bf16 %v322, %v322
      %324 = vrot.lane.b32.xlu0 %v263, 56
      %v325 = vpop.permute.xlu0 %324
      %v327 = vsel %vm191, %v323, 0
      %v330 = vsel %vm195, %v325, 0
      %332 = vmatprep.subr.bf16.mxu0 0
      %333 = vmatpush1.bf16.msra.mxu0 0
      %334 = vmatprep.subr.bf16.mxu0 0
      %335 = vmatpush1.bf16.msra.mxu0 0
      %336 = vmatprep.subr.bf16.mxu0 0
      %337 = vmatpush1.bf16.msra.mxu0 0
      %338 = vmatprep.subr.bf16.mxu0 0
      %339 = vmatpush1.bf16.msra.mxu0 0
      %340 = vmatprep.subr.bf16.mxu0 0
      %341 = vmatpush1.bf16.msra.mxu0 0
      %342 = vmatprep.subr.bf16.mxu0 0
      %343 = vmatpush1.bf16.msra.mxu0 0
      %344 = vmatprep.subr.bf16.mxu0 0
      %345 = vmatpush1.bf16.msra.mxu0 0
      %346 = vmatprep.subr.bf16.mxu0 0
      %347 = vmatpush1.bf16.msra.mxu0 %v330
      %348 = vmatprep.subr.bf16.mxu0 0
      %349 = vmatpush2.bf16.msra.mxu0 0
      %350 = vmatprep.subr.bf16.mxu0 0
      %351 = vmatpush2.bf16.msra.mxu0 0
      %352 = vmatprep.subr.bf16.mxu0 0
      %353 = vmatpush2.bf16.msra.mxu0 0
      %354 = vmatprep.subr.bf16.mxu0 0
      %355 = vmatpush2.bf16.msra.mxu0 0
      %356 = vmatprep.subr.bf16.mxu0 0
      %357 = vmatpush2.bf16.msra.mxu0 0
      %358 = vmatprep.subr.bf16.mxu0 0
      %359 = vmatpush2.bf16.msra.mxu0 0
      %360 = vmatprep.subr.bf16.mxu0 0
      %361 = vmatpush2.bf16.msra.mxu0 0
      %362 = vmatprep.subr.bf16.mxu0 0
      %363 = vmatpush2.bf16.msra.mxu0 0
      %364 = vmatprep.mubr.bf16.mxu0 0
      %365 = vmatmul.mubr.bf16.gmra.mxu0 %v327
      %v366 = vpop.f32.mrf.mxu0
      %v367 = vadd.f32 0.0, %v366
      %v368 = vpop.f32.mrf.mxu0
      %v369 = vpop.f32.mrf.mxu0
      %v370 = vpop.f32.mrf.mxu0
      %371 = vdwg.mxu0
      %v372 = vpack.c.bf16 %v367, %v367
      %v375 = vunpack.c.l.s4 1966171168
      %v376 = vunpack.c.0.s8 %v375
      %v377 = vlaneseq
      %v378 = vshrl.u32 %v377, 7
      %v379 = vsub.s32 %v376, %v378
      %v380 = vrot.slane %v372, %v379
      %v382 = vunpack.c.l.s4 1966171168
      %v383 = vunpack.c.0.s8 %v382
      %v384 = vlaneseq
      %v385 = vshrl.u32 %v384, 7
      %v386 = vsub.s32 %v383, %v385
      %v387 = vrot.slane %v380, %v386
      %388 = vrot.lane.b32.xlu0 %v387, 8
      %v389 = vpop.permute.xlu0 %388
      %vm391 = vcmask 122944
      %392 = vst.msk [vmem:[%s106] sm:$0x1] %vm391, %v389
      %v393 = vld [vmem:[%s103] sm:$0x1]
      %v394 = vunpack.c.l.bf16 %v393
      %v395 = vmul.f32 %v394, 0.35355338
      %v396 = vpack.c.bf16 %v395, %v395
      %398 = vrot.lane.b32.xlu0 %v396, 112
      %v399 = vpop.permute.xlu0 %398
      %v402 = vunpack.c.l.s4 1966171168
      %v403 = vunpack.c.0.s8 %v402
      %v404 = vlaneseq
      %v405 = vshrl.u32 %v404, 7
      %v406 = vsub.s32 %v403, %v405
      %v407 = vrot.slane %v393, %v406
      %v409 = vunpack.c.l.s4 1966171168
      %v410 = vunpack.c.0.s8 %v409
      %v411 = vlaneseq
      %v412 = vshrl.u32 %v411, 7
      %v413 = vsub.s32 %v410, %v412
      %v414 = vrot.slane %v407, %v413
      %415 = vrot.lane.b32.xlu0 %v414, 80
      %v416 = vpop.permute.xlu0 %415
      %v418 = vsel %vm129, %v399, 0
      %v421 = vsel %vm129, %v416, 0
      %423 = vmatprep.subr.bf16.mxu0 0
      %424 = vmatpush1.bf16.xpose.msra.mxu0 0
      %425 = vmatprep.subr.bf16.mxu0 0
      %426 = vmatpush1.bf16.xpose.msra.mxu0 0
      %427 = vmatprep.subr.bf16.mxu0 0
      %428 = vmatpush1.bf16.xpose.msra.mxu0 0
      %429 = vmatprep.subr.bf16.mxu0 0
      %430 = vmatpush1.bf16.xpose.msra.mxu0 0
      %431 = vmatprep.subr.bf16.mxu0 0
      %432 = vmatpush1.bf16.xpose.msra.mxu0 0
      %433 = vmatprep.subr.bf16.mxu0 0
      %434 = vmatpush1.bf16.xpose.msra.mxu0 0
      %435 = vmatprep.subr.bf16.mxu0 0
      %436 = vmatpush1.bf16.xpose.msra.mxu0 0
      %437 = vmatprep.subr.bf16.mxu0 0
      %438 = vmatpush1.bf16.xpose.msra.mxu0 %v421
      %439 = vmatprep.subr.bf16.mxu0 0
      %440 = vmatpush2.bf16.xpose.msra.mxu0 0
      %441 = vmatprep.subr.bf16.mxu0 0
      %442 = vmatpush2.bf16.xpose.msra.mxu0 0
      %443 = vmatprep.subr.bf16.mxu0 0
      %444 = vmatpush2.bf16.xpose.msra.mxu0 0
      %445 = vmatprep.subr.bf16.mxu0 0
      %446 = vmatpush2.bf16.xpose.msra.mxu0 0
      %447 = vmatprep.subr.bf16.mxu0 0
      %448 = vmatpush2.bf16.xpose.msra.mxu0 0
      %449 = vmatprep.subr.bf16.mxu0 0
      %450 = vmatpush2.bf16.xpose.msra.mxu0 0
      %451 = vmatprep.subr.bf16.mxu0 0
      %452 = vmatpush2.bf16.xpose.msra.mxu0 0
      %453 = vmatprep.subr.bf16.mxu0 0
      %454 = vmatpush2.bf16.xpose.msra.mxu0 0
      %455 = vmatprep.mubr.bf16.mxu0 0
      %456 = vmatmul.mubr.bf16.gmra.mxu0 %v418
      %v457 = vpop.f32.mrf.mxu0
      %v458 = vadd.f32 0.0, %v457
      %v459 = vpop.f32.mrf.mxu0
      %v460 = vpop.f32.mrf.mxu0
      %v461 = vpop.f32.mrf.mxu0
      %462 = vdwg.mxu0
      %v463 = vsel %vm176, %v458, -inf
      %464 = vmax.xlane.f32.xlu0 %v463
      %v465 = vpop.xlane.xlu0 %464
      %v466 = vsub.f32 %v458, %v465
      %v467 = vmul.f32 %v466, 1.442695
      %v468 = vpow.pop %v467
      %v469 = vsel %vm176, %v468, 0.0
      %470 = vadd.xlane.f32.xlu0 %v469
      %v471 = vpop.xlane.xlu0 %470
      %v472 = vrcp.pop %v471
      %v473 = vmul.f32 %v468, %v472
      %v474 = vpack.c.bf16 %v473, %v473
      %475 = vrot.lane.b32.xlu0 %v414, 48
      %v476 = vpop.permute.xlu0 %475
      %v478 = vsel %vm191, %v474, 0
      %v481 = vsel %vm195, %v476, 0
      %483 = vmatprep.subr.bf16.mxu0 0
      %484 = vmatpush1.bf16.msra.mxu0 0
      %485 = vmatprep.subr.bf16.mxu0 0
      %486 = vmatpush1.bf16.msra.mxu0 0
      %487 = vmatprep.subr.bf16.mxu0 0
      %488 = vmatpush1.bf16.msra.mxu0 0
      %489 = vmatprep.subr.bf16.mxu0 0
      %490 = vmatpush1.bf16.msra.mxu0 0
      %491 = vmatprep.subr.bf16.mxu0 0
      %492 = vmatpush1.bf16.msra.mxu0 0
      %493 = vmatprep.subr.bf16.mxu0 0
      %494 = vmatpush1.bf16.msra.mxu0 0
      %495 = vmatprep.subr.bf16.mxu0 0
      %496 = vmatpush1.bf16.msra.mxu0 0
      %497 = vmatprep.subr.bf16.mxu0 0
      %498 = vmatpush1.bf16.msra.mxu0 %v481
      %499 = vmatprep.subr.bf16.mxu0 0
      %500 = vmatpush2.bf16.msra.mxu0 0
      %501 = vmatprep.subr.bf16.mxu0 0
      %502 = vmatpush2.bf16.msra.mxu0 0
      %503 = vmatprep.subr.bf16.mxu0 0
      %504 = vmatpush2.bf16.msra.mxu0 0
      %505 = vmatprep.subr.bf16.mxu0 0
      %506 = vmatpush2.bf16.msra.mxu0 0
      %507 = vmatprep.subr.bf16.mxu0 0
      %508 = vmatpush2.bf16.msra.mxu0 0
      %509 = vmatprep.subr.bf16.mxu0 0
      %510 = vmatpush2.bf16.msra.mxu0 0
      %511 = vmatprep.subr.bf16.mxu0 0
      %512 = vmatpush2.bf16.msra.mxu0 0
      %513 = vmatprep.subr.bf16.mxu0 0
      %514 = vmatpush2.bf16.msra.mxu0 0
      %515 = vmatprep.mubr.bf16.mxu0 0
      %516 = vmatmul.mubr.bf16.gmra.mxu0 %v478
      %v517 = vpop.f32.mrf.mxu0
      %v518 = vadd.f32 0.0, %v517
      %v519 = vpop.f32.mrf.mxu0
      %v520 = vpop.f32.mrf.mxu0
      %v521 = vpop.f32.mrf.mxu0
      %522 = vdwg.mxu0
      %v523 = vpack.c.bf16 %v518, %v518
      %v526 = vunpack.c.l.s4 1966171168
      %v527 = vunpack.c.0.s8 %v526
      %v528 = vlaneseq
      %v529 = vshrl.u32 %v528, 7
      %v530 = vsub.s32 %v527, %v529
      %v531 = vrot.slane %v523, %v530
      %v533 = vunpack.c.l.s4 1966171168
      %v534 = vunpack.c.0.s8 %v533
      %v535 = vlaneseq
      %v536 = vshrl.u32 %v535, 7
      %v537 = vsub.s32 %v534, %v536
      %v538 = vrot.slane %v531, %v537
      %539 = vrot.lane.b32.xlu0 %v538, 16
      %v540 = vpop.permute.xlu0 %539
      %vm542 = vcmask 188544
      %543 = vst.msk [vmem:[%s106] sm:$0x1] %vm542, %v540
      %v544 = vld [vmem:[%s103] sm:$0x1]
      %v545 = vunpack.c.l.bf16 %v544
      %v546 = vmul.f32 %v545, 0.35355338
      %v547 = vpack.c.bf16 %v546, %v546
      %549 = vrot.lane.b32.xlu0 %v547, 104
      %v550 = vpop.permute.xlu0 %549
      %v553 = vunpack.c.l.s4 1966171168
      %v554 = vunpack.c.0.s8 %v553
      %v555 = vlaneseq
      %v556 = vshrl.u32 %v555, 7
      %v557 = vsub.s32 %v554, %v556
      %v558 = vrot.slane %v544, %v557
      %v560 = vunpack.c.l.s4 1966171168
      %v561 = vunpack.c.0.s8 %v560
      %v562 = vlaneseq
      %v563 = vshrl.u32 %v562, 7
      %v564 = vsub.s32 %v561, %v563
      %v565 = vrot.slane %v558, %v564
      %566 = vrot.lane.b32.xlu0 %v565, 72
      %v567 = vpop.permute.xlu0 %566
      %v569 = vsel %vm129, %v550, 0
      %v572 = vsel %vm129, %v567, 0
      %574 = vmatprep.subr.bf16.mxu0 0
      %575 = vmatpush1.bf16.xpose.msra.mxu0 0
      %576 = vmatprep.subr.bf16.mxu0 0
      %577 = vmatpush1.bf16.xpose.msra.mxu0 0
      %578 = vmatprep.subr.bf16.mxu0 0
      %579 = vmatpush1.bf16.xpose.msra.mxu0 0
      %580 = vmatprep.subr.bf16.mxu0 0
      %581 = vmatpush1.bf16.xpose.msra.mxu0 0
      %582 = vmatprep.subr.bf16.mxu0 0
      %583 = vmatpush1.bf16.xpose.msra.mxu0 0
      %584 = vmatprep.subr.bf16.mxu0 0
      %585 = vmatpush1.bf16.xpose.msra.mxu0 0
      %586 = vmatprep.subr.bf16.mxu0 0
      %587 = vmatpush1.bf16.xpose.msra.mxu0 0
      %588 = vmatprep.subr.bf16.mxu0 0
      %589 = vmatpush1.bf16.xpose.msra.mxu0 %v572
      %590 = vmatprep.subr.bf16.mxu0 0
      %591 = vmatpush2.bf16.xpose.msra.mxu0 0
      %592 = vmatprep.subr.bf16.mxu0 0
      %593 = vmatpush2.bf16.xpose.msra.mxu0 0
      %594 = vmatprep.subr.bf16.mxu0 0
      %595 = vmatpush2.bf16.xpose.msra.mxu0 0
      %596 = vmatprep.subr.bf16.mxu0 0
      %597 = vmatpush2.bf16.xpose.msra.mxu0 0
      %598 = vmatprep.subr.bf16.mxu0 0
      %599 = vmatpush2.bf16.xpose.msra.mxu0 0
      %600 = vmatprep.subr.bf16.mxu0 0
      %601 = vmatpush2.bf16.xpose.msra.mxu0 0
      %602 = vmatprep.subr.bf16.mxu0 0
      %603 = vmatpush2.bf16.xpose.msra.mxu0 0
      %604 = vmatprep.subr.bf16.mxu0 0
      %605 = vmatpush2.bf16.xpose.msra.mxu0 0
      %606 = vmatprep.mubr.bf16.mxu0 0
      %607 = vmatmul.mubr.bf16.gmra.mxu0 %v569
      %v608 = vpop.f32.mrf.mxu0
      %v609 = vadd.f32 0.0, %v608
      %v610 = vpop.f32.mrf.mxu0
      %v611 = vpop.f32.mrf.mxu0
      %v612 = vpop.f32.mrf.mxu0
      %613 = vdwg.mxu0
      %v614 = vsel %vm176, %v609, -inf
      %615 = vmax.xlane.f32.xlu0 %v614
      %v616 = vpop.xlane.xlu0 %615
      %v617 = vsub.f32 %v609, %v616
      %v618 = vmul.f32 %v617, 1.442695
      %v619 = vpow.pop %v618
      %v620 = vsel %vm176, %v619, 0.0
      %621 = vadd.xlane.f32.xlu0 %v620
      %v622 = vpop.xlane.xlu0 %621
      %v623 = vrcp.pop %v622
      %v624 = vmul.f32 %v619, %v623
      %v625 = vpack.c.bf16 %v624, %v624
      %626 = vrot.lane.b32.xlu0 %v565, 40
      %v627 = vpop.permute.xlu0 %626
      %v629 = vsel %vm191, %v625, 0
      %v632 = vsel %vm195, %v627, 0
      %634 = vmatprep.subr.bf16.mxu0 0
      %635 = vmatpush1.bf16.msra.mxu0 0
      %636 = vmatprep.subr.bf16.mxu0 0
      %637 = vmatpush1.bf16.msra.mxu0 0
      %638 = vmatprep.subr.bf16.mxu0 0
      %639 = vmatpush1.bf16.msra.mxu0 0
      %640 = vmatprep.subr.bf16.mxu0 0
      %641 = vmatpush1.bf16.msra.mxu0 0
      %642 = vmatprep.subr.bf16.mxu0 0
      %643 = vmatpush1.bf16.msra.mxu0 0
      %644 = vmatprep.subr.bf16.mxu0 0
      %645 = vmatpush1.bf16.msra.mxu0 0
      %646 = vmatprep.subr.bf16.mxu0 0
      %647 = vmatpush1.bf16.msra.mxu0 0
      %648 = vmatprep.subr.bf16.mxu0 0
      %649 = vmatpush1.bf16.msra.mxu0 %v632
      %650 = vmatprep.subr.bf16.mxu0 0
      %651 = vmatpush2.bf16.msra.mxu0 0
      %652 = vmatprep.subr.bf16.mxu0 0
      %653 = vmatpush2.bf16.msra.mxu0 0
      %654 = vmatprep.subr.bf16.mxu0 0
      %655 = vmatpush2.bf16.msra.mxu0 0
      %656 = vmatprep.subr.bf16.mxu0 0
      %657 = vmatpush2.bf16.msra.mxu0 0
      %658 = vmatprep.subr.bf16.mxu0 0
      %659 = vmatpush2.bf16.msra.mxu0 0
      %660 = vmatprep.subr.bf16.mxu0 0
      %661 = vmatpush2.bf16.msra.mxu0 0
      %662 = vmatprep.subr.bf16.mxu0 0
      %663 = vmatpush2.bf16.msra.mxu0 0
      %664 = vmatprep.subr.bf16.mxu0 0
      %665 = vmatpush2.bf16.msra.mxu0 0
      %666 = vmatprep.mubr.bf16.mxu0 0
      %667 = vmatmul.mubr.bf16.gmra.mxu0 %v629
      %v668 = vpop.f32.mrf.mxu0
      %v669 = vadd.f32 0.0, %v668
      %v670 = vpop.f32.mrf.mxu0
      %v671 = vpop.f32.mrf.mxu0
      %v672 = vpop.f32.mrf.mxu0
      %673 = vdwg.mxu0
      %v674 = vpack.c.bf16 %v669, %v669
      %v677 = vunpack.c.l.s4 1966171168
      %v678 = vunpack.c.0.s8 %v677
      %v679 = vlaneseq
      %v680 = vshrl.u32 %v679, 7
      %v681 = vsub.s32 %v678, %v680
      %v682 = vrot.slane %v674, %v681
      %v684 = vunpack.c.l.s4 1966171168
      %v685 = vunpack.c.0.s8 %v684
      %v686 = vlaneseq
      %v687 = vshrl.u32 %v686, 7
      %v688 = vsub.s32 %v685, %v687
      %v689 = vrot.slane %v682, %v688
      %690 = vrot.lane.b32.xlu0 %v689, 24
      %v691 = vpop.permute.xlu0 %690
      %vm693 = vcmask 254144
      %694 = vst.msk [vmem:[%s106] sm:$0x1] %vm693, %v691
      %p695 = scmp.lt.s32.totalorder %s12, 3
      %s696 = scalar_select %p695, %s12, 3
      %s697 = scalar_lea.vmem %s1, %s696
      // Predicated region
      $region25: #{_lambda_.40} parent=23 // pred_check
        %p698 = pneg %p56
      $region26: #{_lambda_.40} parent=23 // pred_check_branch
        %700 = sbr.rel (%p698) target = $region28
      $region27: #{_lambda_.40} parent=23 // pred_region
        _
      $region28: #{_lambda_.40} parent=23 // pred_fallthru
        _
    $region24: #{_lambda_.40} parent=5 // pred_fallthru
      _
    %p701 = scmp.le.s32.totalorder 2, %s7
    // Predicated region
    $region29: #{_lambda_.40} parent=5 // pred_check
      %p702 = pneg %p701
    $region30: #{_lambda_.40} parent=5 // pred_check_branch
      %704 = sbr.rel (%p702) target = $region32
    $region31: #{_lambda_.40} parent=5 // pred_region
      %s705 = ssub.s32 %s7, 2
      // Predicated region
      $region33: #{_lambda_.40} parent=31 // pred_check
        %p706 = pneg %p62
      $region34: #{_lambda_.40} parent=31 // pred_check_branch
        %708 = sbr.rel (%p706) target = $region36
      $region35: #{_lambda_.40} parent=31 // pred_region
        %p709 = scmp.lt.s32.totalorder %s13, 3
        %s710 = scalar_select %p709, %s13, 3
        %s711 = scalar_lea.vmem %s1, %s710
      $region36: #{_lambda_.40} parent=31 // pred_fallthru
        _
    $region32: #{_lambda_.40} parent=5 // pred_fallthru
      _
  $region6: #{_lambda_.40} parent=0 // loop_footer
    %s11 = sadd.s32 1, %s7
  $region7: #{_lambda_.40} parent=0 // loop_footer_branch
    %6 = sbr.rel target = $region3
  $region8: #{_lambda_.40} parent=0 // loop_exit
    _

// kernel: _lambda_.42
$region0: #{_lambda_.42}
  #allocation0 [shape = 'u32[]', space=smem, size = 0x4, offset = 0x4, fixed_abs, tag = 'smem constant byte address 0x4 - core index']
  #allocation1 [shape = 'u32[144,128]{1,0:T(1,128)}', space=vmem, size = 0x12000, scoped, tag = 'internal scratch']
  %s0 = inlined_call_operand.vmem [shape: bf16[8,32], index: 0, kind: input, shape index: {}]
  %s1 = inlined_call_operand.vmem [shape: bf16[32,32], index: 1, kind: input, shape index: {}]
  %s2 = inlined_call_operand.vmem [shape: f32[1,32], index: 2, kind: input, shape index: {}]
  %s3 = inlined_call_operand.vmem [shape: bf16[8,32], index: 3, kind: input, shape index: {}]
  %s4 = inlined_call_operand.vmem [shape: bf16[8,32], index: 4, kind: output, shape index: {}]
  %s5 = sld [smem:[#allocation0]]
  $region26: #{_lambda_.42} parent=0
    _
  %s7 = ssub.s32 1, %s5
  %s8 = scalar_select 0, %s7, %s5
  // Predicated region
  $region2: #{_lambda_.42} parent=0 // pred_check
    _
  $region3: #{_lambda_.42} parent=0 // pred_check_branch
    %10 = sbr.rel (0) target = $region5
  $region4: #{_lambda_.42} parent=0 // pred_region
    _
  $region5: #{_lambda_.42} parent=0 // pred_fallthru
    _
  // Predicated region
  $region6: #{_lambda_.42} parent=0 // pred_check
    _
  $region7: #{_lambda_.42} parent=0 // pred_check_branch
    %12 = sbr.rel (0) target = $region9
  $region8: #{_lambda_.42} parent=0 // pred_region
    _
  $region9: #{_lambda_.42} parent=0 // pred_fallthru
    _
  // Predicated region
  $region10: #{_lambda_.42} parent=0 // pred_check
    _
  $region11: #{_lambda_.42} parent=0 // pred_check_branch
    %14 = sbr.rel (0) target = $region13
  $region12: #{_lambda_.42} parent=0 // pred_region
    _
  $region13: #{_lambda_.42} parent=0 // pred_fallthru
    _
  // Predicated region
  $region14: #{_lambda_.42} parent=0 // pred_check
    _
  $region15: #{_lambda_.42} parent=0 // pred_check_branch
    %16 = sbr.rel (0) target = $region17
  $region16: #{_lambda_.42} parent=0 // pred_region
    _
  $region17: #{_lambda_.42} parent=0 // pred_fallthru
    _
  %v18 = vld [vmem:[%s0] sm:$0xf]
  %v19 = vld [vmem:[%s1] sm:$0xf]
  %v20 = vld [vmem:[%s1 + $0x4] sm:$0xf]
  %v21 = vld [vmem:[%s1 + $0x8] sm:$0xf]
  %v22 = vld [vmem:[%s1 + $0xc] sm:$0xf]
  %v27 = vunpack.c.l.b16 %v19
  %v28 = vunpack.c.l.b16 %v20
  %v29 = vunpack.c.l.b16 %v21
  %v30 = vunpack.c.l.b16 %v22
  %v31 = vpack.c.b16 %v28, %v27
  %v32 = vpack.c.b16 %v30, %v29
  %vm35 = vcmask 261120
  %v37 = vsel %vm35, %v18, 0
  %39 = vmatprep.subr.bf16.mxu0 0
  %40 = vmatpush1.bf16.msra.mxu0 0
  %41 = vmatprep.subr.bf16.mxu0 0
  %42 = vmatpush1.bf16.msra.mxu0 0
  %43 = vmatprep.subr.bf16.mxu0 0
  %44 = vmatpush1.bf16.msra.mxu0 0
  %45 = vmatprep.subr.bf16.mxu0 0
  %46 = vmatpush1.bf16.msra.mxu0 0
  %47 = vmatprep.subr.bf16.mxu0 0
  %48 = vmatpush1.bf16.msra.mxu0 0
  %49 = vmatprep.subr.bf16.mxu0 0
  %50 = vmatpush1.bf16.msra.mxu0 0
  %51 = vmatprep.subr.bf16.mxu0 0
  %52 = vmatpush1.bf16.msra.mxu0 %v32
  %53 = vmatprep.subr.bf16.mxu0 0
  %54 = vmatpush1.bf16.msra.mxu0 %v31
  %55 = vmatprep.subr.bf16.mxu0 0
  %56 = vmatpush2.bf16.msra.mxu0 0
  %57 = vmatprep.subr.bf16.mxu0 0
  %58 = vmatpush2.bf16.msra.mxu0 0
  %59 = vmatprep.subr.bf16.mxu0 0
  %60 = vmatpush2.bf16.msra.mxu0 0
  %61 = vmatprep.subr.bf16.mxu0 0
  %62 = vmatpush2.bf16.msra.mxu0 0
  %63 = vmatprep.subr.bf16.mxu0 0
  %64 = vmatpush2.bf16.msra.mxu0 0
  %65 = vmatprep.subr.bf16.mxu0 0
  %66 = vmatpush2.bf16.msra.mxu0 0
  %67 = vmatprep.subr.bf16.mxu0 0
  %68 = vmatpush2.bf16.msra.mxu0 0
  %69 = vmatprep.subr.bf16.mxu0 0
  %70 = vmatpush2.bf16.msra.mxu0 0
  %71 = vmatprep.mubr.bf16.mxu0 0
  %72 = vmatmul.mubr.bf16.gmra.mxu0 %v37
  %v73 = vpop.f32.mrf.mxu0
  %v74 = vadd.f32 0.0, %v73
  %v75 = vpop.f32.mrf.mxu0
  %v76 = vpop.f32.mrf.mxu0
  %v77 = vpop.f32.mrf.mxu0
  %78 = vdwg.mxu0
  %v79 = vld [vmem:[%s3] sm:$0xf]
  %v80 = vunpack.c.l.bf16 %v79
  %v81 = vadd.f32 %v80, %v74
  %v82 = vld [vmem:[%s2] sm:$0x1]
  %v84 = vlaneseq
  %v85 = vshrl.u32 %v84, 7
  %v86 = vsub.s32 0, %v85
  %v87 = vrot.slane %v82, %v86
  %v89 = vadd.f32 %v81, %v87
  %v90 = vpack.c.bf16 %v89, %v89
  %vm91 = vcmask 257024
  %92 = vst.msk [vmem:[%s4] sm:$0xf] %vm91, %v90
  // Predicated region
  $region18: #{_lambda_.42} parent=0 // pred_check
    _
  $region19: #{_lambda_.42} parent=0 // pred_check_branch
    %94 = sbr.rel (0) target = $region21
  $region20: #{_lambda_.42} parent=0 // pred_region
    _
  $region21: #{_lambda_.42} parent=0 // pred_fallthru
    _
  // Predicated region
  $region22: #{_lambda_.42} parent=0 // pred_check
    _
  $region23: #{_lambda_.42} parent=0 // pred_check_branch
    %96 = sbr.rel (0) target = $region25
  $region24: #{_lambda_.42} parent=0 // pred_region
    _
  $region25: #{_lambda_.42} parent=0 // pred_fallthru
    _

// kernel: _lambda_.45
$region0: #{_lambda_.45}
  #allocation0 [shape = 'u32[]', space=smem, size = 0x4, offset = 0x4, fixed_abs, tag = 'smem constant byte address 0x4 - core index']
  #allocation1 [shape = 'u32[144,128]{1,0:T(1,128)}', space=vmem, size = 0x12000, scoped, tag = 'internal scratch']
  %s0 = inlined_call_operand.vmem [shape: bf16[10,32], index: 0, kind: input, shape index: {}]
  %s1 = inlined_call_operand.vmem [shape: bf16[32,32], index: 1, kind: input, shape index: {}]
  %s2 = inlined_call_operand.vmem [shape: f32[1,32], index: 2, kind: input, shape index: {}]
  %s3 = inlined_call_operand.vmem [shape: bf16[10,32], index: 3, kind: output, shape index: {}]
  %s4 = sld [smem:[#allocation0]]
  $region22: #{_lambda_.45} parent=0
    _
  %s6 = ssub.s32 1, %s4
  %s7 = scalar_select 0, %s6, %s4
  // Predicated region
  $region2: #{_lambda_.45} parent=0 // pred_check
    _
  $region3: #{_lambda_.45} parent=0 // pred_check_branch
    %9 = sbr.rel (0) target = $region5
  $region4: #{_lambda_.45} parent=0 // pred_region
    _
  $region5: #{_lambda_.45} parent=0 // pred_fallthru
    _
  // Predicated region
  $region6: #{_lambda_.45} parent=0 // pred_check
    _
  $region7: #{_lambda_.45} parent=0 // pred_check_branch
    %11 = sbr.rel (0) target = $region9
  $region8: #{_lambda_.45} parent=0 // pred_region
    _
  $region9: #{_lambda_.45} parent=0 // pred_fallthru
    _
  // Predicated region
  $region10: #{_lambda_.45} parent=0 // pred_check
    _
  $region11: #{_lambda_.45} parent=0 // pred_check_branch
    %13 = sbr.rel (0) target = $region13
  $region12: #{_lambda_.45} parent=0 // pred_region
    _
  $region13: #{_lambda_.45} parent=0 // pred_fallthru
    _
  %v15 = vld [vmem:[%s0] sm:$0xf]
  %v16 = vld [vmem:[%s0 + $0x4] sm:$0x1]
  %v17 = vld [vmem:[%s1] sm:$0xf]
  %v18 = vld [vmem:[%s1 + $0x4] sm:$0xf]
  %v19 = vld [vmem:[%s1 + $0x8] sm:$0xf]
  %v20 = vld [vmem:[%s1 + $0xc] sm:$0xf]
  %v21 = vld [vmem:[%s2] sm:$0x1]
  %v23 = vlaneseq
  %v24 = vshrl.u32 %v23, 7
  %v25 = vsub.s32 0, %v24
  %v26 = vrot.slane %v21, %v25
  %v30 = vunpack.c.l.b16 %v15
  %v31 = vunpack.c.l.b16 %v16
  %v32 = vpack.c.b16 %v31, %v30
  %v37 = vunpack.c.l.b16 %v17
  %v38 = vunpack.c.l.b16 %v18
  %v39 = vunpack.c.l.b16 %v19
  %v40 = vunpack.c.l.b16 %v20
  %v41 = vpack.c.b16 %v38, %v37
  %v42 = vpack.c.b16 %v40, %v39
  %vm45 = vcmask 261120
  %v47 = vsel %vm45, %v32, 0
  %49 = vmatprep.subr.bf16.mxu0 0
  %50 = vmatpush1.bf16.msra.mxu0 0
  %51 = vmatprep.subr.bf16.mxu0 0
  %52 = vmatpush1.bf16.msra.mxu0 0
  %53 = vmatprep.subr.bf16.mxu0 0
  %54 = vmatpush1.bf16.msra.mxu0 0
  %55 = vmatprep.subr.bf16.mxu0 0
  %56 = vmatpush1.bf16.msra.mxu0 0
  %57 = vmatprep.subr.bf16.mxu0 0
  %58 = vmatpush1.bf16.msra.mxu0 0
  %59 = vmatprep.subr.bf16.mxu0 0
  %60 = vmatpush1.bf16.msra.mxu0 0
  %61 = vmatprep.subr.bf16.mxu0 0
  %62 = vmatpush1.bf16.msra.mxu0 %v42
  %63 = vmatprep.subr.bf16.mxu0 0
  %64 = vmatpush1.bf16.msra.mxu0 %v41
  %65 = vmatprep.subr.bf16.mxu0 0
  %66 = vmatpush2.bf16.msra.mxu0 0
  %67 = vmatprep.subr.bf16.mxu0 0
  %68 = vmatpush2.bf16.msra.mxu0 0
  %69 = vmatprep.subr.bf16.mxu0 0
  %70 = vmatpush2.bf16.msra.mxu0 0
  %71 = vmatprep.subr.bf16.mxu0 0
  %72 = vmatpush2.bf16.msra.mxu0 0
  %73 = vmatprep.subr.bf16.mxu0 0
  %74 = vmatpush2.bf16.msra.mxu0 0
  %75 = vmatprep.subr.bf16.mxu0 0
  %76 = vmatpush2.bf16.msra.mxu0 0
  %77 = vmatprep.subr.bf16.mxu0 0
  %78 = vmatpush2.bf16.msra.mxu0 0
  %79 = vmatprep.subr.bf16.mxu0 0
  %80 = vmatpush2.bf16.msra.mxu0 0
  %81 = vmatprep.mubr.bf16.mxu0 0
  %82 = vmatmul.mubr.bf16.gmra.mxu0 %v47
  %v83 = vpop.f32.mrf.mxu0
  %v84 = vadd.f32 %v26, %v83
  %v85 = vpop.f32.mrf.mxu0
  %v86 = vpop.f32.mrf.mxu0
  %v87 = vadd.f32 %v26, %v86
  %v88 = vpop.f32.mrf.mxu0
  %89 = vdwg.mxu0
  %v90 = vpack.c.bf16 %v87, %v84
  %v92 = vunpack.c.l.b16 %v90
  %v93 = vunpack.c.h.b16 %v90
  %v94 = vpack.c.b16 %v92, %v92
  %v95 = vpack.c.b16 %v93, %v93
  %vm98 = vcmask 257024
  %99 = vst.msk [vmem:[%s3] sm:$0xf] %vm98, %v94
  %vm100 = vcmask 253952
  %101 = vst.msk [vmem:[%s3 + $0x4] sm:$0x1] %vm100, %v95
  // Predicated region
  $region14: #{_lambda_.45} parent=0 // pred_check
    _
  $region15: #{_lambda_.45} parent=0 // pred_check_branch
    %103 = sbr.rel (0) target = $region17
  $region16: #{_lambda_.45} parent=0 // pred_region
    _
  $region17: #{_lambda_.45} parent=0 // pred_fallthru
    _
  // Predicated region
  $region18: #{_lambda_.45} parent=0 // pred_check
    _
  $region19: #{_lambda_.45} parent=0 // pred_check_branch
    %105 = sbr.rel (0) target = $region21
  $region20: #{_lambda_.45} parent=0 // pred_region
    _
  $region21: #{_lambda_.45} parent=0 // pred_fallthru
    _

// kernel: _lambda_.43
$region0: #{_lambda_.43}
  #allocation0 [shape = 'u32[]', space=smem, size = 0x4, offset = 0x4, fixed_abs, tag = 'smem constant byte address 0x4 - core index']
  #allocation1 [shape = 'u32[144,128]{1,0:T(1,128)}', space=vmem, size = 0x12000, scoped, tag = 'internal scratch']
  %s0 = inlined_call_operand.vmem [shape: bf16[10,32], index: 0, kind: input, shape index: {}]
  %s1 = inlined_call_operand.vmem [shape: f32[1,32], index: 1, kind: input, shape index: {}]
  %s2 = inlined_call_operand.vmem [shape: f32[1,32], index: 2, kind: input, shape index: {}]
  %s3 = inlined_call_operand.vmem [shape: bf16[32,96], index: 3, kind: input, shape index: {}]
  %s4 = inlined_call_operand.vmem [shape: f32[1,96], index: 4, kind: input, shape index: {}]
  %s5 = inlined_call_operand.vmem [shape: bf16[10,96], index: 5, kind: output, shape index: {}]
  %s6 = sld [smem:[#allocation0]]
  $region30: #{_lambda_.43} parent=0
    _
  %s8 = ssub.s32 1, %s6
  %s9 = scalar_select 0, %s8, %s6
  // Predicated region
  $region2: #{_lambda_.43} parent=0 // pred_check
    _
  $region3: #{_lambda_.43} parent=0 // pred_check_branch
    %11 = sbr.rel (0) target = $region5
  $region4: #{_lambda_.43} parent=0 // pred_region
    _
  $region5: #{_lambda_.43} parent=0 // pred_fallthru
    _
  // Predicated region
  $region6: #{_lambda_.43} parent=0 // pred_check
    _
  $region7: #{_lambda_.43} parent=0 // pred_check_branch
    %13 = sbr.rel (0) target = $region9
  $region8: #{_lambda_.43} parent=0 // pred_region
    _
  $region9: #{_lambda_.43} parent=0 // pred_fallthru
    _
  // Predicated region
  $region10: #{_lambda_.43} parent=0 // pred_check
    _
  $region11: #{_lambda_.43} parent=0 // pred_check_branch
    %15 = sbr.rel (0) target = $region13
  $region12: #{_lambda_.43} parent=0 // pred_region
    _
  $region13: #{_lambda_.43} parent=0 // pred_fallthru
    _
  // Predicated region
  $region14: #{_lambda_.43} parent=0 // pred_check
    _
  $region15: #{_lambda_.43} parent=0 // pred_check_branch
    %17 = sbr.rel (0) target = $region17
  $region16: #{_lambda_.43} parent=0 // pred_region
    _
  $region17: #{_lambda_.43} parent=0 // pred_fallthru
    _
  // Predicated region
  $region18: #{_lambda_.43} parent=0 // pred_check
    _
  $region19: #{_lambda_.43} parent=0 // pred_check_branch
    %19 = sbr.rel (0) target = $region21
  $region20: #{_lambda_.43} parent=0 // pred_region
    _
  $region21: #{_lambda_.43} parent=0 // pred_fallthru
    _
  %v21 = vld [vmem:[%s0] sm:$0xf]
  %v22 = vld [vmem:[%s0 + $0x4] sm:$0x1]
  %v23 = vunpack.c.l.bf16 %v21
  %v24 = vunpack.c.l.bf16 %v22
  %vm25 = vcmask 261120
  %v26 = vsel %vm25, %v23, 0.0
  %27 = vadd.xlane.f32.xlu0 %v26
  %v28 = vpop.xlane.xlu0 %27
  %vm29 = vcmask 254976
  %v30 = vsel %vm29, %v24, 0.0
  %31 = vadd.xlane.f32.xlu0 %v30
  %v32 = vpop.xlane.xlu0 %31
  %v33 = vrcp.pop 32.0
  %v34 = vmul.f32 %v28, %v33
  %v35 = vmul.f32 %v32, %v33
  %v36 = vsub.f32 %v23, %v34
  %v37 = vsub.f32 %v24, %v35
  %v38 = vmul.f32 %v36, %v36
  %v39 = vmul.f32 %v37, %v37
  %v40 = vsel %vm25, %v38, 0.0
  %41 = vadd.xlane.f32.xlu0 %v40
  %v42 = vpop.xlane.xlu0 %41
  %v43 = vsel %vm29, %v39, 0.0
  %44 = vadd.xlane.f32.xlu0 %v43
  %v45 = vpop.xlane.xlu0 %44
  %v46 = vmul.f32 %v42, %v33
  %v47 = vmul.f32 %v45, %v33
  %v48 = vadd.f32 %v46, 1e-05
  %v49 = vadd.f32 %v47, 1e-05
  %v50 = vrsqrt.pop %v48
  %v51 = vrsqrt.pop %v49
  %v52 = vmul.f32 %v36, %v50
  %v53 = vmul.f32 %v37, %v51
  %v54 = vld [vmem:[%s1] sm:$0x1]
  %v56 = vlaneseq
  %v57 = vshrl.u32 %v56, 7
  %v58 = vsub.s32 0, %v57
  %v59 = vrot.slane %v54, %v58
  %v61 = vmul.f32 %v52, %v59
  %v62 = vmul.f32 %v53, %v59
  %v63 = vld [vmem:[%s2] sm:$0x1]
  %v65 = vlaneseq
  %v66 = vshrl.u32 %v65, 7
  %v67 = vsub.s32 0, %v66
  %v68 = vrot.slane %v63, %v67
  %v70 = vadd.f32 %v61, %v68
  %v71 = vadd.f32 %v62, %v68
  %v72 = vpack.c.bf16 %v71, %v70
  %v73 = vld [vmem:[%s3] sm:$0xf]
  %v74 = vld [vmem:[%s3 + $0x4] sm:$0xf]
  %v75 = vld [vmem:[%s3 + $0x8] sm:$0xf]
  %v76 = vld [vmem:[%s3 + $0xc] sm:$0xf]
  %v77 = vld [vmem:[%s4] sm:$0x1]
  %v79 = vlaneseq
  %v80 = vshrl.u32 %v79, 7
  %v81 = vsub.s32 0, %v80
  %v82 = vrot.slane %v77, %v81
  %v88 = vunpack.c.l.b16 %v73
  %v89 = vunpack.c.l.b16 %v74
  %v90 = vunpack.c.l.b16 %v75
  %v91 = vunpack.c.l.b16 %v76
  %v92 = vpack.c.b16 %v89, %v88
  %v93 = vpack.c.b16 %v91, %v90
  %v97 = vsel %vm25, %v72, 0
  %99 = vmatprep.subr.bf16.mxu0 0
  %100 = vmatpush1.bf16.msra.mxu0 0
  %101 = vmatprep.subr.bf16.mxu0 0
  %102 = vmatpush1.bf16.msra.mxu0 0
  %103 = vmatprep.subr.bf16.mxu0 0
  %104 = vmatpush1.bf16.msra.mxu0 0
  %105 = vmatprep.subr.bf16.mxu0 0
  %106 = vmatpush1.bf16.msra.mxu0 0
  %107 = vmatprep.subr.bf16.mxu0 0
  %108 = vmatpush1.bf16.msra.mxu0 0
  %109 = vmatprep.subr.bf16.mxu0 0
  %110 = vmatpush1.bf16.msra.mxu0 0
  %111 = vmatprep.subr.bf16.mxu0 0
  %112 = vmatpush1.bf16.msra.mxu0 %v93
  %113 = vmatprep.subr.bf16.mxu0 0
  %114 = vmatpush1.bf16.msra.mxu0 %v92
  %115 = vmatprep.subr.bf16.mxu0 0
  %116 = vmatpush2.bf16.msra.mxu0 0
  %117 = vmatprep.subr.bf16.mxu0 0
  %118 = vmatpush2.bf16.msra.mxu0 0
  %119 = vmatprep.subr.bf16.mxu0 0
  %120 = vmatpush2.bf16.msra.mxu0 0
  %121 = vmatprep.subr.bf16.mxu0 0
  %122 = vmatpush2.bf16.msra.mxu0 0
  %123 = vmatprep.subr.bf16.mxu0 0
  %124 = vmatpush2.bf16.msra.mxu0 0
  %125 = vmatprep.subr.bf16.mxu0 0
  %126 = vmatpush2.bf16.msra.mxu0 0
  %127 = vmatprep.subr.bf16.mxu0 0
  %128 = vmatpush2.bf16.msra.mxu0 0
  %129 = vmatprep.subr.bf16.mxu0 0
  %130 = vmatpush2.bf16.msra.mxu0 0
  %131 = vmatprep.mubr.bf16.mxu0 0
  %132 = vmatmul.mubr.bf16.gmra.mxu0 %v97
  %v133 = vpop.f32.mrf.mxu0
  %v134 = vadd.f32 %v82, %v133
  %v135 = vpop.f32.mrf.mxu0
  %v136 = vpop.f32.mrf.mxu0
  %v137 = vadd.f32 %v82, %v136
  %v138 = vpop.f32.mrf.mxu0
  %139 = vdwg.mxu0
  %v140 = vpack.c.bf16 %v137, %v134
  %v142 = vunpack.c.l.b16 %v140
  %v143 = vunpack.c.h.b16 %v140
  %v144 = vpack.c.b16 %v142, %v142
  %v145 = vpack.c.b16 %v143, %v143
  %vm148 = vcmask 781312
  %149 = vst.msk [vmem:[%s5] sm:$0xf] %vm148, %v144
  %vm150 = vcmask 778240
  %151 = vst.msk [vmem:[%s5 + $0x4] sm:$0x1] %vm150, %v145
  // Predicated region
  $region22: #{_lambda_.43} parent=0 // pred_check
    _
  $region23: #{_lambda_.43} parent=0 // pred_check_branch
    %153 = sbr.rel (0) target = $region25
  $region24: #{_lambda_.43} parent=0 // pred_region
    _
  $region25: #{_lambda_.43} parent=0 // pred_fallthru
    _
  // Predicated region
  $region26: #{_lambda_.43} parent=0 // pred_check
    _
  $region27: #{_lambda_.43} parent=0 // pred_check_branch
    %155 = sbr.rel (0) target = $region29
  $region28: #{_lambda_.43} parent=0 // pred_region
    _
  $region29: #{_lambda_.43} parent=0 // pred_fallthru
    _

// kernel: _lambda_.46
$region0: #{_lambda_.46}
  #allocation0 [shape = 'u32[]', space=smem, size = 0x4, offset = 0x4, fixed_abs, tag = 'smem constant byte address 0x4 - core index']
  #allocation1 [shape = 'u32[144,128]{1,0:T(1,128)}', space=vmem, size = 0x12000, scoped, tag = 'internal scratch']
  #allocation2 [shape = 'bf16[9,32]{1,0:T(8,128)(2,1)}', space=vmem, size = 0x1000, scoped, tag = 'scratch operand']
  #allocation3 [shape = 'f32[9,32]{1,0:T(8,128)}', space=vmem, size = 0x2000, scoped, tag = 'scratch operand']
  %s0 = inlined_call_operand.vmem [shape: bf16[9,32], index: 0, kind: input, shape index: {}]
  %s1 = inlined_call_operand.vmem [shape: f32[1,32], index: 1, kind: input, shape index: {}]
  %s2 = inlined_call_operand.vmem [shape: f32[1,32], index: 2, kind: input, shape index: {}]
  %s3 = inlined_call_operand.vmem [shape: bf16[32,64], index: 3, kind: input, shape index: {}]
  %s4 = inlined_call_operand.vmem [shape: f32[1,64], index: 4, kind: input, shape index: {}]
  %s5 = inlined_call_operand.vmem [shape: bf16[64,32], index: 5, kind: input, shape index: {}]
  %s6 = inlined_call_operand.vmem [shape: f32[1,32], index: 6, kind: input, shape index: {}]
  %s7 = inlined_call_operand.vmem [shape: bf16[9,32], index: 7, kind: output, shape index: {}]
  %s8 = sld [smem:[#allocation0]]
  $region46: #{_lambda_.46} parent=0
    _
  %s10 = ssub.s32 1, %s8
  %s11 = scalar_select 0, %s10, %s8
  // Predicated region
  $region2: #{_lambda_.46} parent=0 // pred_check
    _
  $region3: #{_lambda_.46} parent=0 // pred_check_branch
    %13 = sbr.rel (0) target = $region5
  $region4: #{_lambda_.46} parent=0 // pred_region
    _
  $region5: #{_lambda_.46} parent=0 // pred_fallthru
    _
  // Predicated region
  $region6: #{_lambda_.46} parent=0 // pred_check
    _
  $region7: #{_lambda_.46} parent=0 // pred_check_branch
    %15 = sbr.rel (0) target = $region9
  $region8: #{_lambda_.46} parent=0 // pred_region
    _
  $region9: #{_lambda_.46} parent=0 // pred_fallthru
    _
  // Predicated region
  $region10: #{_lambda_.46} parent=0 // pred_check
    _
  $region11: #{_lambda_.46} parent=0 // pred_check_branch
    %17 = sbr.rel (0) target = $region13
  $region12: #{_lambda_.46} parent=0 // pred_region
    _
  $region13: #{_lambda_.46} parent=0 // pred_fallthru
    _
  // Predicated region
  $region14: #{_lambda_.46} parent=0 // pred_check
    _
  $region15: #{_lambda_.46} parent=0 // pred_check_branch
    %19 = sbr.rel (0) target = $region17
  $region16: #{_lambda_.46} parent=0 // pred_region
    _
  $region17: #{_lambda_.46} parent=0 // pred_fallthru
    _
  // Predicated region
  $region18: #{_lambda_.46} parent=0 // pred_check
    _
  $region19: #{_lambda_.46} parent=0 // pred_check_branch
    %21 = sbr.rel (0) target = $region21
  $region20: #{_lambda_.46} parent=0 // pred_region
    _
  $region21: #{_lambda_.46} parent=0 // pred_fallthru
    _
  // Predicated region
  $region22: #{_lambda_.46} parent=0 // pred_check
    _
  $region23: #{_lambda_.46} parent=0 // pred_check_branch
    %23 = sbr.rel (0) target = $region25
  $region24: #{_lambda_.46} parent=0 // pred_region
    _
  $region25: #{_lambda_.46} parent=0 // pred_fallthru
    _
  // Predicated region
  $region26: #{_lambda_.46} parent=0 // pred_check
    _
  $region27: #{_lambda_.46} parent=0 // pred_check_branch
    %25 = sbr.rel (0) target = $region29
  $region28: #{_lambda_.46} parent=0 // pred_region
    _
  $region29: #{_lambda_.46} parent=0 // pred_fallthru
    _
  %p27 = scmp.eq.s32.totalorder 0, 0
  // Predicated region
  $region30: #{_lambda_.46} parent=0 // pred_check
    %p28 = pneg %p27
  $region31: #{_lambda_.46} parent=0 // pred_check_branch
    %30 = sbr.rel (%p28) target = $region33
  $region32: #{_lambda_.46} parent=0 // pred_region
    %v31 = vld [vmem:[%s0] sm:$0xf]
    %v32 = vld [vmem:[%s0 + $0x4] sm:$0x1]
    %v33 = vunpack.c.l.bf16 %v31
    %v34 = vunpack.c.l.bf16 %v32
    %vm35 = vcmask 261120
    %v36 = vsel %vm35, %v33, 0.0
    %37 = vadd.xlane.f32.xlu0 %v36
    %v38 = vpop.xlane.xlu0 %37
    %vm39 = vcmask 253952
    %v40 = vsel %vm39, %v34, 0.0
    %41 = vadd.xlane.f32.xlu0 %v40
    %v42 = vpop.xlane.xlu0 %41
    %v43 = vrcp.pop 32.0
    %v44 = vmul.f32 %v38, %v43
    %v45 = vmul.f32 %v42, %v43
    %v46 = vsub.f32 %v33, %v44
    %v47 = vsub.f32 %v34, %v45
    %v48 = vmul.f32 %v46, %v46
    %v49 = vmul.f32 %v47, %v47
    %v50 = vsel %vm35, %v48, 0.0
    %51 = vadd.xlane.f32.xlu0 %v50
    %v52 = vpop.xlane.xlu0 %51
    %v53 = vsel %vm39, %v49, 0.0
    %54 = vadd.xlane.f32.xlu0 %v53
    %v55 = vpop.xlane.xlu0 %54
    %v56 = vmul.f32 %v52, %v43
    %v57 = vmul.f32 %v55, %v43
    %v58 = vadd.f32 %v56, 1e-05
    %v59 = vadd.f32 %v57, 1e-05
    %v60 = vrsqrt.pop %v58
    %v61 = vrsqrt.pop %v59
    %v62 = vmul.f32 %v46, %v60
    %v63 = vmul.f32 %v47, %v61
    %v64 = vld [vmem:[%s1] sm:$0x1]
    %v66 = vlaneseq
    %v67 = vshrl.u32 %v66, 7
    %v68 = vsub.s32 0, %v67
    %v69 = vrot.slane %v64, %v68
    %v71 = vmul.f32 %v62, %v69
    %v72 = vmul.f32 %v63, %v69
    %v73 = vld [vmem:[%s2] sm:$0x1]
    %v75 = vlaneseq
    %v76 = vshrl.u32 %v75, 7
    %v77 = vsub.s32 0, %v76
    %v78 = vrot.slane %v73, %v77
    %v80 = vadd.f32 %v71, %v78
    %v81 = vadd.f32 %v72, %v78
    %v82 = vpack.c.bf16 %v81, %v80
    %v84 = vunpack.c.l.b16 %v82
    %v85 = vunpack.c.h.b16 %v82
    %v86 = vpack.c.b16 %v84, %v84
    %v87 = vpack.c.b16 %v85, %v85
    %vm90 = vcmask 257024
    %91 = vst.msk [vmem:[#allocation2] sm:$0xf] %vm90, %v86
    %vm92 = vcmask 253952
    %vm93 = vsmask.f32 256
    %vm94 = vmand %vm92, %vm93
    %v95 = vld [vmem:[#allocation2 + $0x4] sm:$0x1]
    %v96 = vsel %vm94, %v87, %v95
    %97 = vst [vmem:[#allocation2 + $0x4] sm:$0x1] %v96
    %98 = vst.msk [vmem:[#allocation3] sm:$0xff] %vm35, 0.0
    %99 = vst.msk [vmem:[#allocation3 + $0x8] sm:$0x1] %vm39, 0.0
  $region33: #{_lambda_.46} parent=0 // pred_fallthru
    _
  %v100 = vld [vmem:[#allocation2] sm:$0xf]
  %v101 = vld [vmem:[#allocation2 + $0x4] sm:$0x1]
  %v102 = vld [vmem:[%s3] sm:$0xf]
  %v103 = vld [vmem:[%s3 + $0x4] sm:$0xf]
  %v104 = vld [vmem:[%s3 + $0x8] sm:$0xf]
  %v105 = vld [vmem:[%s3 + $0xc] sm:$0xf]
  %v106 = vld [vmem:[%s4] sm:$0x1]
  %v108 = vlaneseq
  %v109 = vshrl.u32 %v108, 7
  %v110 = vsub.s32 0, %v109
  %v111 = vrot.slane %v106, %v110
  %v115 = vunpack.c.l.b16 %v100
  %v116 = vunpack.c.l.b16 %v101
  %v117 = vpack.c.b16 %v116, %v115
  %v122 = vunpack.c.l.b16 %v102
  %v123 = vunpack.c.l.b16 %v103
  %v124 = vunpack.c.l.b16 %v104
  %v125 = vunpack.c.l.b16 %v105
  %v126 = vpack.c.b16 %v123, %v122
  %v127 = vpack.c.b16 %v125, %v124
  %vm130 = vcmask 261120
  %v132 = vsel %vm130, %v117, 0
  %134 = vmatprep.subr.bf16.mxu0 0
  %135 = vmatpush1.bf16.msra.mxu0 0
  %136 = vmatprep.subr.bf16.mxu0 0
  %137 = vmatpush1.bf16.msra.mxu0 0
  %138 = vmatprep.subr.bf16.mxu0 0
  %139 = vmatpush1.bf16.msra.mxu0 0
  %140 = vmatprep.subr.bf16.mxu0 0
  %141 = vmatpush1.bf16.msra.mxu0 0
  %142 = vmatprep.subr.bf16.mxu0 0
  %143 = vmatpush1.bf16.msra.mxu0 0
  %144 = vmatprep.subr.bf16.mxu0 0
  %145 = vmatpush1.bf16.msra.mxu0 0
  %146 = vmatprep.subr.bf16.mxu0 0
  %147 = vmatpush1.bf16.msra.mxu0 %v127
  %148 = vmatprep.subr.bf16.mxu0 0
  %149 = vmatpush1.bf16.msra.mxu0 %v126
  %150 = vmatprep.subr.bf16.mxu0 0
  %151 = vmatpush2.bf16.msra.mxu0 0
  %152 = vmatprep.subr.bf16.mxu0 0
  %153 = vmatpush2.bf16.msra.mxu0 0
  %154 = vmatprep.subr.bf16.mxu0 0
  %155 = vmatpush2.bf16.msra.mxu0 0
  %156 = vmatprep.subr.bf16.mxu0 0
  %157 = vmatpush2.bf16.msra.mxu0 0
  %158 = vmatprep.subr.bf16.mxu0 0
  %159 = vmatpush2.bf16.msra.mxu0 0
  %160 = vmatprep.subr.bf16.mxu0 0
  %161 = vmatpush2.bf16.msra.mxu0 0
  %162 = vmatprep.subr.bf16.mxu0 0
  %163 = vmatpush2.bf16.msra.mxu0 0
  %164 = vmatprep.subr.bf16.mxu0 0
  %165 = vmatpush2.bf16.msra.mxu0 0
  %166 = vmatprep.mubr.bf16.mxu0 0
  %167 = vmatmul.mubr.bf16.gmra.mxu0 %v132
  %v168 = vpop.f32.mrf.mxu0
  %v169 = vadd.f32 %v111, %v168
  %v170 = vpop.f32.mrf.mxu0
  %v171 = vpop.f32.mrf.mxu0
  %v172 = vadd.f32 %v111, %v171
  %v173 = vpop.f32.mrf.mxu0
  %174 = vdwg.mxu0
  %v175 = vmul.f32 %v169, 0.5
  %v176 = vmul.f32 %v172, 0.5
  %v177 = vmul.f32 %v169, %v169
  %v178 = vmul.f32 %v172, %v172
  %v179 = vmul.f32 %v177, %v169
  %v180 = vmul.f32 %v178, %v172
  %v181 = vmul.f32 %v179, 0.044715
  %v182 = vmul.f32 %v180, 0.044715
  %v183 = vadd.f32 %v169, %v181
  %v184 = vadd.f32 %v172, %v182
  %v185 = vmul.f32 %v183, 0.7978846
  %v186 = vmul.f32 %v184, 0.7978846
  %v187 = vtanh.pop %v185
  %v188 = vtanh.pop %v186
  %v189 = vadd.f32 %v187, 1.0
  %v190 = vadd.f32 %v188, 1.0
  %v191 = vmul.f32 %v175, %v189
  %v192 = vmul.f32 %v176, %v190
  %v193 = vld [vmem:[#allocation3] sm:$0xff]
  %v194 = vld [vmem:[#allocation3 + $0x8] sm:$0x1]
  %v195 = vpack.c.bf16 %v192, %v191
  %v196 = vld [vmem:[%s5] sm:$0xf]
  %v197 = vld [vmem:[%s5 + $0x4] sm:$0xf]
  %v198 = vld [vmem:[%s5 + $0x8] sm:$0xf]
  %v199 = vld [vmem:[%s5 + $0xc] sm:$0xf]
  %v200 = vld [vmem:[%s5 + $0x10] sm:$0xf]
  %v201 = vld [vmem:[%s5 + $0x14] sm:$0xf]
  %v202 = vld [vmem:[%s5 + $0x18] sm:$0xf]
  %v203 = vld [vmem:[%s5 + $0x1c] sm:$0xf]
  %v212 = vunpack.c.l.b16 %v196
  %v213 = vunpack.c.l.b16 %v197
  %v214 = vunpack.c.l.b16 %v198
  %v215 = vunpack.c.l.b16 %v199
  %v216 = vunpack.c.l.b16 %v200
  %v217 = vunpack.c.l.b16 %v201
  %v218 = vunpack.c.l.b16 %v202
  %v219 = vunpack.c.l.b16 %v203
  %v220 = vpack.c.b16 %v213, %v212
  %v221 = vpack.c.b16 %v215, %v214
  %v222 = vpack.c.b16 %v217, %v216
  %v223 = vpack.c.b16 %v219, %v218
  %vm228 = vcmask 523264
  %v230 = vsel %vm228, %v195, 0
  %232 = vmatprep.subr.bf16.mxu0 0
  %233 = vmatpush1.bf16.msra.mxu0 0
  %234 = vmatprep.subr.bf16.mxu0 0
  %235 = vmatpush1.bf16.msra.mxu0 0
  %236 = vmatprep.subr.bf16.mxu0 0
  %237 = vmatpush1.bf16.msra.mxu0 0
  %238 = vmatprep.subr.bf16.mxu0 0
  %239 = vmatpush1.bf16.msra.mxu0 0
  %240 = vmatprep.subr.bf16.mxu0 0
  %241 = vmatpush1.bf16.msra.mxu0 %v223
  %242 = vmatprep.subr.bf16.mxu0 0
  %243 = vmatpush1.bf16.msra.mxu0 %v222
  %244 = vmatprep.subr.bf16.mxu0 0
  %245 = vmatpush1.bf16.msra.mxu0 %v221
  %246 = vmatprep.subr.bf16.mxu0 0
  %247 = vmatpush1.bf16.msra.mxu0 %v220
  %248 = vmatprep.subr.bf16.mxu0 0
  %249 = vmatpush2.bf16.msra.mxu0 0
  %250 = vmatprep.subr.bf16.mxu0 0
  %251 = vmatpush2.bf16.msra.mxu0 0
  %252 = vmatprep.subr.bf16.mxu0 0
  %253 = vmatpush2.bf16.msra.mxu0 0
  %254 = vmatprep.subr.bf16.mxu0 0
  %255 = vmatpush2.bf16.msra.mxu0 0
  %256 = vmatprep.subr.bf16.mxu0 0
  %257 = vmatpush2.bf16.msra.mxu0 0
  %258 = vmatprep.subr.bf16.mxu0 0
  %259 = vmatpush2.bf16.msra.mxu0 0
  %260 = vmatprep.subr.bf16.mxu0 0
  %261 = vmatpush2.bf16.msra.mxu0 0
  %262 = vmatprep.subr.bf16.mxu0 0
  %263 = vmatpush2.bf16.msra.mxu0 0
  %264 = vmatprep.mubr.bf16.mxu0 0
  %265 = vmatmul.mubr.bf16.gmra.mxu0 %v230
  %v266 = vpop.f32.mrf.mxu0
  %v267 = vadd.f32 0.0, %v266
  %v268 = vpop.f32.mrf.mxu0
  %v269 = vpop.f32.mrf.mxu0
  %v270 = vadd.f32 0.0, %v269
  %v271 = vpop.f32.mrf.mxu0
  %272 = vdwg.mxu0
  %v273 = vadd.f32 %v193, %v267
  %v274 = vadd.f32 %v194, %v270
  %275 = vst.msk [vmem:[#allocation3] sm:$0xff] %vm130, %v273
  %vm276 = vcmask 253952
  %277 = vst.msk [vmem:[#allocation3 + $0x8] sm:$0x1] %vm276, %v274
  // Predicated region
  $region34: #{_lambda_.46} parent=0 // pred_check
    %p278 = pneg %p27
  $region35: #{_lambda_.46} parent=0 // pred_check_branch
    %280 = sbr.rel (%p278) target = $region37
  $region36: #{_lambda_.46} parent=0 // pred_region
    %v281 = vld [vmem:[%s0] sm:$0xf]
    %v282 = vld [vmem:[%s0 + $0x4] sm:$0x1]
    %v283 = vunpack.c.l.bf16 %v281
    %v284 = vunpack.c.l.bf16 %v282
    %v285 = vld [vmem:[#allocation3] sm:$0xff]
    %v286 = vld [vmem:[#allocation3 + $0x8] sm:$0x1]
    %v287 = vadd.f32 %v283, %v285
    %v288 = vadd.f32 %v284, %v286
    %v289 = vld [vmem:[%s6] sm:$0x1]
    %v291 = vlaneseq
    %v292 = vshrl.u32 %v291, 7
    %v293 = vsub.s32 0, %v292
    %v294 = vrot.slane %v289, %v293
    %v296 = vadd.f32 %v287, %v294
    %v297 = vadd.f32 %v288, %v294
    %v298 = vpack.c.bf16 %v297, %v296
    %v300 = vunpack.c.l.b16 %v298
    %v301 = vunpack.c.h.b16 %v298
    %v302 = vpack.c.b16 %v300, %v300
    %v303 = vpack.c.b16 %v301, %v301
    %vm306 = vcmask 257024
    %307 = vst.msk [vmem:[%s7] sm:$0xf] %vm306, %v302
    %vm308 = vcmask 253952
    %vm309 = vsmask.f32 256
    %vm310 = vmand %vm308, %vm309
    %v311 = vld [vmem:[%s7 + $0x4] sm:$0x1]
    %v312 = vsel %vm310, %v303, %v311
    %313 = vst [vmem:[%s7 + $0x4] sm:$0x1] %v312
  $region37: #{_lambda_.46} parent=0 // pred_fallthru
    _
  // Predicated region
  $region38: #{_lambda_.46} parent=0 // pred_check
    _
  $region39: #{_lambda_.46} parent=0 // pred_check_branch
    %315 = sbr.rel (0) target = $region41
  $region40: #{_lambda_.46} parent=0 // pred_region
    _
  $region41: #{_lambda_.46} parent=0 // pred_fallthru
    _
  // Predicated region
  $region42: #{_lambda_.46} parent=0 // pred_check
    _
  $region43: #{_lambda_.46} parent=0 // pred_check_branch
    %317 = sbr.rel (0) target = $region45
  $region44: #{_lambda_.46} parent=0 // pred_region
    _
  $region45: #{_lambda_.46} parent=0 // pred_fallthru
    _

// kernel: _lambda_.59
$region0: #{_lambda_.59}
  #allocation0 [shape = 'u32[]', space=smem, size = 0x4, offset = 0x4, fixed_abs, tag = 'smem constant byte address 0x4 - core index']
  #allocation1 [shape = 'u32[144,128]{1,0:T(1,128)}', space=vmem, size = 0x12000, scoped, tag = 'internal scratch']
  %s0 = inlined_call_operand.vmem [shape: bf16[2,32], index: 0, kind: input, shape index: {}]
  %s1 = inlined_call_operand.vmem [shape: f32[1,32], index: 1, kind: input, shape index: {}]
  %s2 = inlined_call_operand.vmem [shape: f32[1,32], index: 2, kind: input, shape index: {}]
  %s3 = inlined_call_operand.hbm [shape: bf16[2,32], index: 3, kind: output, shape index: {}]
  %s4 = sld [smem:[#allocation0]]
  $region22: #{_lambda_.59} parent=0
    _
  %s6 = ssub.s32 1, %s4
  %s7 = scalar_select 0, %s6, %s4
  $region1: #{_lambda_.59} parent=0
    #allocation2 [shape = 'u8[512]{0}', space=vmem, size = 0x400, scoped, tag = 'output window, operand 0, single buffered']
    #allocation3 [shape = 's32[1]{0}', space=sflag, size = 0x4, scoped, tag = 'scoped memory for _lambda_.59']
    %8 = vsyncpa [#allocation3], 0
    // Predicated region
    $region2: #{_lambda_.59} parent=1 // pred_check
      _
    $region3: #{_lambda_.59} parent=1 // pred_check_branch
      %10 = sbr.rel (0) target = $region5
    $region4: #{_lambda_.59} parent=1 // pred_region
      _
    $region5: #{_lambda_.59} parent=1 // pred_fallthru
      _
    // Predicated region
    $region6: #{_lambda_.59} parent=1 // pred_check
      _
    $region7: #{_lambda_.59} parent=1 // pred_check_branch
      %12 = sbr.rel (0) target = $region9
    $region8: #{_lambda_.59} parent=1 // pred_region
      _
    $region9: #{_lambda_.59} parent=1 // pred_fallthru
      _
    // Predicated region
    $region10: #{_lambda_.59} parent=1 // pred_check
      _
    $region11: #{_lambda_.59} parent=1 // pred_check_branch
      %14 = sbr.rel (0) target = $region13
    $region12: #{_lambda_.59} parent=1 // pred_region
      _
    $region13: #{_lambda_.59} parent=1 // pred_fallthru
      _
    %v15 = vld [vmem:[%s0] sm:$0x1]
    %v16 = vunpack.c.l.bf16 %v15
    %vm17 = vcmask 254976
    %v18 = vsel %vm17, %v16, 0.0
    %19 = vadd.xlane.f32.xlu0 %v18
    %v20 = vpop.xlane.xlu0 %19
    %v21 = vrcp.pop 32.0
    %v22 = vmul.f32 %v20, %v21
    %v23 = vsub.f32 %v16, %v22
    %v24 = vmul.f32 %v23, %v23
    %v25 = vsel %vm17, %v24, 0.0
    %26 = vadd.xlane.f32.xlu0 %v25
    %v27 = vpop.xlane.xlu0 %26
    %v28 = vmul.f32 %v27, %v21
    %v29 = vadd.f32 %v28, 1e-06
    %v30 = vrsqrt.pop %v29
    %v31 = vmul.f32 %v23, %v30
    %v32 = vld [vmem:[%s1] sm:$0x1]
    %v34 = vlaneseq
    %v35 = vshrl.u32 %v34, 7
    %v36 = vsub.s32 0, %v35
    %v37 = vrot.slane %v32, %v36
    %v39 = vmul.f32 %v31, %v37
    %v40 = vld [vmem:[%s2] sm:$0x1]
    %v42 = vlaneseq
    %v43 = vshrl.u32 %v42, 7
    %v44 = vsub.s32 0, %v43
    %v45 = vrot.slane %v40, %v44
    %v47 = vadd.f32 %v39, %v45
    %v48 = vpack.c.bf16 %v47, %v47
    %vm49 = vcmask 253952
    %50 = vst.msk [vmem:[#allocation2] sm:$0x1] %vm49, %v48
    // Predicated region
    $region14: #{_lambda_.59} parent=1 // pred_check
      _
    $region15: #{_lambda_.59} parent=1 // pred_check_branch
      %52 = sbr.rel (0) target = $region17
    $region16: #{_lambda_.59} parent=1 // pred_region
      %s54 = ssub.s32 16, 16
      %55 = vsyncadd [#allocation3], %s54
      %s57 = sshll.u32 [#allocation2], 4
      %s58 = int_to_ptr.vmem [resolvable:$true] %s57
      %60 = dma.vmem_to_hbm [thread:$0]  %s58, 16, %s3, [#allocation3]
    $region17: #{_lambda_.59} parent=1 // pred_fallthru
      _
    // Predicated region
    $region18: #{_lambda_.59} parent=1 // pred_check
      _
    $region19: #{_lambda_.59} parent=1 // pred_check_branch
      %62 = sbr.rel (0) target = $region21
    $region20: #{_lambda_.59} parent=1 // pred_region
      %63 = dma.done [#allocation3], 16
    $region21: #{_lambda_.59} parent=1 // pred_fallthru
      _
    %64 = vsyncpa [#allocation3], 1

</llo_original>
